<compile_context>
chip_gen: v6e
topology: v6e:2x2x1
jax: 0.10.0
libtpu: 0.0.40
codegen_flags: <defaults>
</compile_context>

<pallas_src>
import math
import functools

import jax
import jax.numpy as jnp
from jax.experimental import pallas as pl
from jax.experimental.pallas import tpu as pltpu


def _layer_norm(x, gamma, beta, eps=1e-12):
    mean = jnp.mean(x, axis=-1, keepdims=True)
    var = jnp.mean((x - mean) ** 2, axis=-1, keepdims=True)
    return (x - mean) * jax.lax.rsqrt(var + eps) * gamma + beta


def _gelu_tanh(x):
    c = math.sqrt(2.0 / math.pi)
    return 0.5 * x * (1.0 + jnp.tanh(c * (x + 0.044715 * x * x * x)))


def _bf16_softmax_exp_default():
    # bf16 EUP exp only on v6e/v7x; v5e (and older) have no bf16 EUP/VPU path.
    try:
        kind = jax.devices()[0].device_kind.lower()
    except Exception:
        return False
    return ("v6" in kind) or ("v7" in kind)


def bert_layer_kernel(x_ref, mask_ref,
                      wq_ref, bq_ref, wk_ref, bk_ref, wv_ref, bv_ref,
                      wo_ref, bo_ref, g1_ref, be1_ref,
                      w1_ref, b1_ref, w2_ref, b2_ref, g2_ref, be2_ref,
                      out_ref, *, num_heads, head_dim, q_tile, bf16_exp):
    T = x_ref.shape[1]
    H = x_ref.shape[2]
    hd = head_dim

    x = x_ref[0].astype(jnp.float32)      # (T, H) f32 for residual / LN math
    x_b = x.astype(jnp.bfloat16)          # bf16 MXU operand
    keep = mask_ref[...] != 0.0           # (1, 1, T)  True = attend

    # --- Q/K/V projections (bf16 in, f32 accumulate).  The 1/sqrt(head_dim)
    #     scale is pre-folded into wq / bq in the wrapper. ---
    q = jnp.dot(x_b, wq_ref[...], preferred_element_type=jnp.float32) + bq_ref[...]
    k = jnp.dot(x_b, wk_ref[...], preferred_element_type=jnp.float32) + bk_ref[...]
    v = jnp.dot(x_b, wv_ref[...], preferred_element_type=jnp.float32) + bv_ref[...]

    q_b = q.astype(jnp.bfloat16)                                   # (T, H)
    kh = k.astype(jnp.bfloat16).reshape(T, num_heads, hd)          # (T, NH, hd)
    vh = v.astype(jnp.bfloat16).reshape(T, num_heads, hd)          # (T, NH, hd)

    # --- flash-style query tiles: softmax temporaries are (NH, Tq, T) ---
    for t0 in range(0, T, q_tile):
        qt = q_b[t0:t0 + q_tile, :].reshape(q_tile, num_heads, hd)

        # Batched scores (head axis = dot_general batch dim): (NH, Tq, T)
        scores = jnp.einsum('tnd,snd->nts', qt, kh,
                            preferred_element_type=jnp.float32)
        # finite large negative: fully-masked rows stay finite (no NaNs)
        scores = jnp.where(keep, scores, -1e9)

        m = jnp.max(scores, axis=-1, keepdims=True)
        if bf16_exp:
            # v6e/v7x: exp on the bf16 EUP path, f32 denominator accumulation.
            e = jnp.exp((scores - m).astype(jnp.bfloat16))
            denom = jnp.sum(e.astype(jnp.float32), axis=-1, keepdims=True)
            probs_b = e * pl.reciprocal(denom, approx=True).astype(jnp.bfloat16)
        else:
            # v5e: no bf16 EUP -> f32 exp; fused normalize + cast.
            e = jnp.exp(scores - m)
            denom = jnp.sum(e, axis=-1, keepdims=True)
            probs_b = (e * pl.reciprocal(denom, approx=True)).astype(jnp.bfloat16)

        # Batched context -> (Tq, NH, hd); reshape == PyTorch's
        # transpose(1, 2).contiguous().view(T, H) head-major concat.
        ctx = jnp.einsum('nts,snd->tnd', probs_b, vh,
                         preferred_element_type=jnp.float32)
        ctx_b = ctx.reshape(q_tile, H).astype(jnp.bfloat16)

        # --- BertSelfOutput (row-wise): wo projection + residual + LN ---
        x_rows = x[t0:t0 + q_tile, :]
        attn = jnp.dot(ctx_b, wo_ref[...],
                       preferred_element_type=jnp.float32) + bo_ref[...]
        ln1 = _layer_norm(attn + x_rows, g1_ref[...], be1_ref[...])

        # --- FFN (row-wise): dense1 -> tanh-gelu -> dense2 -> residual -> LN ---
        h1 = jnp.dot(ln1.astype(jnp.bfloat16), w1_ref[...],
                     preferred_element_type=jnp.float32) + b1_ref[...]
        h1 = _gelu_tanh(h1)
        h2 = jnp.dot(h1.astype(jnp.bfloat16), w2_ref[...],
                     preferred_element_type=jnp.float32) + b2_ref[...]
        out = _layer_norm(h2 + ln1, g2_ref[...], be2_ref[...])

        out_ref[0, t0:t0 + q_tile, :] = out.astype(out_ref.dtype)


def bert_layer_forward(x, attention_mask, params, num_heads,
                       single_buffer_weights=True):
    B, T, H = x.shape
    I = params["w1"].shape[1]
    head_dim = H // num_heads
    mask3 = attention_mask.reshape(B, 1, T).astype(jnp.float32)

    bf16, f32 = jnp.bfloat16, jnp.float32
    scale = 1.0 / math.sqrt(head_dim)

    # Weights bf16 (MXU operands, halves VMEM residency); biases / LN in f32.
    # Fold 1/sqrt(head_dim) into the query projection here (free: weight prep
    # already happens outside the kernel).
    wq = (params["wq"] * scale).astype(bf16); bq = (params["bq"] * scale).astype(f32)
    wk = params["wk"].astype(bf16);           bk = params["bk"].astype(f32)
    wv = params["wv"].astype(bf16);           bv = params["bv"].astype(f32)
    wo = params["wo"].astype(bf16);           bo = params["bo"].astype(f32)
    w1 = params["w1"].astype(bf16);           b1 = params["b1"].astype(f32)
    w2 = params["w2"].astype(bf16);           b2 = params["b2"].astype(f32)
    g1 = params["g1"].astype(f32); be1 = params["be1"].astype(f32)
    g2 = params["g2"].astype(f32); be2 = params["be2"].astype(f32)

    q_tile = 256 if (T % 256 == 0) else T      # 256-aligned q tiles when possible
    bf16_exp = _bf16_softmax_exp_default()

    kernel = functools.partial(bert_layer_kernel, num_heads=num_heads,
                               head_dim=head_dim, q_tile=q_tile,
                               bf16_exp=bf16_exp)

    def run(single_buf):
        def const2d(shape):
            # Weights / biases: index_map constant across the grid.
            if single_buf:
                return pl.BlockSpec(shape, lambda b: (0, 0),
                                    pipeline_mode=pl.Buffered(1))
            return pl.BlockSpec(shape, lambda b: (0, 0))

        in_specs = [
            pl.BlockSpec((1, T, H), lambda b: (b, 0, 0)),   # hidden_states
            pl.BlockSpec((1, 1, T), lambda b: (b, 0, 0)),   # attention_mask
            const2d((H, H)), const2d((1, H)),               # wq, bq
            const2d((H, H)), const2d((1, H)),               # wk, bk
            const2d((H, H)), const2d((1, H)),               # wv, bv
            const2d((H, H)), const2d((1, H)),               # wo, bo
            const2d((1, H)), const2d((1, H)),               # LayerNorm1 gamma, beta
            const2d((H, I)), const2d((1, I)),               # dense1 w, b
            const2d((I, H)), const2d((1, H)),               # dense2 w, b
            const2d((1, H)), const2d((1, H)),               # LayerNorm2 gamma, beta
        ]
        return pl.pallas_call(
            kernel,
            out_shape=jax.ShapeDtypeStruct((B, T, H), x.dtype),
            grid_spec=pltpu.PrefetchScalarGridSpec(
                num_scalar_prefetch=0,
                grid=(B,),
                in_specs=in_specs,
                out_specs=pl.BlockSpec((1, T, H), lambda b: (b, 0, 0)),
            ),
            compiler_params=pltpu.CompilerParams(
                dimension_semantics=("parallel",),
                vmem_limit_bytes=48 * 1024 * 1024),
        )(x, mask3,
          wq, bq, wk, bk, wv, bv, wo, bo, g1, be1,
          w1, b1, w2, b2, g2, be2)

    if single_buffer_weights:
        try:
            return run(True)
        except Exception:
            # Older jax / unsupported Buffered(1): fall back to default 2-deep.
            pass
    return run(False)


def init_params(key, hidden_size, intermediate_size):
    ks = jax.random.split(key, 6)
    H, I = hidden_size, intermediate_size
    std = 0.02
    return {
        "wq": jax.random.normal(ks[0], (H, H), jnp.float32) * std,
        "bq": jnp.zeros((1, H), jnp.float32),
        "wk": jax.random.normal(ks[1], (H, H), jnp.float32) * std,
        "bk": jnp.zeros((1, H), jnp.float32),
        "wv": jax.random.normal(ks[2], (H, H), jnp.float32) * std,
        "bv": jnp.zeros((1, H), jnp.float32),
        "wo": jax.random.normal(ks[3], (H, H), jnp.float32) * std,
        "bo": jnp.zeros((1, H), jnp.float32),
        "g1": jnp.ones((1, H), jnp.float32),
        "be1": jnp.zeros((1, H), jnp.float32),
        "w1": jax.random.normal(ks[4], (H, I), jnp.float32) * std,
        "b1": jnp.zeros((1, I), jnp.float32),
        "w2": jax.random.normal(ks[5], (I, H), jnp.float32) * std,
        "b2": jnp.zeros((1, H), jnp.float32),
        "g2": jnp.ones((1, H), jnp.float32),
        "be2": jnp.zeros((1, H), jnp.float32),
    }


def bert_layer_reference(x, attention_mask, p, num_heads):
    """Pure-JAX f32 reference matching the PyTorch module (eval mode)."""
    B, T, H = x.shape
    hd = H // num_heads

    def ln(v, g, b):
        mu = jnp.mean(v, axis=-1, keepdims=True)
        var = jnp.mean((v - mu) ** 2, axis=-1, keepdims=True)
        return (v - mu) / jnp.sqrt(var + 1e-12) * g + b

    q = x @ p["wq"] + p["bq"]
    k = x @ p["wk"] + p["bk"]
    v = x @ p["wv"] + p["bv"]

    def split(t):
        return t.reshape(B, T, num_heads, hd).transpose(0, 2, 1, 3)

    qh, kh, vh = split(q), split(k), split(v)
    s = (qh @ kh.transpose(0, 1, 3, 2)) / math.sqrt(hd)
    keep = attention_mask[:, None, None, :] != 0
    s = jnp.where(keep, s, -1e9)
    probs = jax.nn.softmax(s, axis=-1)
    ctx = (probs @ vh).transpose(0, 2, 1, 3).reshape(B, T, H)
    attn = ln(ctx @ p["wo"] + p["bo"] + x, p["g1"], p["be1"])
    h1 = attn @ p["w1"] + p["b1"]
    h1 = 0.5 * h1 * (1.0 + jnp.tanh(math.sqrt(2.0 / math.pi) * (h1 + 0.044715 * h1 ** 3)))
    h2 = h1 @ p["w2"] + p["b2"]
    return ln(h2 + attn, p["g2"], p["be2"])


if __name__ == "__main__":
    # Small config: hidden=32, heads=4 (head_dim=8), intermediate=64, B=2, T=8.
    B, T, H, NH, I = 2, 8, 32, 4, 64

    key = jax.random.PRNGKey(0)
    k_x, k_p = jax.random.split(key)

    x = jax.random.normal(k_x, (B, T, H), jnp.float32)
    # mask: 1 = attend, 0 = padded; second batch element has last 3 tokens padded.
    attention_mask = jnp.ones((B, T), jnp.float32)
    attention_mask = attention_mask.at[1, T - 3:].set(0.0)

    params = init_params(k_p, H, I)

    out = bert_layer_forward(x, attention_mask, params, num_heads=NH)
    out = jax.block_until_ready(out)

    assert out.shape == (B, T, H)
    assert bool(jnp.all(jnp.isfinite(out)))

    ref = bert_layer_reference(x, attention_mask, params, NH)
    max_diff = float(jnp.max(jnp.abs(out - ref)))
    assert max_diff < 5e-2, f"max diff vs f32 reference too large: {max_diff}"
    print("KERNEL_OK")
</pallas_src>

<mosaic_0001>
module attributes {stable_mosaic.version = 11 : i64} {
  func.func @bert_layer_kernel(%arg0: i32, %arg1: memref<1x8x32xf32, #tpu.memory_space<vmem>>, %arg2: memref<1x1x8xf32, #tpu.memory_space<vmem>>, %arg3: memref<32x32xbf16, #tpu.memory_space<vmem>>, %arg4: memref<1x32xf32, #tpu.memory_space<vmem>>, %arg5: memref<32x32xbf16, #tpu.memory_space<vmem>>, %arg6: memref<1x32xf32, #tpu.memory_space<vmem>>, %arg7: memref<32x32xbf16, #tpu.memory_space<vmem>>, %arg8: memref<1x32xf32, #tpu.memory_space<vmem>>, %arg9: memref<32x32xbf16, #tpu.memory_space<vmem>>, %arg10: memref<1x32xf32, #tpu.memory_space<vmem>>, %arg11: memref<1x32xf32, #tpu.memory_space<vmem>>, %arg12: memref<1x32xf32, #tpu.memory_space<vmem>>, %arg13: memref<32x64xbf16, #tpu.memory_space<vmem>>, %arg14: memref<1x64xf32, #tpu.memory_space<vmem>>, %arg15: memref<64x32xbf16, #tpu.memory_space<vmem>>, %arg16: memref<1x32xf32, #tpu.memory_space<vmem>>, %arg17: memref<1x32xf32, #tpu.memory_space<vmem>>, %arg18: memref<1x32xf32, #tpu.memory_space<vmem>>, %arg19: memref<1x8x32xf32, #tpu.memory_space<vmem>>) attributes {dimension_semantics = [#tpu.dimension_semantics<parallel>], iteration_bounds = array<i64: 2>, scalar_prefetch = 0 : i64, scratch_operands = 0 : i64, tpu.core_type = #tpu.core_type<tc>, window_params = [{transform_indices = @transform_0, window_bounds = array<i64: 1, 8, 32>}, {transform_indices = @transform_1, window_bounds = array<i64: 1, 1, 8>}, {pipeline_mode = #tpu.pipeline_mode<synchronous>, transform_indices = @transform_2, window_bounds = array<i64: 32, 32>}, {pipeline_mode = #tpu.pipeline_mode<synchronous>, transform_indices = @transform_3, window_bounds = array<i64: 1, 32>}, {pipeline_mode = #tpu.pipeline_mode<synchronous>, transform_indices = @transform_4, window_bounds = array<i64: 32, 32>}, {pipeline_mode = #tpu.pipeline_mode<synchronous>, transform_indices = @transform_5, window_bounds = array<i64: 1, 32>}, {pipeline_mode = #tpu.pipeline_mode<synchronous>, transform_indices = @transform_6, window_bounds = array<i64: 32, 32>}, {pipeline_mode = #tpu.pipeline_mode<synchronous>, transform_indices = @transform_7, window_bounds = array<i64: 1, 32>}, {pipeline_mode = #tpu.pipeline_mode<synchronous>, transform_indices = @transform_8, window_bounds = array<i64: 32, 32>}, {pipeline_mode = #tpu.pipeline_mode<synchronous>, transform_indices = @transform_9, window_bounds = array<i64: 1, 32>}, {pipeline_mode = #tpu.pipeline_mode<synchronous>, transform_indices = @transform_10, window_bounds = array<i64: 1, 32>}, {pipeline_mode = #tpu.pipeline_mode<synchronous>, transform_indices = @transform_11, window_bounds = array<i64: 1, 32>}, {pipeline_mode = #tpu.pipeline_mode<synchronous>, transform_indices = @transform_12, window_bounds = array<i64: 32, 64>}, {pipeline_mode = #tpu.pipeline_mode<synchronous>, transform_indices = @transform_13, window_bounds = array<i64: 1, 64>}, {pipeline_mode = #tpu.pipeline_mode<synchronous>, transform_indices = @transform_14, window_bounds = array<i64: 64, 32>}, {pipeline_mode = #tpu.pipeline_mode<synchronous>, transform_indices = @transform_15, window_bounds = array<i64: 1, 32>}, {pipeline_mode = #tpu.pipeline_mode<synchronous>, transform_indices = @transform_16, window_bounds = array<i64: 1, 32>}, {pipeline_mode = #tpu.pipeline_mode<synchronous>, transform_indices = @transform_17, window_bounds = array<i64: 1, 32>}, {transform_indices = @transform_18, window_bounds = array<i64: 1, 8, 32>}]} {
    %c0 = arith.constant 0 : index
    %c0_0 = arith.constant 0 : index
    %c0_1 = arith.constant 0 : index
    %0 = vector.load %arg1[%c0, %c0_0, %c0_1] : memref<1x8x32xf32, #tpu.memory_space<vmem>>, vector<1x8x32xf32>
    %1 = vector.shape_cast %0 : vector<1x8x32xf32> to vector<8x32xf32>
    %2 = arith.truncf %1 : vector<8x32xf32> to vector<8x32xbf16>
    %c0_2 = arith.constant 0 : index
    %c0_3 = arith.constant 0 : index
    %c0_4 = arith.constant 0 : index
    %3 = vector.load %arg2[%c0_2, %c0_3, %c0_4] : memref<1x1x8xf32, #tpu.memory_space<vmem>>, vector<1x1x8xf32>
    %cst = arith.constant 0.000000e+00 : f32
    %4 = vector.broadcast %cst : f32 to vector<1x1x8xf32>
    %5 = arith.cmpf one, %3, %4 : vector<1x1x8xf32>
    %c0_5 = arith.constant 0 : index
    %c0_6 = arith.constant 0 : index
    %6 = vector.load %arg3[%c0_5, %c0_6] : memref<32x32xbf16, #tpu.memory_space<vmem>>, vector<32x32xbf16>
    %cst_7 = arith.constant dense<0.000000e+00> : vector<8x32xf32>
    %7 = tpu.matmul %2, %6, %cst_7 {dimension_numbers = #tpu.dot_dimension_numbers<[1], [0], [0], [1], [0, 0, 1, 1], [], []>} : vector<8x32xbf16>, vector<32x32xbf16>, vector<8x32xf32> -> vector<8x32xf32>
    %c0_8 = arith.constant 0 : index
    %c0_9 = arith.constant 0 : index
    %8 = vector.load %arg4[%c0_8, %c0_9] : memref<1x32xf32, #tpu.memory_space<vmem>>, vector<1x32xf32>
    %9 = vector.broadcast %8 : vector<1x32xf32> to vector<8x32xf32>
    %10 = arith.addf %7, %9 : vector<8x32xf32>
    %c0_10 = arith.constant 0 : index
    %c0_11 = arith.constant 0 : index
    %11 = vector.load %arg5[%c0_10, %c0_11] : memref<32x32xbf16, #tpu.memory_space<vmem>>, vector<32x32xbf16>
    %cst_12 = arith.constant dense<0.000000e+00> : vector<8x32xf32>
    %12 = tpu.matmul %2, %11, %cst_12 {dimension_numbers = #tpu.dot_dimension_numbers<[1], [0], [0], [1], [0, 0, 1, 1], [], []>} : vector<8x32xbf16>, vector<32x32xbf16>, vector<8x32xf32> -> vector<8x32xf32>
    %c0_13 = arith.constant 0 : index
    %c0_14 = arith.constant 0 : index
    %13 = vector.load %arg6[%c0_13, %c0_14] : memref<1x32xf32, #tpu.memory_space<vmem>>, vector<1x32xf32>
    %14 = vector.broadcast %13 : vector<1x32xf32> to vector<8x32xf32>
    %15 = arith.addf %12, %14 : vector<8x32xf32>
    %c0_15 = arith.constant 0 : index
    %c0_16 = arith.constant 0 : index
    %16 = vector.load %arg7[%c0_15, %c0_16] : memref<32x32xbf16, #tpu.memory_space<vmem>>, vector<32x32xbf16>
    %cst_17 = arith.constant dense<0.000000e+00> : vector<8x32xf32>
    %17 = tpu.matmul %2, %16, %cst_17 {dimension_numbers = #tpu.dot_dimension_numbers<[1], [0], [0], [1], [0, 0, 1, 1], [], []>} : vector<8x32xbf16>, vector<32x32xbf16>, vector<8x32xf32> -> vector<8x32xf32>
    %c0_18 = arith.constant 0 : index
    %c0_19 = arith.constant 0 : index
    %18 = vector.load %arg8[%c0_18, %c0_19] : memref<1x32xf32, #tpu.memory_space<vmem>>, vector<1x32xf32>
    %19 = vector.broadcast %18 : vector<1x32xf32> to vector<8x32xf32>
    %20 = arith.addf %17, %19 : vector<8x32xf32>
    %21 = arith.truncf %10 : vector<8x32xf32> to vector<8x32xbf16>
    %22 = arith.truncf %15 : vector<8x32xf32> to vector<8x32xbf16>
    %23 = vector.shape_cast %22 : vector<8x32xbf16> to vector<8x4x8xbf16>
    %24 = arith.truncf %20 : vector<8x32xf32> to vector<8x32xbf16>
    %25 = vector.shape_cast %24 : vector<8x32xbf16> to vector<8x4x8xbf16>
    %26 = vector.shape_cast %21 : vector<8x32xbf16> to vector<8x4x8xbf16>
    "tpu.trace_start"() <{level = 10 : i32, message = "tnd,snd->nts"}> : () -> ()
    %cst_20 = arith.constant dense<0.000000e+00> : vector<4x8x8xf32>
    %27 = tpu.matmul %26, %23, %cst_20 {dimension_numbers = #tpu.dot_dimension_numbers<[2], [2], [0], [0], [0, 1, 0, 0, 1, 0], [1], [1]>} : vector<8x4x8xbf16>, vector<8x4x8xbf16>, vector<4x8x8xf32> -> vector<4x8x8xf32>
    %cst_21 = arith.constant -1.000000e+09 : f32
    "tpu.trace_stop"() : () -> ()
    %28 = vector.shape_cast %5 : vector<1x1x8xi1> to vector<1x1x8xi1>
    %29 = vector.broadcast %28 : vector<1x1x8xi1> to vector<4x8x8xi1>
    %30 = vector.broadcast %cst_21 : f32 to vector<4x8x8xf32>
    %31 = arith.select %29, %27, %30 : vector<4x8x8xi1>, vector<4x8x8xf32>
    %cst_22 = arith.constant dense<0xFF800000> : vector<4x8xf32>
    %32 = vector.multi_reduction <maximumf>, %31, %cst_22 [2] : vector<4x8x8xf32> to vector<4x8xf32>
    %33 = vector.shape_cast %32 : vector<4x8xf32> to vector<4x8x1xf32>
    %34 = vector.broadcast %33 : vector<4x8x1xf32> to vector<4x8x8xf32>
    %35 = arith.subf %31, %34 : vector<4x8x8xf32>
    %36 = math.exp %35 : vector<4x8x8xf32>
    %cst_23 = arith.constant dense<0.000000e+00> : vector<4x8xf32>
    %37 = vector.multi_reduction <add>, %36, %cst_23 [2] : vector<4x8x8xf32> to vector<4x8xf32>
    %38 = vector.shape_cast %37 : vector<4x8xf32> to vector<4x8x1xf32>
    %39 = tpu.reciprocal %38 {approx = true} : vector<4x8x1xf32> -> vector<4x8x1xf32>
    %40 = vector.broadcast %39 : vector<4x8x1xf32> to vector<4x8x8xf32>
    %41 = arith.mulf %36, %40 : vector<4x8x8xf32>
    %42 = arith.truncf %41 : vector<4x8x8xf32> to vector<4x8x8xbf16>
    "tpu.trace_start"() <{level = 10 : i32, message = "nts,snd->tnd"}> : () -> ()
    %cst_24 = arith.constant dense<0.000000e+00> : vector<4x8x8xf32>
    %43 = tpu.matmul %25, %42, %cst_24 {dimension_numbers = #tpu.dot_dimension_numbers<[0], [2], [2], [1], [0, 1, 0, 2, 1, 1], [1], [0]>} : vector<8x4x8xbf16>, vector<4x8x8xbf16>, vector<4x8x8xf32> -> vector<4x8x8xf32>
    %44 = tpu.transpose %43, [2, 0, 1] : vector<4x8x8xf32> -> vector<8x4x8xf32>
    "tpu.trace_stop"() : () -> ()
    %45 = vector.shape_cast %44 : vector<8x4x8xf32> to vector<8x32xf32>
    %46 = arith.truncf %45 : vector<8x32xf32> to vector<8x32xbf16>
    %c0_25 = arith.constant 0 : index
    %c0_26 = arith.constant 0 : index
    %47 = vector.load %arg9[%c0_25, %c0_26] : memref<32x32xbf16, #tpu.memory_space<vmem>>, vector<32x32xbf16>
    %cst_27 = arith.constant dense<0.000000e+00> : vector<8x32xf32>
    %48 = tpu.matmul %46, %47, %cst_27 {dimension_numbers = #tpu.dot_dimension_numbers<[1], [0], [0], [1], [0, 0, 1, 1], [], []>} : vector<8x32xbf16>, vector<32x32xbf16>, vector<8x32xf32> -> vector<8x32xf32>
    %c0_28 = arith.constant 0 : index
    %c0_29 = arith.constant 0 : index
    %49 = vector.load %arg10[%c0_28, %c0_29] : memref<1x32xf32, #tpu.memory_space<vmem>>, vector<1x32xf32>
    %50 = vector.broadcast %49 : vector<1x32xf32> to vector<8x32xf32>
    %51 = arith.addf %48, %50 : vector<8x32xf32>
    %52 = arith.addf %51, %1 : vector<8x32xf32>
    %c0_30 = arith.constant 0 : index
    %c0_31 = arith.constant 0 : index
    %53 = vector.load %arg11[%c0_30, %c0_31] : memref<1x32xf32, #tpu.memory_space<vmem>>, vector<1x32xf32>
    %c0_32 = arith.constant 0 : index
    %c0_33 = arith.constant 0 : index
    %54 = vector.load %arg12[%c0_32, %c0_33] : memref<1x32xf32, #tpu.memory_space<vmem>>, vector<1x32xf32>
    %cst_34 = arith.constant dense<0.000000e+00> : vector<8xf32>
    %55 = vector.multi_reduction <add>, %52, %cst_34 [1] : vector<8x32xf32> to vector<8xf32>
    %56 = vector.shape_cast %55 : vector<8xf32> to vector<8x1xf32>
    %cst_35 = arith.constant 3.200000e+01 : f32
    %57 = vector.broadcast %cst_35 : f32 to vector<8x1xf32>
    %58 = arith.divf %56, %57 : vector<8x1xf32>
    %59 = vector.broadcast %58 : vector<8x1xf32> to vector<8x32xf32>
    %60 = arith.subf %52, %59 : vector<8x32xf32>
    %61 = arith.mulf %60, %60 : vector<8x32xf32>
    %cst_36 = arith.constant dense<0.000000e+00> : vector<8xf32>
    %62 = vector.multi_reduction <add>, %61, %cst_36 [1] : vector<8x32xf32> to vector<8xf32>
    %63 = vector.shape_cast %62 : vector<8xf32> to vector<8x1xf32>
    %cst_37 = arith.constant 3.200000e+01 : f32
    %64 = vector.broadcast %cst_37 : f32 to vector<8x1xf32>
    %65 = arith.divf %63, %64 : vector<8x1xf32>
    %66 = vector.broadcast %58 : vector<8x1xf32> to vector<8x32xf32>
    %67 = arith.subf %52, %66 : vector<8x32xf32>
    %cst_38 = arith.constant 9.99999996E-13 : f32
    %68 = vector.broadcast %cst_38 : f32 to vector<8x1xf32>
    %69 = arith.addf %65, %68 : vector<8x1xf32>
    %70 = math.rsqrt %69 : vector<8x1xf32>
    %71 = vector.broadcast %70 : vector<8x1xf32> to vector<8x32xf32>
    %72 = arith.mulf %67, %71 : vector<8x32xf32>
    %73 = vector.broadcast %53 : vector<1x32xf32> to vector<8x32xf32>
    %74 = arith.mulf %72, %73 : vector<8x32xf32>
    %75 = vector.broadcast %54 : vector<1x32xf32> to vector<8x32xf32>
    %76 = arith.addf %74, %75 : vector<8x32xf32>
    %77 = arith.truncf %76 : vector<8x32xf32> to vector<8x32xbf16>
    %c0_39 = arith.constant 0 : index
    %c0_40 = arith.constant 0 : index
    %78 = vector.load %arg13[%c0_39, %c0_40] : memref<32x64xbf16, #tpu.memory_space<vmem>>, vector<32x64xbf16>
    %cst_41 = arith.constant dense<0.000000e+00> : vector<8x64xf32>
    %79 = tpu.matmul %77, %78, %cst_41 {dimension_numbers = #tpu.dot_dimension_numbers<[1], [0], [0], [1], [0, 0, 1, 1], [], []>} : vector<8x32xbf16>, vector<32x64xbf16>, vector<8x64xf32> -> vector<8x64xf32>
    %c0_42 = arith.constant 0 : index
    %c0_43 = arith.constant 0 : index
    %80 = vector.load %arg14[%c0_42, %c0_43] : memref<1x64xf32, #tpu.memory_space<vmem>>, vector<1x64xf32>
    %81 = vector.broadcast %80 : vector<1x64xf32> to vector<8x64xf32>
    %82 = arith.addf %79, %81 : vector<8x64xf32>
    %cst_44 = arith.constant 5.000000e-01 : f32
    %83 = vector.broadcast %cst_44 : f32 to vector<8x64xf32>
    %84 = arith.mulf %83, %82 : vector<8x64xf32>
    %cst_45 = arith.constant 4.471500e-02 : f32
    %85 = vector.broadcast %cst_45 : f32 to vector<8x64xf32>
    %86 = arith.mulf %85, %82 : vector<8x64xf32>
    %87 = arith.mulf %86, %82 : vector<8x64xf32>
    %88 = arith.mulf %87, %82 : vector<8x64xf32>
    %89 = arith.addf %82, %88 : vector<8x64xf32>
    %cst_46 = arith.constant 0.797884583 : f32
    %90 = vector.broadcast %cst_46 : f32 to vector<8x64xf32>
    %91 = arith.mulf %90, %89 : vector<8x64xf32>
    %92 = math.tanh %91 : vector<8x64xf32>
    %cst_47 = arith.constant 1.000000e+00 : f32
    %93 = vector.broadcast %cst_47 : f32 to vector<8x64xf32>
    %94 = arith.addf %93, %92 : vector<8x64xf32>
    %95 = arith.mulf %84, %94 : vector<8x64xf32>
    %96 = arith.truncf %95 : vector<8x64xf32> to vector<8x64xbf16>
    %c0_48 = arith.constant 0 : index
    %c0_49 = arith.constant 0 : index
    %97 = vector.load %arg15[%c0_48, %c0_49] : memref<64x32xbf16, #tpu.memory_space<vmem>>, vector<64x32xbf16>
    %cst_50 = arith.constant dense<0.000000e+00> : vector<8x32xf32>
    %98 = tpu.matmul %96, %97, %cst_50 {dimension_numbers = #tpu.dot_dimension_numbers<[1], [0], [0], [1], [0, 0, 1, 1], [], []>} : vector<8x64xbf16>, vector<64x32xbf16>, vector<8x32xf32> -> vector<8x32xf32>
    %c0_51 = arith.constant 0 : index
    %c0_52 = arith.constant 0 : index
    %99 = vector.load %arg16[%c0_51, %c0_52] : memref<1x32xf32, #tpu.memory_space<vmem>>, vector<1x32xf32>
    %100 = vector.broadcast %99 : vector<1x32xf32> to vector<8x32xf32>
    %101 = arith.addf %98, %100 : vector<8x32xf32>
    %102 = arith.addf %101, %76 : vector<8x32xf32>
    %c0_53 = arith.constant 0 : index
    %c0_54 = arith.constant 0 : index
    %103 = vector.load %arg17[%c0_53, %c0_54] : memref<1x32xf32, #tpu.memory_space<vmem>>, vector<1x32xf32>
    %c0_55 = arith.constant 0 : index
    %c0_56 = arith.constant 0 : index
    %104 = vector.load %arg18[%c0_55, %c0_56] : memref<1x32xf32, #tpu.memory_space<vmem>>, vector<1x32xf32>
    %cst_57 = arith.constant dense<0.000000e+00> : vector<8xf32>
    %105 = vector.multi_reduction <add>, %102, %cst_57 [1] : vector<8x32xf32> to vector<8xf32>
    %106 = vector.shape_cast %105 : vector<8xf32> to vector<8x1xf32>
    %cst_58 = arith.constant 3.200000e+01 : f32
    %107 = vector.broadcast %cst_58 : f32 to vector<8x1xf32>
    %108 = arith.divf %106, %107 : vector<8x1xf32>
    %109 = vector.broadcast %108 : vector<8x1xf32> to vector<8x32xf32>
    %110 = arith.subf %102, %109 : vector<8x32xf32>
    %111 = arith.mulf %110, %110 : vector<8x32xf32>
    %cst_59 = arith.constant dense<0.000000e+00> : vector<8xf32>
    %112 = vector.multi_reduction <add>, %111, %cst_59 [1] : vector<8x32xf32> to vector<8xf32>
    %113 = vector.shape_cast %112 : vector<8xf32> to vector<8x1xf32>
    %cst_60 = arith.constant 3.200000e+01 : f32
    %114 = vector.broadcast %cst_60 : f32 to vector<8x1xf32>
    %115 = arith.divf %113, %114 : vector<8x1xf32>
    %116 = vector.broadcast %108 : vector<8x1xf32> to vector<8x32xf32>
    %117 = arith.subf %102, %116 : vector<8x32xf32>
    %cst_61 = arith.constant 9.99999996E-13 : f32
    %118 = vector.broadcast %cst_61 : f32 to vector<8x1xf32>
    %119 = arith.addf %115, %118 : vector<8x1xf32>
    %120 = math.rsqrt %119 : vector<8x1xf32>
    %121 = vector.broadcast %120 : vector<8x1xf32> to vector<8x32xf32>
    %122 = arith.mulf %117, %121 : vector<8x32xf32>
    %123 = vector.broadcast %103 : vector<1x32xf32> to vector<8x32xf32>
    %124 = arith.mulf %122, %123 : vector<8x32xf32>
    %125 = vector.broadcast %104 : vector<1x32xf32> to vector<8x32xf32>
    %126 = arith.addf %124, %125 : vector<8x32xf32>
    %c0_62 = arith.constant 0 : index
    %c0_63 = arith.constant 0 : index
    %c0_64 = arith.constant 0 : index
    %127 = vector.load %arg19[%c0_62, %c0_63, %c0_64] : memref<1x8x32xf32, #tpu.memory_space<vmem>>, vector<1x8x32xf32>
    %128 = vector.shape_cast %127 : vector<1x8x32xf32> to vector<8x32xf32>
    %129 = vector.shape_cast %126 : vector<8x32xf32> to vector<1x8x32xf32>
    tpu.vector_store %arg19[%c0_62, %c0_63, %c0_64], %129 {strides = array<i32>} : memref<1x8x32xf32, #tpu.memory_space<vmem>>, vector<1x8x32xf32>,
    return
  }
  func.func @transform_0(%arg0: i32) -> (i32, i32, i32) {
    %c0_i32 = arith.constant 0 : i32
    %c0_i32_0 = arith.constant 0 : i32
    %c0_i32_1 = arith.constant 0 : i32
    return %arg0, %c0_i32, %c0_i32_0 : i32, i32, i32
  }
  func.func @transform_1(%arg0: i32) -> (i32, i32, i32) {
    %c0_i32 = arith.constant 0 : i32
    %c0_i32_0 = arith.constant 0 : i32
    %c0_i32_1 = arith.constant 0 : i32
    return %arg0, %c0_i32, %c0_i32_0 : i32, i32, i32
  }
  func.func @transform_2(%arg0: i32) -> (i32, i32) {
    %c0_i32 = arith.constant 0 : i32
    %c0_i32_0 = arith.constant 0 : i32
    %c0_i32_1 = arith.constant 0 : i32
    return %c0_i32, %c0_i32_0 : i32, i32
  }
  func.func @transform_3(%arg0: i32) -> (i32, i32) {
    %c0_i32 = arith.constant 0 : i32
    %c0_i32_0 = arith.constant 0 : i32
    %c0_i32_1 = arith.constant 0 : i32
    return %c0_i32, %c0_i32_0 : i32, i32
  }
  func.func @transform_4(%arg0: i32) -> (i32, i32) {
    %c0_i32 = arith.constant 0 : i32
    %c0_i32_0 = arith.constant 0 : i32
    %c0_i32_1 = arith.constant 0 : i32
    return %c0_i32, %c0_i32_0 : i32, i32
  }
  func.func @transform_5(%arg0: i32) -> (i32, i32) {
    %c0_i32 = arith.constant 0 : i32
    %c0_i32_0 = arith.constant 0 : i32
    %c0_i32_1 = arith.constant 0 : i32
    return %c0_i32, %c0_i32_0 : i32, i32
  }
  func.func @transform_6(%arg0: i32) -> (i32, i32) {
    %c0_i32 = arith.constant 0 : i32
    %c0_i32_0 = arith.constant 0 : i32
    %c0_i32_1 = arith.constant 0 : i32
    return %c0_i32, %c0_i32_0 : i32, i32
  }
  func.func @transform_7(%arg0: i32) -> (i32, i32) {
    %c0_i32 = arith.constant 0 : i32
    %c0_i32_0 = arith.constant 0 : i32
    %c0_i32_1 = arith.constant 0 : i32
    return %c0_i32, %c0_i32_0 : i32, i32
  }
  func.func @transform_8(%arg0: i32) -> (i32, i32) {
    %c0_i32 = arith.constant 0 : i32
    %c0_i32_0 = arith.constant 0 : i32
    %c0_i32_1 = arith.constant 0 : i32
    return %c0_i32, %c0_i32_0 : i32, i32
  }
  func.func @transform_9(%arg0: i32) -> (i32, i32) {
    %c0_i32 = arith.constant 0 : i32
    %c0_i32_0 = arith.constant 0 : i32
    %c0_i32_1 = arith.constant 0 : i32
    return %c0_i32, %c0_i32_0 : i32, i32
  }
  func.func @transform_10(%arg0: i32) -> (i32, i32) {
    %c0_i32 = arith.constant 0 : i32
    %c0_i32_0 = arith.constant 0 : i32
    %c0_i32_1 = arith.constant 0 : i32
    return %c0_i32, %c0_i32_0 : i32, i32
  }
  func.func @transform_11(%arg0: i32) -> (i32, i32) {
    %c0_i32 = arith.constant 0 : i32
    %c0_i32_0 = arith.constant 0 : i32
    %c0_i32_1 = arith.constant 0 : i32
    return %c0_i32, %c0_i32_0 : i32, i32
  }
  func.func @transform_12(%arg0: i32) -> (i32, i32) {
    %c0_i32 = arith.constant 0 : i32
    %c0_i32_0 = arith.constant 0 : i32
    %c0_i32_1 = arith.constant 0 : i32
    return %c0_i32, %c0_i32_0 : i32, i32
  }
  func.func @transform_13(%arg0: i32) -> (i32, i32) {
    %c0_i32 = arith.constant 0 : i32
    %c0_i32_0 = arith.constant 0 : i32
    %c0_i32_1 = arith.constant 0 : i32
    return %c0_i32, %c0_i32_0 : i32, i32
  }
  func.func @transform_14(%arg0: i32) -> (i32, i32) {
    %c0_i32 = arith.constant 0 : i32
    %c0_i32_0 = arith.constant 0 : i32
    %c0_i32_1 = arith.constant 0 : i32
    return %c0_i32, %c0_i32_0 : i32, i32
  }
  func.func @transform_15(%arg0: i32) -> (i32, i32) {
    %c0_i32 = arith.constant 0 : i32
    %c0_i32_0 = arith.constant 0 : i32
    %c0_i32_1 = arith.constant 0 : i32
    return %c0_i32, %c0_i32_0 : i32, i32
  }
  func.func @transform_16(%arg0: i32) -> (i32, i32) {
    %c0_i32 = arith.constant 0 : i32
    %c0_i32_0 = arith.constant 0 : i32
    %c0_i32_1 = arith.constant 0 : i32
    return %c0_i32, %c0_i32_0 : i32, i32
  }
  func.func @transform_17(%arg0: i32) -> (i32, i32) {
    %c0_i32 = arith.constant 0 : i32
    %c0_i32_0 = arith.constant 0 : i32
    %c0_i32_1 = arith.constant 0 : i32
    return %c0_i32, %c0_i32_0 : i32, i32
  }
  func.func @transform_18(%arg0: i32) -> (i32, i32, i32) {
    %c0_i32 = arith.constant 0 : i32
    %c0_i32_0 = arith.constant 0 : i32
    %c0_i32_1 = arith.constant 0 : i32
    return %arg0, %c0_i32, %c0_i32_0 : i32, i32, i32
  }
}

module attributes {stable_mosaic.version = 11 : i64} {
  func.func @bert_layer_kernel(%arg0: i32, %arg1: memref<1x8x32xf32, #tpu.memory_space<vmem>>, %arg2: memref<1x1x8xf32, #tpu.memory_space<vmem>>, %arg3: memref<32x32xbf16, #tpu.memory_space<vmem>>, %arg4: memref<1x32xf32, #tpu.memory_space<vmem>>, %arg5: memref<32x32xbf16, #tpu.memory_space<vmem>>, %arg6: memref<1x32xf32, #tpu.memory_space<vmem>>, %arg7: memref<32x32xbf16, #tpu.memory_space<vmem>>, %arg8: memref<1x32xf32, #tpu.memory_space<vmem>>, %arg9: memref<32x32xbf16, #tpu.memory_space<vmem>>, %arg10: memref<1x32xf32, #tpu.memory_space<vmem>>, %arg11: memref<1x32xf32, #tpu.memory_space<vmem>>, %arg12: memref<1x32xf32, #tpu.memory_space<vmem>>, %arg13: memref<32x64xbf16, #tpu.memory_space<vmem>>, %arg14: memref<1x64xf32, #tpu.memory_space<vmem>>, %arg15: memref<64x32xbf16, #tpu.memory_space<vmem>>, %arg16: memref<1x32xf32, #tpu.memory_space<vmem>>, %arg17: memref<1x32xf32, #tpu.memory_space<vmem>>, %arg18: memref<1x32xf32, #tpu.memory_space<vmem>>, %arg19: memref<1x8x32xf32, #tpu.memory_space<vmem>>) attributes {dimension_semantics = [#tpu.dimension_semantics<parallel>], iteration_bounds = array<i64: 2>, scalar_prefetch = 0 : i64, scratch_operands = 0 : i64, tpu.core_type = #tpu.core_type<tc>, window_params = [{transform_indices = @transform_0, window_bounds = array<i64: 1, 8, 32>}, {transform_indices = @transform_1, window_bounds = array<i64: 1, 1, 8>}, {pipeline_mode = #tpu.pipeline_mode<synchronous>, transform_indices = @transform_2, window_bounds = array<i64: 32, 32>}, {pipeline_mode = #tpu.pipeline_mode<synchronous>, transform_indices = @transform_3, window_bounds = array<i64: 1, 32>}, {pipeline_mode = #tpu.pipeline_mode<synchronous>, transform_indices = @transform_4, window_bounds = array<i64: 32, 32>}, {pipeline_mode = #tpu.pipeline_mode<synchronous>, transform_indices = @transform_5, window_bounds = array<i64: 1, 32>}, {pipeline_mode = #tpu.pipeline_mode<synchronous>, transform_indices = @transform_6, window_bounds = array<i64: 32, 32>}, {pipeline_mode = #tpu.pipeline_mode<synchronous>, transform_indices = @transform_7, window_bounds = array<i64: 1, 32>}, {pipeline_mode = #tpu.pipeline_mode<synchronous>, transform_indices = @transform_8, window_bounds = array<i64: 32, 32>}, {pipeline_mode = #tpu.pipeline_mode<synchronous>, transform_indices = @transform_9, window_bounds = array<i64: 1, 32>}, {pipeline_mode = #tpu.pipeline_mode<synchronous>, transform_indices = @transform_10, window_bounds = array<i64: 1, 32>}, {pipeline_mode = #tpu.pipeline_mode<synchronous>, transform_indices = @transform_11, window_bounds = array<i64: 1, 32>}, {pipeline_mode = #tpu.pipeline_mode<synchronous>, transform_indices = @transform_12, window_bounds = array<i64: 32, 64>}, {pipeline_mode = #tpu.pipeline_mode<synchronous>, transform_indices = @transform_13, window_bounds = array<i64: 1, 64>}, {pipeline_mode = #tpu.pipeline_mode<synchronous>, transform_indices = @transform_14, window_bounds = array<i64: 64, 32>}, {pipeline_mode = #tpu.pipeline_mode<synchronous>, transform_indices = @transform_15, window_bounds = array<i64: 1, 32>}, {pipeline_mode = #tpu.pipeline_mode<synchronous>, transform_indices = @transform_16, window_bounds = array<i64: 1, 32>}, {pipeline_mode = #tpu.pipeline_mode<synchronous>, transform_indices = @transform_17, window_bounds = array<i64: 1, 32>}, {transform_indices = @transform_18, window_bounds = array<i64: 1, 8, 32>}]} {
    %c0 = arith.constant 0 : index
    %c0_0 = arith.constant 0 : index
    %c0_1 = arith.constant 0 : index
    %0 = vector.load %arg1[%c0, %c0_0, %c0_1] : memref<1x8x32xf32, #tpu.memory_space<vmem>>, vector<1x8x32xf32>
    %1 = vector.shape_cast %0 : vector<1x8x32xf32> to vector<8x32xf32>
    %2 = arith.truncf %1 : vector<8x32xf32> to vector<8x32xbf16>
    %c0_2 = arith.constant 0 : index
    %c0_3 = arith.constant 0 : index
    %c0_4 = arith.constant 0 : index
    %3 = vector.load %arg2[%c0_2, %c0_3, %c0_4] : memref<1x1x8xf32, #tpu.memory_space<vmem>>, vector<1x1x8xf32>
    %cst = arith.constant 0.000000e+00 : f32
    %4 = vector.broadcast %cst : f32 to vector<1x1x8xf32>
    %5 = arith.cmpf one, %3, %4 : vector<1x1x8xf32>
    %c0_5 = arith.constant 0 : index
    %c0_6 = arith.constant 0 : index
    %6 = vector.load %arg3[%c0_5, %c0_6] : memref<32x32xbf16, #tpu.memory_space<vmem>>, vector<32x32xbf16>
    %cst_7 = arith.constant dense<0.000000e+00> : vector<8x32xf32>
    %7 = tpu.matmul %2, %6, %cst_7 {dimension_numbers = #tpu.dot_dimension_numbers<[1], [0], [0], [1], [0, 0, 1, 1], [], []>} : vector<8x32xbf16>, vector<32x32xbf16>, vector<8x32xf32> -> vector<8x32xf32>
    %c0_8 = arith.constant 0 : index
    %c0_9 = arith.constant 0 : index
    %8 = vector.load %arg4[%c0_8, %c0_9] : memref<1x32xf32, #tpu.memory_space<vmem>>, vector<1x32xf32>
    %9 = vector.broadcast %8 : vector<1x32xf32> to vector<8x32xf32>
    %10 = arith.addf %7, %9 : vector<8x32xf32>
    %c0_10 = arith.constant 0 : index
    %c0_11 = arith.constant 0 : index
    %11 = vector.load %arg5[%c0_10, %c0_11] : memref<32x32xbf16, #tpu.memory_space<vmem>>, vector<32x32xbf16>
    %cst_12 = arith.constant dense<0.000000e+00> : vector<8x32xf32>
    %12 = tpu.matmul %2, %11, %cst_12 {dimension_numbers = #tpu.dot_dimension_numbers<[1], [0], [0], [1], [0, 0, 1, 1], [], []>} : vector<8x32xbf16>, vector<32x32xbf16>, vector<8x32xf32> -> vector<8x32xf32>
    %c0_13 = arith.constant 0 : index
    %c0_14 = arith.constant 0 : index
    %13 = vector.load %arg6[%c0_13, %c0_14] : memref<1x32xf32, #tpu.memory_space<vmem>>, vector<1x32xf32>
    %14 = vector.broadcast %13 : vector<1x32xf32> to vector<8x32xf32>
    %15 = arith.addf %12, %14 : vector<8x32xf32>
    %c0_15 = arith.constant 0 : index
    %c0_16 = arith.constant 0 : index
    %16 = vector.load %arg7[%c0_15, %c0_16] : memref<32x32xbf16, #tpu.memory_space<vmem>>, vector<32x32xbf16>
    %cst_17 = arith.constant dense<0.000000e+00> : vector<8x32xf32>
    %17 = tpu.matmul %2, %16, %cst_17 {dimension_numbers = #tpu.dot_dimension_numbers<[1], [0], [0], [1], [0, 0, 1, 1], [], []>} : vector<8x32xbf16>, vector<32x32xbf16>, vector<8x32xf32> -> vector<8x32xf32>
    %c0_18 = arith.constant 0 : index
    %c0_19 = arith.constant 0 : index
    %18 = vector.load %arg8[%c0_18, %c0_19] : memref<1x32xf32, #tpu.memory_space<vmem>>, vector<1x32xf32>
    %19 = vector.broadcast %18 : vector<1x32xf32> to vector<8x32xf32>
    %20 = arith.addf %17, %19 : vector<8x32xf32>
    %21 = arith.truncf %10 : vector<8x32xf32> to vector<8x32xbf16>
    %22 = arith.truncf %15 : vector<8x32xf32> to vector<8x32xbf16>
    %23 = vector.shape_cast %22 : vector<8x32xbf16> to vector<8x4x8xbf16>
    %24 = arith.truncf %20 : vector<8x32xf32> to vector<8x32xbf16>
    %25 = vector.shape_cast %24 : vector<8x32xbf16> to vector<8x4x8xbf16>
    %26 = vector.shape_cast %21 : vector<8x32xbf16> to vector<8x4x8xbf16>
    "tpu.trace_start"() <{level = 10 : i32, message = "tnd,snd->nts"}> : () -> ()
    %cst_20 = arith.constant dense<0.000000e+00> : vector<4x8x8xf32>
    %27 = tpu.matmul %26, %23, %cst_20 {dimension_numbers = #tpu.dot_dimension_numbers<[2], [2], [0], [0], [0, 1, 0, 0, 1, 0], [1], [1]>} : vector<8x4x8xbf16>, vector<8x4x8xbf16>, vector<4x8x8xf32> -> vector<4x8x8xf32>
    %cst_21 = arith.constant -1.000000e+09 : f32
    "tpu.trace_stop"() : () -> ()
    %28 = vector.shape_cast %5 : vector<1x1x8xi1> to vector<1x1x8xi1>
    %29 = vector.broadcast %28 : vector<1x1x8xi1> to vector<4x8x8xi1>
    %30 = vector.broadcast %cst_21 : f32 to vector<4x8x8xf32>
    %31 = arith.select %29, %27, %30 : vector<4x8x8xi1>, vector<4x8x8xf32>
    %cst_22 = arith.constant dense<0xFF800000> : vector<4x8xf32>
    %32 = vector.multi_reduction <maximumf>, %31, %cst_22 [2] : vector<4x8x8xf32> to vector<4x8xf32>
    %33 = vector.shape_cast %32 : vector<4x8xf32> to vector<4x8x1xf32>
    %34 = vector.broadcast %33 : vector<4x8x1xf32> to vector<4x8x8xf32>
    %35 = arith.subf %31, %34 : vector<4x8x8xf32>
    %36 = math.exp %35 : vector<4x8x8xf32>
    %cst_23 = arith.constant dense<0.000000e+00> : vector<4x8xf32>
    %37 = vector.multi_reduction <add>, %36, %cst_23 [2] : vector<4x8x8xf32> to vector<4x8xf32>
    %38 = vector.shape_cast %37 : vector<4x8xf32> to vector<4x8x1xf32>
    %39 = tpu.reciprocal %38 {approx = true} : vector<4x8x1xf32> -> vector<4x8x1xf32>
    %40 = vector.broadcast %39 : vector<4x8x1xf32> to vector<4x8x8xf32>
    %41 = arith.mulf %36, %40 : vector<4x8x8xf32>
    %42 = arith.truncf %41 : vector<4x8x8xf32> to vector<4x8x8xbf16>
    "tpu.trace_start"() <{level = 10 : i32, message = "nts,snd->tnd"}> : () -> ()
    %cst_24 = arith.constant dense<0.000000e+00> : vector<4x8x8xf32>
    %43 = tpu.matmul %25, %42, %cst_24 {dimension_numbers = #tpu.dot_dimension_numbers<[0], [2], [2], [1], [0, 1, 0, 2, 1, 1], [1], [0]>} : vector<8x4x8xbf16>, vector<4x8x8xbf16>, vector<4x8x8xf32> -> vector<4x8x8xf32>
    %44 = tpu.transpose %43, [2, 0, 1] : vector<4x8x8xf32> -> vector<8x4x8xf32>
    "tpu.trace_stop"() : () -> ()
    %45 = vector.shape_cast %44 : vector<8x4x8xf32> to vector<8x32xf32>
    %46 = arith.truncf %45 : vector<8x32xf32> to vector<8x32xbf16>
    %c0_25 = arith.constant 0 : index
    %c0_26 = arith.constant 0 : index
    %47 = vector.load %arg9[%c0_25, %c0_26] : memref<32x32xbf16, #tpu.memory_space<vmem>>, vector<32x32xbf16>
    %cst_27 = arith.constant dense<0.000000e+00> : vector<8x32xf32>
    %48 = tpu.matmul %46, %47, %cst_27 {dimension_numbers = #tpu.dot_dimension_numbers<[1], [0], [0], [1], [0, 0, 1, 1], [], []>} : vector<8x32xbf16>, vector<32x32xbf16>, vector<8x32xf32> -> vector<8x32xf32>
    %c0_28 = arith.constant 0 : index
    %c0_29 = arith.constant 0 : index
    %49 = vector.load %arg10[%c0_28, %c0_29] : memref<1x32xf32, #tpu.memory_space<vmem>>, vector<1x32xf32>
    %50 = vector.broadcast %49 : vector<1x32xf32> to vector<8x32xf32>
    %51 = arith.addf %48, %50 : vector<8x32xf32>
    %52 = arith.addf %51, %1 : vector<8x32xf32>
    %c0_30 = arith.constant 0 : index
    %c0_31 = arith.constant 0 : index
    %53 = vector.load %arg11[%c0_30, %c0_31] : memref<1x32xf32, #tpu.memory_space<vmem>>, vector<1x32xf32>
    %c0_32 = arith.constant 0 : index
    %c0_33 = arith.constant 0 : index
    %54 = vector.load %arg12[%c0_32, %c0_33] : memref<1x32xf32, #tpu.memory_space<vmem>>, vector<1x32xf32>
    %cst_34 = arith.constant dense<0.000000e+00> : vector<8xf32>
    %55 = vector.multi_reduction <add>, %52, %cst_34 [1] : vector<8x32xf32> to vector<8xf32>
    %56 = vector.shape_cast %55 : vector<8xf32> to vector<8x1xf32>
    %cst_35 = arith.constant 3.200000e+01 : f32
    %57 = vector.broadcast %cst_35 : f32 to vector<8x1xf32>
    %58 = arith.divf %56, %57 : vector<8x1xf32>
    %59 = vector.broadcast %58 : vector<8x1xf32> to vector<8x32xf32>
    %60 = arith.subf %52, %59 : vector<8x32xf32>
    %61 = arith.mulf %60, %60 : vector<8x32xf32>
    %cst_36 = arith.constant dense<0.000000e+00> : vector<8xf32>
    %62 = vector.multi_reduction <add>, %61, %cst_36 [1] : vector<8x32xf32> to vector<8xf32>
    %63 = vector.shape_cast %62 : vector<8xf32> to vector<8x1xf32>
    %cst_37 = arith.constant 3.200000e+01 : f32
    %64 = vector.broadcast %cst_37 : f32 to vector<8x1xf32>
    %65 = arith.divf %63, %64 : vector<8x1xf32>
    %66 = vector.broadcast %58 : vector<8x1xf32> to vector<8x32xf32>
    %67 = arith.subf %52, %66 : vector<8x32xf32>
    %cst_38 = arith.constant 9.99999996E-13 : f32
    %68 = vector.broadcast %cst_38 : f32 to vector<8x1xf32>
    %69 = arith.addf %65, %68 : vector<8x1xf32>
    %70 = math.rsqrt %69 : vector<8x1xf32>
    %71 = vector.broadcast %70 : vector<8x1xf32> to vector<8x32xf32>
    %72 = arith.mulf %67, %71 : vector<8x32xf32>
    %73 = vector.broadcast %53 : vector<1x32xf32> to vector<8x32xf32>
    %74 = arith.mulf %72, %73 : vector<8x32xf32>
    %75 = vector.broadcast %54 : vector<1x32xf32> to vector<8x32xf32>
    %76 = arith.addf %74, %75 : vector<8x32xf32>
    %77 = arith.truncf %76 : vector<8x32xf32> to vector<8x32xbf16>
    %c0_39 = arith.constant 0 : index
    %c0_40 = arith.constant 0 : index
    %78 = vector.load %arg13[%c0_39, %c0_40] : memref<32x64xbf16, #tpu.memory_space<vmem>>, vector<32x64xbf16>
    %cst_41 = arith.constant dense<0.000000e+00> : vector<8x64xf32>
    %79 = tpu.matmul %77, %78, %cst_41 {dimension_numbers = #tpu.dot_dimension_numbers<[1], [0], [0], [1], [0, 0, 1, 1], [], []>} : vector<8x32xbf16>, vector<32x64xbf16>, vector<8x64xf32> -> vector<8x64xf32>
    %c0_42 = arith.constant 0 : index
    %c0_43 = arith.constant 0 : index
    %80 = vector.load %arg14[%c0_42, %c0_43] : memref<1x64xf32, #tpu.memory_space<vmem>>, vector<1x64xf32>
    %81 = vector.broadcast %80 : vector<1x64xf32> to vector<8x64xf32>
    %82 = arith.addf %79, %81 : vector<8x64xf32>
    %cst_44 = arith.constant 5.000000e-01 : f32
    %83 = vector.broadcast %cst_44 : f32 to vector<8x64xf32>
    %84 = arith.mulf %83, %82 : vector<8x64xf32>
    %cst_45 = arith.constant 4.471500e-02 : f32
    %85 = vector.broadcast %cst_45 : f32 to vector<8x64xf32>
    %86 = arith.mulf %85, %82 : vector<8x64xf32>
    %87 = arith.mulf %86, %82 : vector<8x64xf32>
    %88 = arith.mulf %87, %82 : vector<8x64xf32>
    %89 = arith.addf %82, %88 : vector<8x64xf32>
    %cst_46 = arith.constant 0.797884583 : f32
    %90 = vector.broadcast %cst_46 : f32 to vector<8x64xf32>
    %91 = arith.mulf %90, %89 : vector<8x64xf32>
    %92 = math.tanh %91 : vector<8x64xf32>
    %cst_47 = arith.constant 1.000000e+00 : f32
    %93 = vector.broadcast %cst_47 : f32 to vector<8x64xf32>
    %94 = arith.addf %93, %92 : vector<8x64xf32>
    %95 = arith.mulf %84, %94 : vector<8x64xf32>
    %96 = arith.truncf %95 : vector<8x64xf32> to vector<8x64xbf16>
    %c0_48 = arith.constant 0 : index
    %c0_49 = arith.constant 0 : index
    %97 = vector.load %arg15[%c0_48, %c0_49] : memref<64x32xbf16, #tpu.memory_space<vmem>>, vector<64x32xbf16>
    %cst_50 = arith.constant dense<0.000000e+00> : vector<8x32xf32>
    %98 = tpu.matmul %96, %97, %cst_50 {dimension_numbers = #tpu.dot_dimension_numbers<[1], [0], [0], [1], [0, 0, 1, 1], [], []>} : vector<8x64xbf16>, vector<64x32xbf16>, vector<8x32xf32> -> vector<8x32xf32>
    %c0_51 = arith.constant 0 : index
    %c0_52 = arith.constant 0 : index
    %99 = vector.load %arg16[%c0_51, %c0_52] : memref<1x32xf32, #tpu.memory_space<vmem>>, vector<1x32xf32>
    %100 = vector.broadcast %99 : vector<1x32xf32> to vector<8x32xf32>
    %101 = arith.addf %98, %100 : vector<8x32xf32>
    %102 = arith.addf %101, %76 : vector<8x32xf32>
    %c0_53 = arith.constant 0 : index
    %c0_54 = arith.constant 0 : index
    %103 = vector.load %arg17[%c0_53, %c0_54] : memref<1x32xf32, #tpu.memory_space<vmem>>, vector<1x32xf32>
    %c0_55 = arith.constant 0 : index
    %c0_56 = arith.constant 0 : index
    %104 = vector.load %arg18[%c0_55, %c0_56] : memref<1x32xf32, #tpu.memory_space<vmem>>, vector<1x32xf32>
    %cst_57 = arith.constant dense<0.000000e+00> : vector<8xf32>
    %105 = vector.multi_reduction <add>, %102, %cst_57 [1] : vector<8x32xf32> to vector<8xf32>
    %106 = vector.shape_cast %105 : vector<8xf32> to vector<8x1xf32>
    %cst_58 = arith.constant 3.200000e+01 : f32
    %107 = vector.broadcast %cst_58 : f32 to vector<8x1xf32>
    %108 = arith.divf %106, %107 : vector<8x1xf32>
    %109 = vector.broadcast %108 : vector<8x1xf32> to vector<8x32xf32>
    %110 = arith.subf %102, %109 : vector<8x32xf32>
    %111 = arith.mulf %110, %110 : vector<8x32xf32>
    %cst_59 = arith.constant dense<0.000000e+00> : vector<8xf32>
    %112 = vector.multi_reduction <add>, %111, %cst_59 [1] : vector<8x32xf32> to vector<8xf32>
    %113 = vector.shape_cast %112 : vector<8xf32> to vector<8x1xf32>
    %cst_60 = arith.constant 3.200000e+01 : f32
    %114 = vector.broadcast %cst_60 : f32 to vector<8x1xf32>
    %115 = arith.divf %113, %114 : vector<8x1xf32>
    %116 = vector.broadcast %108 : vector<8x1xf32> to vector<8x32xf32>
    %117 = arith.subf %102, %116 : vector<8x32xf32>
    %cst_61 = arith.constant 9.99999996E-13 : f32
    %118 = vector.broadcast %cst_61 : f32 to vector<8x1xf32>
    %119 = arith.addf %115, %118 : vector<8x1xf32>
    %120 = math.rsqrt %119 : vector<8x1xf32>
    %121 = vector.broadcast %120 : vector<8x1xf32> to vector<8x32xf32>
    %122 = arith.mulf %117, %121 : vector<8x32xf32>
    %123 = vector.broadcast %103 : vector<1x32xf32> to vector<8x32xf32>
    %124 = arith.mulf %122, %123 : vector<8x32xf32>
    %125 = vector.broadcast %104 : vector<1x32xf32> to vector<8x32xf32>
    %126 = arith.addf %124, %125 : vector<8x32xf32>
    %c0_62 = arith.constant 0 : index
    %c0_63 = arith.constant 0 : index
    %c0_64 = arith.constant 0 : index
    %127 = vector.load %arg19[%c0_62, %c0_63, %c0_64] : memref<1x8x32xf32, #tpu.memory_space<vmem>>, vector<1x8x32xf32>
    %128 = vector.shape_cast %127 : vector<1x8x32xf32> to vector<8x32xf32>
    %129 = vector.shape_cast %126 : vector<8x32xf32> to vector<1x8x32xf32>
    tpu.vector_store %arg19[%c0_62, %c0_63, %c0_64], %129 {strides = array<i32>} : memref<1x8x32xf32, #tpu.memory_space<vmem>>, vector<1x8x32xf32>,
    return
  }
  func.func @transform_0(%arg0: i32) -> (i32, i32, i32) {
    %c0_i32 = arith.constant 0 : i32
    %c0_i32_0 = arith.constant 0 : i32
    %c0_i32_1 = arith.constant 0 : i32
    return %arg0, %c0_i32, %c0_i32_0 : i32, i32, i32
  }
  func.func @transform_1(%arg0: i32) -> (i32, i32, i32) {
    %c0_i32 = arith.constant 0 : i32
    %c0_i32_0 = arith.constant 0 : i32
    %c0_i32_1 = arith.constant 0 : i32
    return %arg0, %c0_i32, %c0_i32_0 : i32, i32, i32
  }
  func.func @transform_2(%arg0: i32) -> (i32, i32) {
    %c0_i32 = arith.constant 0 : i32
    %c0_i32_0 = arith.constant 0 : i32
    %c0_i32_1 = arith.constant 0 : i32
    return %c0_i32, %c0_i32_0 : i32, i32
  }
  func.func @transform_3(%arg0: i32) -> (i32, i32) {
    %c0_i32 = arith.constant 0 : i32
    %c0_i32_0 = arith.constant 0 : i32
    %c0_i32_1 = arith.constant 0 : i32
    return %c0_i32, %c0_i32_0 : i32, i32
  }
  func.func @transform_4(%arg0: i32) -> (i32, i32) {
    %c0_i32 = arith.constant 0 : i32
    %c0_i32_0 = arith.constant 0 : i32
    %c0_i32_1 = arith.constant 0 : i32
    return %c0_i32, %c0_i32_0 : i32, i32
  }
  func.func @transform_5(%arg0: i32) -> (i32, i32) {
    %c0_i32 = arith.constant 0 : i32
    %c0_i32_0 = arith.constant 0 : i32
    %c0_i32_1 = arith.constant 0 : i32
    return %c0_i32, %c0_i32_0 : i32, i32
  }
  func.func @transform_6(%arg0: i32) -> (i32, i32) {
    %c0_i32 = arith.constant 0 : i32
    %c0_i32_0 = arith.constant 0 : i32
    %c0_i32_1 = arith.constant 0 : i32
    return %c0_i32, %c0_i32_0 : i32, i32
  }
  func.func @transform_7(%arg0: i32) -> (i32, i32) {
    %c0_i32 = arith.constant 0 : i32
    %c0_i32_0 = arith.constant 0 : i32
    %c0_i32_1 = arith.constant 0 : i32
    return %c0_i32, %c0_i32_0 : i32, i32
  }
  func.func @transform_8(%arg0: i32) -> (i32, i32) {
    %c0_i32 = arith.constant 0 : i32
    %c0_i32_0 = arith.constant 0 : i32
    %c0_i32_1 = arith.constant 0 : i32
    return %c0_i32, %c0_i32_0 : i32, i32
  }
  func.func @transform_9(%arg0: i32) -> (i32, i32) {
    %c0_i32 = arith.constant 0 : i32
    %c0_i32_0 = arith.constant 0 : i32
    %c0_i32_1 = arith.constant 0 : i32
    return %c0_i32, %c0_i32_0 : i32, i32
  }
  func.func @transform_10(%arg0: i32) -> (i32, i32) {
    %c0_i32 = arith.constant 0 : i32
    %c0_i32_0 = arith.constant 0 : i32
    %c0_i32_1 = arith.constant 0 : i32
    return %c0_i32, %c0_i32_0 : i32, i32
  }
  func.func @transform_11(%arg0: i32) -> (i32, i32) {
    %c0_i32 = arith.constant 0 : i32
    %c0_i32_0 = arith.constant 0 : i32
    %c0_i32_1 = arith.constant 0 : i32
    return %c0_i32, %c0_i32_0 : i32, i32
  }
  func.func @transform_12(%arg0: i32) -> (i32, i32) {
    %c0_i32 = arith.constant 0 : i32
    %c0_i32_0 = arith.constant 0 : i32
    %c0_i32_1 = arith.constant 0 : i32
    return %c0_i32, %c0_i32_0 : i32, i32
  }
  func.func @transform_13(%arg0: i32) -> (i32, i32) {
    %c0_i32 = arith.constant 0 : i32
    %c0_i32_0 = arith.constant 0 : i32
    %c0_i32_1 = arith.constant 0 : i32
    return %c0_i32, %c0_i32_0 : i32, i32
  }
  func.func @transform_14(%arg0: i32) -> (i32, i32) {
    %c0_i32 = arith.constant 0 : i32
    %c0_i32_0 = arith.constant 0 : i32
    %c0_i32_1 = arith.constant 0 : i32
    return %c0_i32, %c0_i32_0 : i32, i32
  }
  func.func @transform_15(%arg0: i32) -> (i32, i32) {
    %c0_i32 = arith.constant 0 : i32
    %c0_i32_0 = arith.constant 0 : i32
    %c0_i32_1 = arith.constant 0 : i32
    return %c0_i32, %c0_i32_0 : i32, i32
  }
  func.func @transform_16(%arg0: i32) -> (i32, i32) {
    %c0_i32 = arith.constant 0 : i32
    %c0_i32_0 = arith.constant 0 : i32
    %c0_i32_1 = arith.constant 0 : i32
    return %c0_i32, %c0_i32_0 : i32, i32
  }
  func.func @transform_17(%arg0: i32) -> (i32, i32) {
    %c0_i32 = arith.constant 0 : i32
    %c0_i32_0 = arith.constant 0 : i32
    %c0_i32_1 = arith.constant 0 : i32
    return %c0_i32, %c0_i32_0 : i32, i32
  }
  func.func @transform_18(%arg0: i32) -> (i32, i32, i32) {
    %c0_i32 = arith.constant 0 : i32
    %c0_i32_0 = arith.constant 0 : i32
    %c0_i32_1 = arith.constant 0 : i32
    return %arg0, %c0_i32, %c0_i32_0 : i32, i32, i32
  }
}

</mosaic_0001>

<llo_original>
// kernel: tpu_custom_call.1
$region0: #{tpu_custom_call.1}
  #allocation0 [shape = 'u32[]', space=smem, size = 0x4, offset = 0x4, fixed_abs, tag = 'smem constant byte address 0x4 - core index']
  #allocation1 [shape = 'u32[144,128]{1,0:T(1,128)}', space=vmem, size = 0x12000, scoped, tag = 'internal scratch']
  %s0 = inlined_call_operand.vmem [shape: f32[2,8,32], index: 0, kind: input, shape index: {}]
  %s1 = inlined_call_operand.hbm [shape: f32[2,1,8], index: 1, kind: input, shape index: {}]
  %s2 = inlined_call_operand.vmem [shape: bf16[32,32], index: 2, kind: input, shape index: {}]
  %s3 = inlined_call_operand.hbm [shape: f32[1,32], index: 3, kind: input, shape index: {}]
  %s4 = inlined_call_operand.vmem [shape: bf16[32,32], index: 4, kind: input, shape index: {}]
  %s5 = inlined_call_operand.hbm [shape: f32[1,32], index: 5, kind: input, shape index: {}]
  %s6 = inlined_call_operand.hbm [shape: bf16[32,32], index: 6, kind: input, shape index: {}]
  %s7 = inlined_call_operand.hbm [shape: f32[1,32], index: 7, kind: input, shape index: {}]
  %s8 = inlined_call_operand.hbm [shape: bf16[32,32], index: 8, kind: input, shape index: {}]
  %s9 = inlined_call_operand.hbm [shape: f32[1,32], index: 9, kind: input, shape index: {}]
  %s10 = inlined_call_operand.vmem [shape: f32[1,32], index: 10, kind: input, shape index: {}]
  %s11 = inlined_call_operand.vmem [shape: f32[1,32], index: 11, kind: input, shape index: {}]
  %s12 = inlined_call_operand.vmem [shape: bf16[32,64], index: 12, kind: input, shape index: {}]
  %s13 = inlined_call_operand.vmem [shape: f32[1,64], index: 13, kind: input, shape index: {}]
  %s14 = inlined_call_operand.vmem [shape: bf16[64,32], index: 14, kind: input, shape index: {}]
  %s15 = inlined_call_operand.vmem [shape: f32[1,32], index: 15, kind: input, shape index: {}]
  %s16 = inlined_call_operand.vmem [shape: f32[1,32], index: 16, kind: input, shape index: {}]
  %s17 = inlined_call_operand.vmem [shape: f32[1,32], index: 17, kind: input, shape index: {}]
  %s18 = inlined_call_operand.hbm [shape: f32[2,8,32], index: 18, kind: output, shape index: {}]
  %s19 = sld [smem:[#allocation0]]
  $region133: #{tpu_custom_call.1} parent=0
    _
  %s21 = ssub.s32 1, %s19
  %s22 = scalar_select 0, %s21, %s19
  $region1: #{tpu_custom_call.1} parent=0
    #allocation2 [shape = 'u8[1024]{0}', space=vmem, size = 0x400, scoped, tag = 'input window, operand 1']
    #allocation3 [shape = 's32[2]{0}', space=sflag, size = 0x8, scoped, tag = 'scoped memory for tpu_custom_call.1']
    #allocation4 [shape = 's32[2]{0}', space=sflag, size = 0x8, scoped, tag = 'scoped memory for tpu_custom_call.1']
    #allocation5 [shape = 'u8[512]{0}', space=vmem, size = 0x400, scoped, tag = 'input window, operand 3, single buffered']
    #allocation6 [shape = 's32[1]{0}', space=sflag, size = 0x4, scoped, tag = 'scoped memory for tpu_custom_call.1']
    #allocation7 [shape = 'u8[512]{0}', space=vmem, size = 0x400, scoped, tag = 'input window, operand 5, single buffered']
    #allocation8 [shape = 'u8[8192]{0}', space=vmem, size = 0x2000, scoped, tag = 'input window, operand 6, single buffered']
    #allocation9 [shape = 's32[1]{0}', space=sflag, size = 0x4, scoped, tag = 'scoped memory for tpu_custom_call.1']
    #allocation10 [shape = 'u8[512]{0}', space=vmem, size = 0x400, scoped, tag = 'input window, operand 7, single buffered']
    #allocation11 [shape = 'u8[8192]{0}', space=vmem, size = 0x2000, scoped, tag = 'input window, operand 8, single buffered']
    #allocation12 [shape = 's32[1]{0}', space=sflag, size = 0x4, scoped, tag = 'scoped memory for tpu_custom_call.1']
    #allocation13 [shape = 'u8[512]{0}', space=vmem, size = 0x400, scoped, tag = 'input window, operand 9, single buffered']
    #allocation14 [shape = 'u8[8192]{0}', space=vmem, size = 0x2000, scoped, tag = 'output window, operand 0']
    %23 = vsyncpa [#allocation3], 0
    %s24 = scalar_lea.sflag [#allocation3], 1
    %25 = vsyncpa %s24, 0
    %26 = vsyncpa [#allocation6], 0
    %27 = vsyncpa [#allocation9], 0
    %28 = vsyncpa [#allocation12], 0
    %29 = vsyncpa [#allocation4], 0
    %s30 = scalar_lea.sflag [#allocation4], 1
    %31 = vsyncpa %s30, 0
    loop: start=0, step=1, limit=4
    $region2: #{tpu_custom_call.1} parent=1 // loop_pre_header
      _
    $region3: #{tpu_custom_call.1} parent=1 // loop_header
      %s33 = sphi 0, %s37
      %p34 = scmp.ge.s32.totalorder %s33, 4
      %s43 = sphi 0, %s45
      %s46 = sphi 0, %s43
      %s47 = sphi 0, %s46
      %s63 = sphi 0, %s47
      %s69 = sphi 0, %s71
      %s72 = sphi 0, %s69
      %s73 = sphi 0, %s72
      %s89 = sphi 0, %s73
      %s93 = sphi 0, %s93
      %s95 = sphi 0, %s93
      %s96 = sphi 0, %s95
      %s110 = sphi 0, %s96
      %s114 = sphi 0, %s114
      %s116 = sphi 0, %s114
      %s117 = sphi 0, %s116
      %s131 = sphi 0, %s117
      %s135 = sphi 0, %s135
      %s137 = sphi 0, %s135
      %s138 = sphi 0, %s137
      %s152 = sphi 0, %s138
      %s156 = sphi 0, %s156
      %s158 = sphi 0, %s156
      %s159 = sphi 0, %s158
      %s173 = sphi 0, %s159
      %s177 = sphi 0, %s177
      %s179 = sphi 0, %s177
      %s180 = sphi 0, %s179
      %s194 = sphi 0, %s180
      %s198 = sphi 0, %s198
      %s200 = sphi 0, %s198
      %s201 = sphi 0, %s200
      %s215 = sphi 0, %s201
      %s219 = sphi 0, %s219
      %s221 = sphi 0, %s219
      %s222 = sphi 0, %s221
      %s236 = sphi 0, %s222
      %s240 = sphi 0, %s240
      %s242 = sphi 0, %s240
      %s243 = sphi 0, %s242
      %s257 = sphi 0, %s243
      %s261 = sphi 0, %s261
      %s263 = sphi 0, %s261
      %s264 = sphi 0, %s263
      %s278 = sphi 0, %s264
      %s282 = sphi 0, %s282
      %s284 = sphi 0, %s282
      %s285 = sphi 0, %s284
      %s299 = sphi 0, %s285
      %s303 = sphi 0, %s303
      %s305 = sphi 0, %s303
      %s306 = sphi 0, %s305
      %s320 = sphi 0, %s306
      %s324 = sphi 0, %s324
      %s326 = sphi 0, %s324
      %s327 = sphi 0, %s326
      %s341 = sphi 0, %s327
      %s345 = sphi 0, %s345
      %s347 = sphi 0, %s345
      %s348 = sphi 0, %s347
      %s362 = sphi 0, %s348
      %s366 = sphi 0, %s366
      %s368 = sphi 0, %s366
      %s369 = sphi 0, %s368
      %s383 = sphi 0, %s369
      %s387 = sphi 0, %s387
      %s389 = sphi 0, %s387
      %s390 = sphi 0, %s389
      %s404 = sphi 0, %s390
      %s408 = sphi 0, %s408
      %s410 = sphi 0, %s408
      %s411 = sphi 0, %s410
      %s425 = sphi 0, %s411
      %s431 = sphi 0, %s433
      %s434 = sphi 0, %s431
      %s435 = sphi 0, %s434
      %s451 = sphi 0, %s435
    $region4: #{tpu_custom_call.1} parent=1 // loop_header_branch
      %36 = sbr.rel (%p34) target = $region8
    $region5: #{tpu_custom_call.1} parent=1 // loop_body
      %s38 = ssub.s32 %s33, 1
      %s39 = ssub.s32 %s33, 2
      %s40 = sadd.s32 %s33, 1
      %s41 = ssub.s32 %s33, %s40
      %p42 = scmp.eq.s32.totalorder %s41, 0
      %s44 = sadd.s32 %s43, 1
      %s45 = scalar_select %p42, %s43, %s44
      %p48 = pneg %p42
      %p49 = scmp.eq.s32.totalorder %s33, 1
      %p50 = por %p48, %p49
      %p51 = scmp.ne.s32.totalorder %s43, %s46
      %p52 = scmp.eq.s32.totalorder %s33, 0
      %p53 = por %p51, %p52
      %p54 = scmp.ne.s32.totalorder %s43, %s46
      %p55 = scmp.eq.s32.totalorder %s38, 1
      %p56 = por %p54, %p55
      %p57 = scmp.ne.s32.totalorder %s46, %s47
      %p58 = scmp.eq.s32.totalorder %s38, 0
      %p59 = por %p57, %p58
      %p60 = scmp.ne.s32.totalorder %s46, %s47
      %p61 = scmp.eq.s32.totalorder %s39, 1
      %p62 = por %p60, %p61
      %p64 = scmp.ne.s32.totalorder %s47, %s63
      %p65 = scmp.eq.s32.totalorder %s39, 0
      %p66 = por %p64, %p65
      %s67 = ssub.s32 %s33, %s40
      %p68 = scmp.eq.s32.totalorder %s67, 0
      %s70 = sadd.s32 %s69, 1
      %s71 = scalar_select %p68, %s69, %s70
      %p74 = pneg %p68
      %p75 = scmp.eq.s32.totalorder %s33, 1
      %p76 = por %p74, %p75
      %p77 = scmp.ne.s32.totalorder %s69, %s72
      %p78 = scmp.eq.s32.totalorder %s33, 0
      %p79 = por %p77, %p78
      %p80 = scmp.ne.s32.totalorder %s69, %s72
      %p81 = scmp.eq.s32.totalorder %s38, 1
      %p82 = por %p80, %p81
      %p83 = scmp.ne.s32.totalorder %s72, %s73
      %p84 = scmp.eq.s32.totalorder %s38, 0
      %p85 = por %p83, %p84
      %p86 = scmp.ne.s32.totalorder %s72, %s73
      %p87 = scmp.eq.s32.totalorder %s39, 1
      %p88 = por %p86, %p87
      %p90 = scmp.ne.s32.totalorder %s73, %s89
      %p91 = scmp.eq.s32.totalorder %s39, 0
      %p92 = por %p90, %p91
      %s94 = sadd.s32 %s93, 1
      %p97 = scmp.eq.s32.totalorder %s33, 1
      %p98 = scmp.ne.s32.totalorder %s93, %s95
      %p99 = scmp.eq.s32.totalorder %s33, 0
      %p100 = por %p98, %p99
      %p101 = scmp.ne.s32.totalorder %s93, %s95
      %p102 = scmp.eq.s32.totalorder %s38, 1
      %p103 = por %p101, %p102
      %p104 = scmp.ne.s32.totalorder %s95, %s96
      %p105 = scmp.eq.s32.totalorder %s38, 0
      %p106 = por %p104, %p105
      %p107 = scmp.ne.s32.totalorder %s95, %s96
      %p108 = scmp.eq.s32.totalorder %s39, 1
      %p109 = por %p107, %p108
      %p111 = scmp.ne.s32.totalorder %s96, %s110
      %p112 = scmp.eq.s32.totalorder %s39, 0
      %p113 = por %p111, %p112
      %s115 = sadd.s32 %s114, 1
      %p118 = scmp.eq.s32.totalorder %s33, 1
      %p119 = scmp.ne.s32.totalorder %s114, %s116
      %p120 = scmp.eq.s32.totalorder %s33, 0
      %p121 = por %p119, %p120
      %p122 = scmp.ne.s32.totalorder %s114, %s116
      %p123 = scmp.eq.s32.totalorder %s38, 1
      %p124 = por %p122, %p123
      %p125 = scmp.ne.s32.totalorder %s116, %s117
      %p126 = scmp.eq.s32.totalorder %s38, 0
      %p127 = por %p125, %p126
      %p128 = scmp.ne.s32.totalorder %s116, %s117
      %p129 = scmp.eq.s32.totalorder %s39, 1
      %p130 = por %p128, %p129
      %p132 = scmp.ne.s32.totalorder %s117, %s131
      %p133 = scmp.eq.s32.totalorder %s39, 0
      %p134 = por %p132, %p133
      %s136 = sadd.s32 %s135, 1
      %p139 = scmp.eq.s32.totalorder %s33, 1
      %p140 = scmp.ne.s32.totalorder %s135, %s137
      %p141 = scmp.eq.s32.totalorder %s33, 0
      %p142 = por %p140, %p141
      %p143 = scmp.ne.s32.totalorder %s135, %s137
      %p144 = scmp.eq.s32.totalorder %s38, 1
      %p145 = por %p143, %p144
      %p146 = scmp.ne.s32.totalorder %s137, %s138
      %p147 = scmp.eq.s32.totalorder %s38, 0
      %p148 = por %p146, %p147
      %p149 = scmp.ne.s32.totalorder %s137, %s138
      %p150 = scmp.eq.s32.totalorder %s39, 1
      %p151 = por %p149, %p150
      %p153 = scmp.ne.s32.totalorder %s138, %s152
      %p154 = scmp.eq.s32.totalorder %s39, 0
      %p155 = por %p153, %p154
      %s157 = sadd.s32 %s156, 1
      %p160 = scmp.eq.s32.totalorder %s33, 1
      %p161 = scmp.ne.s32.totalorder %s156, %s158
      %p162 = scmp.eq.s32.totalorder %s33, 0
      %p163 = por %p161, %p162
      %p164 = scmp.ne.s32.totalorder %s156, %s158
      %p165 = scmp.eq.s32.totalorder %s38, 1
      %p166 = por %p164, %p165
      %p167 = scmp.ne.s32.totalorder %s158, %s159
      %p168 = scmp.eq.s32.totalorder %s38, 0
      %p169 = por %p167, %p168
      %p170 = scmp.ne.s32.totalorder %s158, %s159
      %p171 = scmp.eq.s32.totalorder %s39, 1
      %p172 = por %p170, %p171
      %p174 = scmp.ne.s32.totalorder %s159, %s173
      %p175 = scmp.eq.s32.totalorder %s39, 0
      %p176 = por %p174, %p175
      %s178 = sadd.s32 %s177, 1
      %p181 = scmp.eq.s32.totalorder %s33, 1
      %p182 = scmp.ne.s32.totalorder %s177, %s179
      %p183 = scmp.eq.s32.totalorder %s33, 0
      %p184 = por %p182, %p183
      %p185 = scmp.ne.s32.totalorder %s177, %s179
      %p186 = scmp.eq.s32.totalorder %s38, 1
      %p187 = por %p185, %p186
      %p188 = scmp.ne.s32.totalorder %s179, %s180
      %p189 = scmp.eq.s32.totalorder %s38, 0
      %p190 = por %p188, %p189
      %p191 = scmp.ne.s32.totalorder %s179, %s180
      %p192 = scmp.eq.s32.totalorder %s39, 1
      %p193 = por %p191, %p192
      %p195 = scmp.ne.s32.totalorder %s180, %s194
      %p196 = scmp.eq.s32.totalorder %s39, 0
      %p197 = por %p195, %p196
      %s199 = sadd.s32 %s198, 1
      %p202 = scmp.eq.s32.totalorder %s33, 1
      %p203 = scmp.ne.s32.totalorder %s198, %s200
      %p204 = scmp.eq.s32.totalorder %s33, 0
      %p205 = por %p203, %p204
      %p206 = scmp.ne.s32.totalorder %s198, %s200
      %p207 = scmp.eq.s32.totalorder %s38, 1
      %p208 = por %p206, %p207
      %p209 = scmp.ne.s32.totalorder %s200, %s201
      %p210 = scmp.eq.s32.totalorder %s38, 0
      %p211 = por %p209, %p210
      %p212 = scmp.ne.s32.totalorder %s200, %s201
      %p213 = scmp.eq.s32.totalorder %s39, 1
      %p214 = por %p212, %p213
      %p216 = scmp.ne.s32.totalorder %s201, %s215
      %p217 = scmp.eq.s32.totalorder %s39, 0
      %p218 = por %p216, %p217
      %s220 = sadd.s32 %s219, 1
      %p223 = scmp.eq.s32.totalorder %s33, 1
      %p224 = scmp.ne.s32.totalorder %s219, %s221
      %p225 = scmp.eq.s32.totalorder %s33, 0
      %p226 = por %p224, %p225
      %p227 = scmp.ne.s32.totalorder %s219, %s221
      %p228 = scmp.eq.s32.totalorder %s38, 1
      %p229 = por %p227, %p228
      %p230 = scmp.ne.s32.totalorder %s221, %s222
      %p231 = scmp.eq.s32.totalorder %s38, 0
      %p232 = por %p230, %p231
      %p233 = scmp.ne.s32.totalorder %s221, %s222
      %p234 = scmp.eq.s32.totalorder %s39, 1
      %p235 = por %p233, %p234
      %p237 = scmp.ne.s32.totalorder %s222, %s236
      %p238 = scmp.eq.s32.totalorder %s39, 0
      %p239 = por %p237, %p238
      %s241 = sadd.s32 %s240, 1
      %p244 = scmp.eq.s32.totalorder %s33, 1
      %p245 = scmp.ne.s32.totalorder %s240, %s242
      %p246 = scmp.eq.s32.totalorder %s33, 0
      %p247 = por %p245, %p246
      %p248 = scmp.ne.s32.totalorder %s240, %s242
      %p249 = scmp.eq.s32.totalorder %s38, 1
      %p250 = por %p248, %p249
      %p251 = scmp.ne.s32.totalorder %s242, %s243
      %p252 = scmp.eq.s32.totalorder %s38, 0
      %p253 = por %p251, %p252
      %p254 = scmp.ne.s32.totalorder %s242, %s243
      %p255 = scmp.eq.s32.totalorder %s39, 1
      %p256 = por %p254, %p255
      %p258 = scmp.ne.s32.totalorder %s243, %s257
      %p259 = scmp.eq.s32.totalorder %s39, 0
      %p260 = por %p258, %p259
      %s262 = sadd.s32 %s261, 1
      %p265 = scmp.eq.s32.totalorder %s33, 1
      %p266 = scmp.ne.s32.totalorder %s261, %s263
      %p267 = scmp.eq.s32.totalorder %s33, 0
      %p268 = por %p266, %p267
      %p269 = scmp.ne.s32.totalorder %s261, %s263
      %p270 = scmp.eq.s32.totalorder %s38, 1
      %p271 = por %p269, %p270
      %p272 = scmp.ne.s32.totalorder %s263, %s264
      %p273 = scmp.eq.s32.totalorder %s38, 0
      %p274 = por %p272, %p273
      %p275 = scmp.ne.s32.totalorder %s263, %s264
      %p276 = scmp.eq.s32.totalorder %s39, 1
      %p277 = por %p275, %p276
      %p279 = scmp.ne.s32.totalorder %s264, %s278
      %p280 = scmp.eq.s32.totalorder %s39, 0
      %p281 = por %p279, %p280
      %s283 = sadd.s32 %s282, 1
      %p286 = scmp.eq.s32.totalorder %s33, 1
      %p287 = scmp.ne.s32.totalorder %s282, %s284
      %p288 = scmp.eq.s32.totalorder %s33, 0
      %p289 = por %p287, %p288
      %p290 = scmp.ne.s32.totalorder %s282, %s284
      %p291 = scmp.eq.s32.totalorder %s38, 1
      %p292 = por %p290, %p291
      %p293 = scmp.ne.s32.totalorder %s284, %s285
      %p294 = scmp.eq.s32.totalorder %s38, 0
      %p295 = por %p293, %p294
      %p296 = scmp.ne.s32.totalorder %s284, %s285
      %p297 = scmp.eq.s32.totalorder %s39, 1
      %p298 = por %p296, %p297
      %p300 = scmp.ne.s32.totalorder %s285, %s299
      %p301 = scmp.eq.s32.totalorder %s39, 0
      %p302 = por %p300, %p301
      %s304 = sadd.s32 %s303, 1
      %p307 = scmp.eq.s32.totalorder %s33, 1
      %p308 = scmp.ne.s32.totalorder %s303, %s305
      %p309 = scmp.eq.s32.totalorder %s33, 0
      %p310 = por %p308, %p309
      %p311 = scmp.ne.s32.totalorder %s303, %s305
      %p312 = scmp.eq.s32.totalorder %s38, 1
      %p313 = por %p311, %p312
      %p314 = scmp.ne.s32.totalorder %s305, %s306
      %p315 = scmp.eq.s32.totalorder %s38, 0
      %p316 = por %p314, %p315
      %p317 = scmp.ne.s32.totalorder %s305, %s306
      %p318 = scmp.eq.s32.totalorder %s39, 1
      %p319 = por %p317, %p318
      %p321 = scmp.ne.s32.totalorder %s306, %s320
      %p322 = scmp.eq.s32.totalorder %s39, 0
      %p323 = por %p321, %p322
      %s325 = sadd.s32 %s324, 1
      %p328 = scmp.eq.s32.totalorder %s33, 1
      %p329 = scmp.ne.s32.totalorder %s324, %s326
      %p330 = scmp.eq.s32.totalorder %s33, 0
      %p331 = por %p329, %p330
      %p332 = scmp.ne.s32.totalorder %s324, %s326
      %p333 = scmp.eq.s32.totalorder %s38, 1
      %p334 = por %p332, %p333
      %p335 = scmp.ne.s32.totalorder %s326, %s327
      %p336 = scmp.eq.s32.totalorder %s38, 0
      %p337 = por %p335, %p336
      %p338 = scmp.ne.s32.totalorder %s326, %s327
      %p339 = scmp.eq.s32.totalorder %s39, 1
      %p340 = por %p338, %p339
      %p342 = scmp.ne.s32.totalorder %s327, %s341
      %p343 = scmp.eq.s32.totalorder %s39, 0
      %p344 = por %p342, %p343
      %s346 = sadd.s32 %s345, 1
      %p349 = scmp.eq.s32.totalorder %s33, 1
      %p350 = scmp.ne.s32.totalorder %s345, %s347
      %p351 = scmp.eq.s32.totalorder %s33, 0
      %p352 = por %p350, %p351
      %p353 = scmp.ne.s32.totalorder %s345, %s347
      %p354 = scmp.eq.s32.totalorder %s38, 1
      %p355 = por %p353, %p354
      %p356 = scmp.ne.s32.totalorder %s347, %s348
      %p357 = scmp.eq.s32.totalorder %s38, 0
      %p358 = por %p356, %p357
      %p359 = scmp.ne.s32.totalorder %s347, %s348
      %p360 = scmp.eq.s32.totalorder %s39, 1
      %p361 = por %p359, %p360
      %p363 = scmp.ne.s32.totalorder %s348, %s362
      %p364 = scmp.eq.s32.totalorder %s39, 0
      %p365 = por %p363, %p364
      %s367 = sadd.s32 %s366, 1
      %p370 = scmp.eq.s32.totalorder %s33, 1
      %p371 = scmp.ne.s32.totalorder %s366, %s368
      %p372 = scmp.eq.s32.totalorder %s33, 0
      %p373 = por %p371, %p372
      %p374 = scmp.ne.s32.totalorder %s366, %s368
      %p375 = scmp.eq.s32.totalorder %s38, 1
      %p376 = por %p374, %p375
      %p377 = scmp.ne.s32.totalorder %s368, %s369
      %p378 = scmp.eq.s32.totalorder %s38, 0
      %p379 = por %p377, %p378
      %p380 = scmp.ne.s32.totalorder %s368, %s369
      %p381 = scmp.eq.s32.totalorder %s39, 1
      %p382 = por %p380, %p381
      %p384 = scmp.ne.s32.totalorder %s369, %s383
      %p385 = scmp.eq.s32.totalorder %s39, 0
      %p386 = por %p384, %p385
      %s388 = sadd.s32 %s387, 1
      %p391 = scmp.eq.s32.totalorder %s33, 1
      %p392 = scmp.ne.s32.totalorder %s387, %s389
      %p393 = scmp.eq.s32.totalorder %s33, 0
      %p394 = por %p392, %p393
      %p395 = scmp.ne.s32.totalorder %s387, %s389
      %p396 = scmp.eq.s32.totalorder %s38, 1
      %p397 = por %p395, %p396
      %p398 = scmp.ne.s32.totalorder %s389, %s390
      %p399 = scmp.eq.s32.totalorder %s38, 0
      %p400 = por %p398, %p399
      %p401 = scmp.ne.s32.totalorder %s389, %s390
      %p402 = scmp.eq.s32.totalorder %s39, 1
      %p403 = por %p401, %p402
      %p405 = scmp.ne.s32.totalorder %s390, %s404
      %p406 = scmp.eq.s32.totalorder %s39, 0
      %p407 = por %p405, %p406
      %s409 = sadd.s32 %s408, 1
      %p412 = scmp.eq.s32.totalorder %s33, 1
      %p413 = scmp.ne.s32.totalorder %s408, %s410
      %p414 = scmp.eq.s32.totalorder %s33, 0
      %p415 = por %p413, %p414
      %p416 = scmp.ne.s32.totalorder %s408, %s410
      %p417 = scmp.eq.s32.totalorder %s38, 1
      %p418 = por %p416, %p417
      %p419 = scmp.ne.s32.totalorder %s410, %s411
      %p420 = scmp.eq.s32.totalorder %s38, 0
      %p421 = por %p419, %p420
      %p422 = scmp.ne.s32.totalorder %s410, %s411
      %p423 = scmp.eq.s32.totalorder %s39, 1
      %p424 = por %p422, %p423
      %p426 = scmp.ne.s32.totalorder %s411, %s425
      %p427 = scmp.eq.s32.totalorder %s39, 0
      %p428 = por %p426, %p427
      %s429 = ssub.s32 %s33, %s40
      %p430 = scmp.eq.s32.totalorder %s429, 0
      %s432 = sadd.s32 %s431, 1
      %s433 = scalar_select %p430, %s431, %s432
      %p436 = pneg %p430
      %p437 = scmp.eq.s32.totalorder %s33, 1
      %p438 = por %p436, %p437
      %p439 = scmp.ne.s32.totalorder %s431, %s434
      %p440 = scmp.eq.s32.totalorder %s33, 0
      %p441 = por %p439, %p440
      %p442 = scmp.ne.s32.totalorder %s431, %s434
      %p443 = scmp.eq.s32.totalorder %s38, 1
      %p444 = por %p442, %p443
      %p445 = scmp.ne.s32.totalorder %s434, %s435
      %p446 = scmp.eq.s32.totalorder %s38, 0
      %p447 = por %p445, %p446
      %p448 = scmp.ne.s32.totalorder %s434, %s435
      %p449 = scmp.eq.s32.totalorder %s39, 1
      %p450 = por %p448, %p449
      %p452 = scmp.ne.s32.totalorder %s435, %s451
      %p453 = scmp.eq.s32.totalorder %s39, 0
      %p454 = por %p452, %p453
      %p455 = scmp.le.s32.totalorder 1, %s33
      %p456 = scmp.lt.s32.totalorder %s33, 3
      %p457 = pnand %p455, %p456
      %p458 = pneg %p457
      // Predicated region
      $region9: #{tpu_custom_call.1} parent=5 // pred_check
        _
      $region10: #{tpu_custom_call.1} parent=5 // pred_check_branch
        %460 = sbr.rel (%p457) target = $region12
      $region11: #{tpu_custom_call.1} parent=5 // pred_region
        %s461 = ssub.s32 %s33, 1
        // Predicated region
        $region13: #{tpu_custom_call.1} parent=11 // pred_check
          %p462 = pneg %p106
        $region14: #{tpu_custom_call.1} parent=11 // pred_check_branch
          %464 = sbr.rel (%p462) target = $region16
        $region15: #{tpu_custom_call.1} parent=11 // pred_region
          _
        $region16: #{tpu_custom_call.1} parent=11 // pred_fallthru
          _
        // Predicated region
        $region17: #{tpu_custom_call.1} parent=11 // pred_check
          %p465 = pneg %p127
        $region18: #{tpu_custom_call.1} parent=11 // pred_check_branch
          %467 = sbr.rel (%p465) target = $region20
        $region19: #{tpu_custom_call.1} parent=11 // pred_region
          %s469 = ssub.s32 16, 16
          %470 = vsyncadd [#allocation6], %s469
          %s472 = sshll.u32 [#allocation5], 4
          %s473 = int_to_ptr.vmem [resolvable:$true] %s472
          %475 = dma.hbm_to_vmem [thread:$0]  %s3, 16, %s473, [#allocation6]
        $region20: #{tpu_custom_call.1} parent=11 // pred_fallthru
          _
        // Predicated region
        $region21: #{tpu_custom_call.1} parent=11 // pred_check
          %p476 = pneg %p148
        $region22: #{tpu_custom_call.1} parent=11 // pred_check_branch
          %478 = sbr.rel (%p476) target = $region24
        $region23: #{tpu_custom_call.1} parent=11 // pred_region
          _
        $region24: #{tpu_custom_call.1} parent=11 // pred_fallthru
          _
        // Predicated region
        $region25: #{tpu_custom_call.1} parent=11 // pred_check
          %p479 = pneg %p169
        $region26: #{tpu_custom_call.1} parent=11 // pred_check_branch
          %481 = sbr.rel (%p479) target = $region28
        $region27: #{tpu_custom_call.1} parent=11 // pred_region
          %s483 = ssub.s32 16, 16
          %484 = vsyncadd [#allocation6], %s483
          %s486 = sshll.u32 [#allocation7], 4
          %s487 = int_to_ptr.vmem [resolvable:$true] %s486
          %489 = dma.hbm_to_vmem [thread:$0]  %s5, 16, %s487, [#allocation6]
        $region28: #{tpu_custom_call.1} parent=11 // pred_fallthru
          _
        // Predicated region
        $region29: #{tpu_custom_call.1} parent=11 // pred_check
          %p490 = pneg %p190
        $region30: #{tpu_custom_call.1} parent=11 // pred_check_branch
          %492 = sbr.rel (%p490) target = $region32
        $region31: #{tpu_custom_call.1} parent=11 // pred_region
          %s494 = ssub.s32 256, 256
          %495 = vsyncadd [#allocation9], %s494
          %s496 = sshll.u32 [#allocation8], 4
          %s497 = int_to_ptr.vmem [resolvable:$true] %s496
          %502 = dma.hbm_to_vmem [thread:$0]  %s6, 256, %s497, [#allocation9], 64, 64, 4
        $region32: #{tpu_custom_call.1} parent=11 // pred_fallthru
          _
        // Predicated region
        $region33: #{tpu_custom_call.1} parent=11 // pred_check
          %p503 = pneg %p211
        $region34: #{tpu_custom_call.1} parent=11 // pred_check_branch
          %505 = sbr.rel (%p503) target = $region36
        $region35: #{tpu_custom_call.1} parent=11 // pred_region
          %s507 = ssub.s32 16, 16
          %508 = vsyncadd [#allocation9], %s507
          %s510 = sshll.u32 [#allocation10], 4
          %s511 = int_to_ptr.vmem [resolvable:$true] %s510
          %513 = dma.hbm_to_vmem [thread:$0]  %s7, 16, %s511, [#allocation9]
        $region36: #{tpu_custom_call.1} parent=11 // pred_fallthru
          _
        // Predicated region
        $region37: #{tpu_custom_call.1} parent=11 // pred_check
          %p514 = pneg %p232
        $region38: #{tpu_custom_call.1} parent=11 // pred_check_branch
          %516 = sbr.rel (%p514) target = $region40
        $region39: #{tpu_custom_call.1} parent=11 // pred_region
          %s518 = ssub.s32 256, 256
          %519 = vsyncadd [#allocation12], %s518
          %s520 = sshll.u32 [#allocation11], 4
          %s521 = int_to_ptr.vmem [resolvable:$true] %s520
          %526 = dma.hbm_to_vmem [thread:$0]  %s8, 256, %s521, [#allocation12], 64, 64, 4
        $region40: #{tpu_custom_call.1} parent=11 // pred_fallthru
          _
        // Predicated region
        $region41: #{tpu_custom_call.1} parent=11 // pred_check
          %p527 = pneg %p253
        $region42: #{tpu_custom_call.1} parent=11 // pred_check_branch
          %529 = sbr.rel (%p527) target = $region44
        $region43: #{tpu_custom_call.1} parent=11 // pred_region
          %s531 = ssub.s32 16, 16
          %532 = vsyncadd [#allocation12], %s531
          %s534 = sshll.u32 [#allocation13], 4
          %s535 = int_to_ptr.vmem [resolvable:$true] %s534
          %537 = dma.hbm_to_vmem [thread:$0]  %s9, 16, %s535, [#allocation12]
        $region44: #{tpu_custom_call.1} parent=11 // pred_fallthru
          _
        // Predicated region
        $region45: #{tpu_custom_call.1} parent=11 // pred_check
          %p538 = pneg %p274
        $region46: #{tpu_custom_call.1} parent=11 // pred_check_branch
          %540 = sbr.rel (%p538) target = $region48
        $region47: #{tpu_custom_call.1} parent=11 // pred_region
          _
        $region48: #{tpu_custom_call.1} parent=11 // pred_fallthru
          _
        // Predicated region
        $region49: #{tpu_custom_call.1} parent=11 // pred_check
          %p541 = pneg %p295
        $region50: #{tpu_custom_call.1} parent=11 // pred_check_branch
          %543 = sbr.rel (%p541) target = $region52
        $region51: #{tpu_custom_call.1} parent=11 // pred_region
          _
        $region52: #{tpu_custom_call.1} parent=11 // pred_fallthru
          _
        // Predicated region
        $region53: #{tpu_custom_call.1} parent=11 // pred_check
          %p544 = pneg %p316
        $region54: #{tpu_custom_call.1} parent=11 // pred_check_branch
          %546 = sbr.rel (%p544) target = $region56
        $region55: #{tpu_custom_call.1} parent=11 // pred_region
          _
        $region56: #{tpu_custom_call.1} parent=11 // pred_fallthru
          _
        // Predicated region
        $region57: #{tpu_custom_call.1} parent=11 // pred_check
          %p547 = pneg %p337
        $region58: #{tpu_custom_call.1} parent=11 // pred_check_branch
          %549 = sbr.rel (%p547) target = $region60
        $region59: #{tpu_custom_call.1} parent=11 // pred_region
          _
        $region60: #{tpu_custom_call.1} parent=11 // pred_fallthru
          _
        // Predicated region
        $region61: #{tpu_custom_call.1} parent=11 // pred_check
          %p550 = pneg %p358
        $region62: #{tpu_custom_call.1} parent=11 // pred_check_branch
          %552 = sbr.rel (%p550) target = $region64
        $region63: #{tpu_custom_call.1} parent=11 // pred_region
          _
        $region64: #{tpu_custom_call.1} parent=11 // pred_fallthru
          _
        // Predicated region
        $region65: #{tpu_custom_call.1} parent=11 // pred_check
          %p553 = pneg %p379
        $region66: #{tpu_custom_call.1} parent=11 // pred_check_branch
          %555 = sbr.rel (%p553) target = $region68
        $region67: #{tpu_custom_call.1} parent=11 // pred_region
          _
        $region68: #{tpu_custom_call.1} parent=11 // pred_fallthru
          _
        // Predicated region
        $region69: #{tpu_custom_call.1} parent=11 // pred_check
          %p556 = pneg %p400
        $region70: #{tpu_custom_call.1} parent=11 // pred_check_branch
          %558 = sbr.rel (%p556) target = $region72
        $region71: #{tpu_custom_call.1} parent=11 // pred_region
          _
        $region72: #{tpu_custom_call.1} parent=11 // pred_fallthru
          _
        // Predicated region
        $region73: #{tpu_custom_call.1} parent=11 // pred_check
          %p559 = pneg %p421
        $region74: #{tpu_custom_call.1} parent=11 // pred_check_branch
          %561 = sbr.rel (%p559) target = $region76
        $region75: #{tpu_custom_call.1} parent=11 // pred_region
          _
        $region76: #{tpu_custom_call.1} parent=11 // pred_fallthru
          _
      $region12: #{tpu_custom_call.1} parent=5 // pred_fallthru
        _
      %p562 = scmp.lt.s32.totalorder %s33, 2
      // Predicated region
      $region77: #{tpu_custom_call.1} parent=5 // pred_check
        %p563 = pneg %p562
      $region78: #{tpu_custom_call.1} parent=5 // pred_check_branch
        %565 = sbr.rel (%p563) target = $region80
      $region79: #{tpu_custom_call.1} parent=5 // pred_region
        // Predicated region
        $region81: #{tpu_custom_call.1} parent=79 // pred_check
          %p566 = pneg %p53
        $region82: #{tpu_custom_call.1} parent=79 // pred_check_branch
          %568 = sbr.rel (%p566) target = $region84
        $region83: #{tpu_custom_call.1} parent=79 // pred_region
          %p569 = scmp.lt.s32.totalorder %s33, 1
          %s570 = scalar_select %p569, %s33, 1
          %s571 = smul.addr %s570, 8
          %s572 = scalar_lea.vmem %s0, %s571
        $region84: #{tpu_custom_call.1} parent=79 // pred_fallthru
          _
        // Predicated region
        $region85: #{tpu_custom_call.1} parent=79 // pred_check
          %p573 = pneg %p79
        $region86: #{tpu_custom_call.1} parent=79 // pred_check_branch
          %575 = sbr.rel (%p573) target = $region88
        $region87: #{tpu_custom_call.1} parent=79 // pred_region
          %s576 = sand.u32 %s69, 1
          %s577 = scalar_lea.sflag [#allocation3], %s576
          %s578 = sand.u32 %s69, 1
          %s579 = scalar_lea.vmem [#allocation2], %s578
          %s581 = ssub.s32 16, 16
          %582 = vsyncadd %s577, %s581
          %s583 = smul.addr %s33, 16
          %s584 = scalar_lea.hbm %s1, %s583
          %s586 = sshll.u32 %s579, 4
          %s587 = int_to_ptr.vmem [resolvable:$true] %s586
          %589 = dma.hbm_to_vmem [thread:$0]  %s584, 16, %s587, %s577
        $region88: #{tpu_custom_call.1} parent=79 // pred_fallthru
          _
      $region80: #{tpu_custom_call.1} parent=5 // pred_fallthru
        _
      %p590 = scmp.le.s32.totalorder 1, %s33
      %p591 = scmp.lt.s32.totalorder %s33, 3
      %p592 = pnand %p590, %p591
      %p593 = pneg %p592
      // Predicated region
      $region89: #{tpu_custom_call.1} parent=5 // pred_check
        _
      $region90: #{tpu_custom_call.1} parent=5 // pred_check_branch
        %595 = sbr.rel (%p592) target = $region92
      $region91: #{tpu_custom_call.1} parent=5 // pred_region
        %s596 = ssub.s32 %s33, 1
        %s597 = sand.u32 %s72, 1
        %s598 = scalar_lea.sflag [#allocation3], %s597
        %s599 = sand.u32 %s72, 1
        %s600 = scalar_lea.vmem [#allocation2], %s599
        // Predicated region
        $region93: #{tpu_custom_call.1} parent=91 // pred_check
          %p601 = pneg %p85
        $region94: #{tpu_custom_call.1} parent=91 // pred_check_branch
          %603 = sbr.rel (%p601) target = $region96
        $region95: #{tpu_custom_call.1} parent=91 // pred_region
          %604 = dma.done %s598, 16
        $region96: #{tpu_custom_call.1} parent=91 // pred_fallthru
          _
        // Predicated region
        $region97: #{tpu_custom_call.1} parent=91 // pred_check
          %p605 = pneg %p127
        $region98: #{tpu_custom_call.1} parent=91 // pred_check_branch
          %607 = sbr.rel (%p605) target = $region100
        $region99: #{tpu_custom_call.1} parent=91 // pred_region
          %608 = dma.done [#allocation6], 16
        $region100: #{tpu_custom_call.1} parent=91 // pred_fallthru
          _
        // Predicated region
        $region101: #{tpu_custom_call.1} parent=91 // pred_check
          %p609 = pneg %p169
        $region102: #{tpu_custom_call.1} parent=91 // pred_check_branch
          %611 = sbr.rel (%p609) target = $region104
        $region103: #{tpu_custom_call.1} parent=91 // pred_region
          %612 = dma.done [#allocation6], 16
        $region104: #{tpu_custom_call.1} parent=91 // pred_fallthru
          _
        // Predicated region
        $region105: #{tpu_custom_call.1} parent=91 // pred_check
          %p613 = pneg %p190
        $region106: #{tpu_custom_call.1} parent=91 // pred_check_branch
          %615 = sbr.rel (%p613) target = $region108
        $region107: #{tpu_custom_call.1} parent=91 // pred_region
          %616 = dma.done [#allocation9], 256
        $region108: #{tpu_custom_call.1} parent=91 // pred_fallthru
          _
        // Predicated region
        $region109: #{tpu_custom_call.1} parent=91 // pred_check
          %p617 = pneg %p211
        $region110: #{tpu_custom_call.1} parent=91 // pred_check_branch
          %619 = sbr.rel (%p617) target = $region112
        $region111: #{tpu_custom_call.1} parent=91 // pred_region
          %620 = dma.done [#allocation9], 16
        $region112: #{tpu_custom_call.1} parent=91 // pred_fallthru
          _
        // Predicated region
        $region113: #{tpu_custom_call.1} parent=91 // pred_check
          %p621 = pneg %p232
        $region114: #{tpu_custom_call.1} parent=91 // pred_check_branch
          %623 = sbr.rel (%p621) target = $region116
        $region115: #{tpu_custom_call.1} parent=91 // pred_region
          %624 = dma.done [#allocation12], 256
        $region116: #{tpu_custom_call.1} parent=91 // pred_fallthru
          _
        // Predicated region
        $region117: #{tpu_custom_call.1} parent=91 // pred_check
          %p625 = pneg %p253
        $region118: #{tpu_custom_call.1} parent=91 // pred_check_branch
          %627 = sbr.rel (%p625) target = $region120
        $region119: #{tpu_custom_call.1} parent=91 // pred_region
          %628 = dma.done [#allocation12], 16
        $region120: #{tpu_custom_call.1} parent=91 // pred_fallthru
          _
        %p629 = scmp.lt.s32.totalorder %s38, 1
        %s630 = scalar_select %p629, %s38, 1
        %s631 = smul.addr %s630, 8
        %s632 = scalar_lea.vmem %s0, %s631
        %p633 = pneg %p59
        %p634 = pneg %p56
        %s635 = sand.u32 %s72, 1
        %s636 = scalar_lea.sflag [#allocation3], %s635
        %s637 = sand.u32 %s72, 1
        %s638 = scalar_lea.vmem [#allocation2], %s637
        %p639 = pneg %p85
        %p640 = pneg %p82
        %p641 = pneg %p106
        %p642 = pneg %p103
        %p643 = pneg %p127
        %p644 = pneg %p124
        %p645 = pneg %p148
        %p646 = pneg %p145
        %p647 = pneg %p169
        %p648 = pneg %p166
        %p649 = pneg %p190
        %p650 = pneg %p187
        %p651 = pneg %p211
        %p652 = pneg %p208
        %p653 = pneg %p232
        %p654 = pneg %p229
        %p655 = pneg %p253
        %p656 = pneg %p250
        %p657 = pneg %p274
        %p658 = pneg %p271
        %p659 = pneg %p295
        %p660 = pneg %p292
        %p661 = pneg %p316
        %p662 = pneg %p313
        %p663 = pneg %p337
        %p664 = pneg %p334
        %p665 = pneg %p358
        %p666 = pneg %p355
        %p667 = pneg %p379
        %p668 = pneg %p376
        %p669 = pneg %p400
        %p670 = pneg %p397
        %p671 = pneg %p421
        %p672 = pneg %p418
        %p673 = pneg %p447
        %p674 = pneg %p444
        %s675 = sand.u32 %s434, 1
        %s676 = scalar_lea.sflag [#allocation4], %s675
        %s677 = sand.u32 %s434, 1
        %s678 = smul.addr %s677, 8
        %s679 = scalar_lea.vmem [#allocation14], %s678
        %p680 = scmp.lt.s32.totalorder %s38, 1
        %s681 = scalar_select %p680, %s38, 1
        %s682 = smul.addr %s681, 8
        %s683 = scalar_lea.vmem %s0, %s682
        %v685 = vld [vmem:[%s683] sm:$0xff]
        %v686 = vpack.c.bf16 %v685, %v685
        %v687 = vld [vmem:[%s600] sm:$0x1]
        %vm688 = vcmp.ne.f32.partialorder %v687, 0.0
        %v689 = vld [vmem:[%s2] sm:$0xf]
        %v690 = vld [vmem:[%s2 + $0x4] sm:$0xf]
        %v691 = vld [vmem:[%s2 + $0x8] sm:$0xf]
        %v692 = vld [vmem:[%s2 + $0xc] sm:$0xf]
        %v693 = vld [vmem:[#allocation5] sm:$0x1]
        %v695 = vlaneseq
        %v696 = vshrl.u32 %v695, 7
        %v697 = vsub.s32 0, %v696
        %v698 = vrot.slane %v693, %v697
        %v704 = vunpack.c.l.b16 %v689
        %v705 = vunpack.c.l.b16 %v690
        %v706 = vunpack.c.l.b16 %v691
        %v707 = vunpack.c.l.b16 %v692
        %v708 = vpack.c.b16 %v705, %v704
        %v709 = vpack.c.b16 %v707, %v706
        %vm712 = vcmask 261120
        %v714 = vsel %vm712, %v686, 0
        %716 = vmatprep.subr.bf16.mxu0 0
        %717 = vmatpush1.bf16.msra.mxu0 0
        %718 = vmatprep.subr.bf16.mxu0 0
        %719 = vmatpush1.bf16.msra.mxu0 0
        %720 = vmatprep.subr.bf16.mxu0 0
        %721 = vmatpush1.bf16.msra.mxu0 0
        %722 = vmatprep.subr.bf16.mxu0 0
        %723 = vmatpush1.bf16.msra.mxu0 0
        %724 = vmatprep.subr.bf16.mxu0 0
        %725 = vmatpush1.bf16.msra.mxu0 0
        %726 = vmatprep.subr.bf16.mxu0 0
        %727 = vmatpush1.bf16.msra.mxu0 0
        %728 = vmatprep.subr.bf16.mxu0 0
        %729 = vmatpush1.bf16.msra.mxu0 %v709
        %730 = vmatprep.subr.bf16.mxu0 0
        %731 = vmatpush1.bf16.msra.mxu0 %v708
        %732 = vmatprep.subr.bf16.mxu0 0
        %733 = vmatpush2.bf16.msra.mxu0 0
        %734 = vmatprep.subr.bf16.mxu0 0
        %735 = vmatpush2.bf16.msra.mxu0 0
        %736 = vmatprep.subr.bf16.mxu0 0
        %737 = vmatpush2.bf16.msra.mxu0 0
        %738 = vmatprep.subr.bf16.mxu0 0
        %739 = vmatpush2.bf16.msra.mxu0 0
        %740 = vmatprep.subr.bf16.mxu0 0
        %741 = vmatpush2.bf16.msra.mxu0 0
        %742 = vmatprep.subr.bf16.mxu0 0
        %743 = vmatpush2.bf16.msra.mxu0 0
        %744 = vmatprep.subr.bf16.mxu0 0
        %745 = vmatpush2.bf16.msra.mxu0 0
        %746 = vmatprep.subr.bf16.mxu0 0
        %747 = vmatpush2.bf16.msra.mxu0 0
        %748 = vmatprep.mubr.bf16.mxu0 0
        %749 = vmatmul.mubr.bf16.gmra.mxu0 %v714
        %v750 = vpop.f32.mrf.mxu0
        %v751 = vadd.f32 %v698, %v750
        %v752 = vpop.f32.mrf.mxu0
        %v753 = vpop.f32.mrf.mxu0
        %v754 = vpop.f32.mrf.mxu0
        %755 = vdwg.mxu0
        %v756 = vld [vmem:[%s4] sm:$0xf]
        %v757 = vld [vmem:[%s4 + $0x4] sm:$0xf]
        %v758 = vld [vmem:[%s4 + $0x8] sm:$0xf]
        %v759 = vld [vmem:[%s4 + $0xc] sm:$0xf]
        %v760 = vld [vmem:[#allocation7] sm:$0x1]
        %v762 = vlaneseq
        %v763 = vshrl.u32 %v762, 7
        %v764 = vsub.s32 0, %v763
        %v765 = vrot.slane %v760, %v764
        %v771 = vunpack.c.l.b16 %v756
        %v772 = vunpack.c.l.b16 %v757
        %v773 = vunpack.c.l.b16 %v758
        %v774 = vunpack.c.l.b16 %v759
        %v775 = vpack.c.b16 %v772, %v771
        %v776 = vpack.c.b16 %v774, %v773
        %779 = vmatprep.subr.bf16.mxu0 0
        %780 = vmatpush1.bf16.msra.mxu0 0
        %781 = vmatprep.subr.bf16.mxu0 0
        %782 = vmatpush1.bf16.msra.mxu0 0
        %783 = vmatprep.subr.bf16.mxu0 0
        %784 = vmatpush1.bf16.msra.mxu0 0
        %785 = vmatprep.subr.bf16.mxu0 0
        %786 = vmatpush1.bf16.msra.mxu0 0
        %787 = vmatprep.subr.bf16.mxu0 0
        %788 = vmatpush1.bf16.msra.mxu0 0
        %789 = vmatprep.subr.bf16.mxu0 0
        %790 = vmatpush1.bf16.msra.mxu0 0
        %791 = vmatprep.subr.bf16.mxu0 0
        %792 = vmatpush1.bf16.msra.mxu0 %v776
        %793 = vmatprep.subr.bf16.mxu0 0
        %794 = vmatpush1.bf16.msra.mxu0 %v775
        %795 = vmatprep.subr.bf16.mxu0 0
        %796 = vmatpush2.bf16.msra.mxu0 0
        %797 = vmatprep.subr.bf16.mxu0 0
        %798 = vmatpush2.bf16.msra.mxu0 0
        %799 = vmatprep.subr.bf16.mxu0 0
        %800 = vmatpush2.bf16.msra.mxu0 0
        %801 = vmatprep.subr.bf16.mxu0 0
        %802 = vmatpush2.bf16.msra.mxu0 0
        %803 = vmatprep.subr.bf16.mxu0 0
        %804 = vmatpush2.bf16.msra.mxu0 0
        %805 = vmatprep.subr.bf16.mxu0 0
        %806 = vmatpush2.bf16.msra.mxu0 0
        %807 = vmatprep.subr.bf16.mxu0 0
        %808 = vmatpush2.bf16.msra.mxu0 0
        %809 = vmatprep.subr.bf16.mxu0 0
        %810 = vmatpush2.bf16.msra.mxu0 0
        %811 = vmatprep.mubr.bf16.mxu0 0
        %812 = vmatmul.mubr.bf16.gmra.mxu0 %v714
        %v813 = vpop.f32.mrf.mxu0
        %v814 = vadd.f32 %v765, %v813
        %v815 = vpop.f32.mrf.mxu0
        %v816 = vpop.f32.mrf.mxu0
        %v817 = vpop.f32.mrf.mxu0
        %818 = vdwg.mxu0
        %v819 = vld [vmem:[#allocation8] sm:$0xf]
        %v820 = vld [vmem:[#allocation8 + $0x4] sm:$0xf]
        %v821 = vld [vmem:[#allocation8 + $0x8] sm:$0xf]
        %v822 = vld [vmem:[#allocation8 + $0xc] sm:$0xf]
        %v823 = vld [vmem:[#allocation10] sm:$0x1]
        %v825 = vlaneseq
        %v826 = vshrl.u32 %v825, 7
        %v827 = vsub.s32 0, %v826
        %v828 = vrot.slane %v823, %v827
        %v834 = vunpack.c.l.b16 %v819
        %v835 = vunpack.c.l.b16 %v820
        %v836 = vunpack.c.l.b16 %v821
        %v837 = vunpack.c.l.b16 %v822
        %v838 = vpack.c.b16 %v835, %v834
        %v839 = vpack.c.b16 %v837, %v836
        %842 = vmatprep.subr.bf16.mxu0 0
        %843 = vmatpush1.bf16.msra.mxu0 0
        %844 = vmatprep.subr.bf16.mxu0 0
        %845 = vmatpush1.bf16.msra.mxu0 0
        %846 = vmatprep.subr.bf16.mxu0 0
        %847 = vmatpush1.bf16.msra.mxu0 0
        %848 = vmatprep.subr.bf16.mxu0 0
        %849 = vmatpush1.bf16.msra.mxu0 0
        %850 = vmatprep.subr.bf16.mxu0 0
        %851 = vmatpush1.bf16.msra.mxu0 0
        %852 = vmatprep.subr.bf16.mxu0 0
        %853 = vmatpush1.bf16.msra.mxu0 0
        %854 = vmatprep.subr.bf16.mxu0 0
        %855 = vmatpush1.bf16.msra.mxu0 %v839
        %856 = vmatprep.subr.bf16.mxu0 0
        %857 = vmatpush1.bf16.msra.mxu0 %v838
        %858 = vmatprep.subr.bf16.mxu0 0
        %859 = vmatpush2.bf16.msra.mxu0 0
        %860 = vmatprep.subr.bf16.mxu0 0
        %861 = vmatpush2.bf16.msra.mxu0 0
        %862 = vmatprep.subr.bf16.mxu0 0
        %863 = vmatpush2.bf16.msra.mxu0 0
        %864 = vmatprep.subr.bf16.mxu0 0
        %865 = vmatpush2.bf16.msra.mxu0 0
        %866 = vmatprep.subr.bf16.mxu0 0
        %867 = vmatpush2.bf16.msra.mxu0 0
        %868 = vmatprep.subr.bf16.mxu0 0
        %869 = vmatpush2.bf16.msra.mxu0 0
        %870 = vmatprep.subr.bf16.mxu0 0
        %871 = vmatpush2.bf16.msra.mxu0 0
        %872 = vmatprep.subr.bf16.mxu0 0
        %873 = vmatpush2.bf16.msra.mxu0 0
        %874 = vmatprep.mubr.bf16.mxu0 0
        %875 = vmatmul.mubr.bf16.gmra.mxu0 %v714
        %v876 = vpop.f32.mrf.mxu0
        %v877 = vadd.f32 %v828, %v876
        %v878 = vpop.f32.mrf.mxu0
        %v879 = vpop.f32.mrf.mxu0
        %v880 = vpop.f32.mrf.mxu0
        %881 = vdwg.mxu0
        %v882 = vpack.c.bf16 %v751, %v751
        %v883 = vpack.c.bf16 %v814, %v814
        %885 = vrot.lane.b32.xlu0 %v883, 120
        %v886 = vpop.permute.xlu0 %885
        %888 = vrot.lane.b32.xlu0 %v883, 112
        %v889 = vpop.permute.xlu0 %888
        %891 = vrot.lane.b32.xlu0 %v883, 104
        %v892 = vpop.permute.xlu0 %891
        %v894 = vpack.c.bf16 %v877, %v877
        %896 = vrot.lane.b32.xlu0 %v894, 120
        %v897 = vpop.permute.xlu0 %896
        %899 = vrot.lane.b32.xlu0 %v894, 112
        %v900 = vpop.permute.xlu0 %899
        %902 = vrot.lane.b32.xlu0 %v894, 104
        %v903 = vpop.permute.xlu0 %902
        %906 = vrot.lane.b32.xlu0 %v882, 120
        %v907 = vpop.permute.xlu0 %906
        %908 = vrot.lane.b32.xlu0 %v882, 112
        %v909 = vpop.permute.xlu0 %908
        %910 = vrot.lane.b32.xlu0 %v882, 104
        %v911 = vpop.permute.xlu0 %910
        %912 = vxpose.xlu0.c.b16.start [1/8] %v883, 128
        %913 = vxpose.xlu0.c.b16.cont [2/8] 0, 128
        %914 = vxpose.xlu0.c.b16.cont [3/8] 0, 128
        %915 = vxpose.xlu0.c.b16.cont [4/8] 0, 128
        %916 = vxpose.xlu0.c.b16.cont [5/8] 0, 128
        %917 = vxpose.xlu0.c.b16.cont [6/8] 0, 128
        %918 = vxpose.xlu0.c.b16.cont [7/8] 0, 128
        %919 = vxpose.xlu0.c.b16.end [8/8] 0, 128
        %v920 = vpop.trf.xlu0
        %v921 = vpop.trf.xlu0
        %v922 = vpop.trf.xlu0
        %v923 = vpop.trf.xlu0
        %v924 = vpop.trf.xlu0
        %v925 = vpop.trf.xlu0
        %v926 = vpop.trf.xlu0
        %v927 = vpop.trf.xlu0
        %928 = vxpose.xlu0.c.b16.start [1/8] %v886, 128
        %929 = vxpose.xlu0.c.b16.cont [2/8] 0, 128
        %930 = vxpose.xlu0.c.b16.cont [3/8] 0, 128
        %931 = vxpose.xlu0.c.b16.cont [4/8] 0, 128
        %932 = vxpose.xlu0.c.b16.cont [5/8] 0, 128
        %933 = vxpose.xlu0.c.b16.cont [6/8] 0, 128
        %934 = vxpose.xlu0.c.b16.cont [7/8] 0, 128
        %935 = vxpose.xlu0.c.b16.end [8/8] 0, 128
        %v936 = vpop.trf.xlu0
        %v937 = vpop.trf.xlu0
        %v938 = vpop.trf.xlu0
        %v939 = vpop.trf.xlu0
        %v940 = vpop.trf.xlu0
        %v941 = vpop.trf.xlu0
        %v942 = vpop.trf.xlu0
        %v943 = vpop.trf.xlu0
        %944 = vxpose.xlu0.c.b16.start [1/8] %v889, 128
        %945 = vxpose.xlu0.c.b16.cont [2/8] 0, 128
        %946 = vxpose.xlu0.c.b16.cont [3/8] 0, 128
        %947 = vxpose.xlu0.c.b16.cont [4/8] 0, 128
        %948 = vxpose.xlu0.c.b16.cont [5/8] 0, 128
        %949 = vxpose.xlu0.c.b16.cont [6/8] 0, 128
        %950 = vxpose.xlu0.c.b16.cont [7/8] 0, 128
        %951 = vxpose.xlu0.c.b16.end [8/8] 0, 128
        %v952 = vpop.trf.xlu0
        %v953 = vpop.trf.xlu0
        %v954 = vpop.trf.xlu0
        %v955 = vpop.trf.xlu0
        %v956 = vpop.trf.xlu0
        %v957 = vpop.trf.xlu0
        %v958 = vpop.trf.xlu0
        %v959 = vpop.trf.xlu0
        %960 = vxpose.xlu0.c.b16.start [1/8] %v892, 128
        %961 = vxpose.xlu0.c.b16.cont [2/8] 0, 128
        %962 = vxpose.xlu0.c.b16.cont [3/8] 0, 128
        %963 = vxpose.xlu0.c.b16.cont [4/8] 0, 128
        %964 = vxpose.xlu0.c.b16.cont [5/8] 0, 128
        %965 = vxpose.xlu0.c.b16.cont [6/8] 0, 128
        %966 = vxpose.xlu0.c.b16.cont [7/8] 0, 128
        %967 = vxpose.xlu0.c.b16.end [8/8] 0, 128
        %v968 = vpop.trf.xlu0
        %v969 = vpop.trf.xlu0
        %v970 = vpop.trf.xlu0
        %v971 = vpop.trf.xlu0
        %v972 = vpop.trf.xlu0
        %v973 = vpop.trf.xlu0
        %v974 = vpop.trf.xlu0
        %v975 = vpop.trf.xlu0
        %vm976 = vcmask 64512
        %v978 = vsel %vm976, %v882, 0
        %vm980 = vcmask 1043456
        %v982 = vsel %vm980, %v920, 0
        %984 = vmatprep.subr.bf16.mxu0 0
        %985 = vmatpush1.bf16.msra.mxu0 0
        %986 = vmatprep.subr.bf16.mxu0 0
        %987 = vmatpush1.bf16.msra.mxu0 0
        %988 = vmatprep.subr.bf16.mxu0 0
        %989 = vmatpush1.bf16.msra.mxu0 0
        %990 = vmatprep.subr.bf16.mxu0 0
        %991 = vmatpush1.bf16.msra.mxu0 0
        %992 = vmatprep.subr.bf16.mxu0 0
        %993 = vmatpush1.bf16.msra.mxu0 0
        %994 = vmatprep.subr.bf16.mxu0 0
        %995 = vmatpush1.bf16.msra.mxu0 0
        %996 = vmatprep.subr.bf16.mxu0 0
        %997 = vmatpush1.bf16.msra.mxu0 0
        %998 = vmatprep.subr.bf16.mxu0 0
        %999 = vmatpush1.bf16.msra.mxu0 %v982
        %1000 = vmatprep.subr.bf16.mxu0 0
        %1001 = vmatpush2.bf16.msra.mxu0 0
        %1002 = vmatprep.subr.bf16.mxu0 0
        %1003 = vmatpush2.bf16.msra.mxu0 0
        %1004 = vmatprep.subr.bf16.mxu0 0
        %1005 = vmatpush2.bf16.msra.mxu0 0
        %1006 = vmatprep.subr.bf16.mxu0 0
        %1007 = vmatpush2.bf16.msra.mxu0 0
        %1008 = vmatprep.subr.bf16.mxu0 0
        %1009 = vmatpush2.bf16.msra.mxu0 0
        %1010 = vmatprep.subr.bf16.mxu0 0
        %1011 = vmatpush2.bf16.msra.mxu0 0
        %1012 = vmatprep.subr.bf16.mxu0 0
        %1013 = vmatpush2.bf16.msra.mxu0 0
        %1014 = vmatprep.subr.bf16.mxu0 0
        %1015 = vmatpush2.bf16.msra.mxu0 0
        %1016 = vmatprep.mubr.bf16.mxu0 0
        %1017 = vmatmul.mubr.bf16.gmra.mxu0 %v978
        %v1018 = vpop.f32.mrf.mxu0
        %v1019 = vadd.f32 0.0, %v1018
        %v1020 = vpop.f32.mrf.mxu0
        %v1021 = vpop.f32.mrf.mxu0
        %v1022 = vpop.f32.mrf.mxu0
        %1023 = vdwg.mxu0
        %v1025 = vsel %vm976, %v907, 0
        %v1028 = vsel %vm980, %v936, 0
        %1030 = vmatprep.subr.bf16.mxu0 0
        %1031 = vmatpush1.bf16.msra.mxu0 0
        %1032 = vmatprep.subr.bf16.mxu0 0
        %1033 = vmatpush1.bf16.msra.mxu0 0
        %1034 = vmatprep.subr.bf16.mxu0 0
        %1035 = vmatpush1.bf16.msra.mxu0 0
        %1036 = vmatprep.subr.bf16.mxu0 0
        %1037 = vmatpush1.bf16.msra.mxu0 0
        %1038 = vmatprep.subr.bf16.mxu0 0
        %1039 = vmatpush1.bf16.msra.mxu0 0
        %1040 = vmatprep.subr.bf16.mxu0 0
        %1041 = vmatpush1.bf16.msra.mxu0 0
        %1042 = vmatprep.subr.bf16.mxu0 0
        %1043 = vmatpush1.bf16.msra.mxu0 0
        %1044 = vmatprep.subr.bf16.mxu0 0
        %1045 = vmatpush1.bf16.msra.mxu0 %v1028
        %1046 = vmatprep.subr.bf16.mxu0 0
        %1047 = vmatpush2.bf16.msra.mxu0 0
        %1048 = vmatprep.subr.bf16.mxu0 0
        %1049 = vmatpush2.bf16.msra.mxu0 0
        %1050 = vmatprep.subr.bf16.mxu0 0
        %1051 = vmatpush2.bf16.msra.mxu0 0
        %1052 = vmatprep.subr.bf16.mxu0 0
        %1053 = vmatpush2.bf16.msra.mxu0 0
        %1054 = vmatprep.subr.bf16.mxu0 0
        %1055 = vmatpush2.bf16.msra.mxu0 0
        %1056 = vmatprep.subr.bf16.mxu0 0
        %1057 = vmatpush2.bf16.msra.mxu0 0
        %1058 = vmatprep.subr.bf16.mxu0 0
        %1059 = vmatpush2.bf16.msra.mxu0 0
        %1060 = vmatprep.subr.bf16.mxu0 0
        %1061 = vmatpush2.bf16.msra.mxu0 0
        %1062 = vmatprep.mubr.bf16.mxu0 0
        %1063 = vmatmul.mubr.bf16.gmra.mxu0 %v1025
        %v1064 = vpop.f32.mrf.mxu0
        %v1065 = vadd.f32 0.0, %v1064
        %v1066 = vpop.f32.mrf.mxu0
        %v1067 = vpop.f32.mrf.mxu0
        %v1068 = vpop.f32.mrf.mxu0
        %1069 = vdwg.mxu0
        %v1071 = vsel %vm976, %v909, 0
        %v1074 = vsel %vm980, %v952, 0
        %1076 = vmatprep.subr.bf16.mxu0 0
        %1077 = vmatpush1.bf16.msra.mxu0 0
        %1078 = vmatprep.subr.bf16.mxu0 0
        %1079 = vmatpush1.bf16.msra.mxu0 0
        %1080 = vmatprep.subr.bf16.mxu0 0
        %1081 = vmatpush1.bf16.msra.mxu0 0
        %1082 = vmatprep.subr.bf16.mxu0 0
        %1083 = vmatpush1.bf16.msra.mxu0 0
        %1084 = vmatprep.subr.bf16.mxu0 0
        %1085 = vmatpush1.bf16.msra.mxu0 0
        %1086 = vmatprep.subr.bf16.mxu0 0
        %1087 = vmatpush1.bf16.msra.mxu0 0
        %1088 = vmatprep.subr.bf16.mxu0 0
        %1089 = vmatpush1.bf16.msra.mxu0 0
        %1090 = vmatprep.subr.bf16.mxu0 0
        %1091 = vmatpush1.bf16.msra.mxu0 %v1074
        %1092 = vmatprep.subr.bf16.mxu0 0
        %1093 = vmatpush2.bf16.msra.mxu0 0
        %1094 = vmatprep.subr.bf16.mxu0 0
        %1095 = vmatpush2.bf16.msra.mxu0 0
        %1096 = vmatprep.subr.bf16.mxu0 0
        %1097 = vmatpush2.bf16.msra.mxu0 0
        %1098 = vmatprep.subr.bf16.mxu0 0
        %1099 = vmatpush2.bf16.msra.mxu0 0
        %1100 = vmatprep.subr.bf16.mxu0 0
        %1101 = vmatpush2.bf16.msra.mxu0 0
        %1102 = vmatprep.subr.bf16.mxu0 0
        %1103 = vmatpush2.bf16.msra.mxu0 0
        %1104 = vmatprep.subr.bf16.mxu0 0
        %1105 = vmatpush2.bf16.msra.mxu0 0
        %1106 = vmatprep.subr.bf16.mxu0 0
        %1107 = vmatpush2.bf16.msra.mxu0 0
        %1108 = vmatprep.mubr.bf16.mxu0 0
        %1109 = vmatmul.mubr.bf16.gmra.mxu0 %v1071
        %v1110 = vpop.f32.mrf.mxu0
        %v1111 = vadd.f32 0.0, %v1110
        %v1112 = vpop.f32.mrf.mxu0
        %v1113 = vpop.f32.mrf.mxu0
        %v1114 = vpop.f32.mrf.mxu0
        %1115 = vdwg.mxu0
        %v1117 = vsel %vm976, %v911, 0
        %v1120 = vsel %vm980, %v968, 0
        %1122 = vmatprep.subr.bf16.mxu0 0
        %1123 = vmatpush1.bf16.msra.mxu0 0
        %1124 = vmatprep.subr.bf16.mxu0 0
        %1125 = vmatpush1.bf16.msra.mxu0 0
        %1126 = vmatprep.subr.bf16.mxu0 0
        %1127 = vmatpush1.bf16.msra.mxu0 0
        %1128 = vmatprep.subr.bf16.mxu0 0
        %1129 = vmatpush1.bf16.msra.mxu0 0
        %1130 = vmatprep.subr.bf16.mxu0 0
        %1131 = vmatpush1.bf16.msra.mxu0 0
        %1132 = vmatprep.subr.bf16.mxu0 0
        %1133 = vmatpush1.bf16.msra.mxu0 0
        %1134 = vmatprep.subr.bf16.mxu0 0
        %1135 = vmatpush1.bf16.msra.mxu0 0
        %1136 = vmatprep.subr.bf16.mxu0 0
        %1137 = vmatpush1.bf16.msra.mxu0 %v1120
        %1138 = vmatprep.subr.bf16.mxu0 0
        %1139 = vmatpush2.bf16.msra.mxu0 0
        %1140 = vmatprep.subr.bf16.mxu0 0
        %1141 = vmatpush2.bf16.msra.mxu0 0
        %1142 = vmatprep.subr.bf16.mxu0 0
        %1143 = vmatpush2.bf16.msra.mxu0 0
        %1144 = vmatprep.subr.bf16.mxu0 0
        %1145 = vmatpush2.bf16.msra.mxu0 0
        %1146 = vmatprep.subr.bf16.mxu0 0
        %1147 = vmatpush2.bf16.msra.mxu0 0
        %1148 = vmatprep.subr.bf16.mxu0 0
        %1149 = vmatpush2.bf16.msra.mxu0 0
        %1150 = vmatprep.subr.bf16.mxu0 0
        %1151 = vmatpush2.bf16.msra.mxu0 0
        %1152 = vmatprep.subr.bf16.mxu0 0
        %1153 = vmatpush2.bf16.msra.mxu0 0
        %1154 = vmatprep.mubr.bf16.mxu0 0
        %1155 = vmatmul.mubr.bf16.gmra.mxu0 %v1117
        %v1156 = vpop.f32.mrf.mxu0
        %v1157 = vadd.f32 0.0, %v1156
        %v1158 = vpop.f32.mrf.mxu0
        %v1159 = vpop.f32.mrf.mxu0
        %v1160 = vpop.f32.mrf.mxu0
        %1161 = vdwg.mxu0
        %v1162 = vsel %vm688, 1, 0
        %v1163 = vlaneseq
        %v1164 = vshrl.u32 %v1163, 7
        %v1165 = vsub.s32 0, %v1164
        %v1166 = vrot.slane %v1162, %v1165
        %vm1167 = vcmp.eq.s32.totalorder %v1166, 1
        %v1168 = vsel %vm1167, %v1019, -1e+09
        %v1169 = vsel %vm1167, %v1065, -1e+09
        %v1170 = vsel %vm1167, %v1111, -1e+09
        %v1171 = vsel %vm1167, %v1157, -1e+09
        %v1172 = vsel %vm976, %v1168, -inf
        %1173 = vmax.xlane.f32.xlu0 %v1172
        %v1174 = vpop.xlane.xlu0 %1173
        %v1175 = vsel %vm976, %v1169, -inf
        %1176 = vmax.xlane.f32.xlu0 %v1175
        %v1177 = vpop.xlane.xlu0 %1176
        %v1178 = vsel %vm976, %v1170, -inf
        %1179 = vmax.xlane.f32.xlu0 %v1178
        %v1180 = vpop.xlane.xlu0 %1179
        %v1181 = vsel %vm976, %v1171, -inf
        %1182 = vmax.xlane.f32.xlu0 %v1181
        %v1183 = vpop.xlane.xlu0 %1182
        %v1184 = vsub.f32 %v1168, %v1174
        %v1185 = vsub.f32 %v1169, %v1177
        %v1186 = vsub.f32 %v1170, %v1180
        %v1187 = vsub.f32 %v1171, %v1183
        %v1188 = vmul.f32 %v1184, 1.442695
        %v1189 = vpow.pop %v1188
        %v1190 = vmul.f32 %v1185, 1.442695
        %v1191 = vpow.pop %v1190
        %v1192 = vmul.f32 %v1186, 1.442695
        %v1193 = vpow.pop %v1192
        %v1194 = vmul.f32 %v1187, 1.442695
        %v1195 = vpow.pop %v1194
        %v1196 = vsel %vm976, %v1189, 0.0
        %1197 = vadd.xlane.f32.xlu0 %v1196
        %v1198 = vpop.xlane.xlu0 %1197
        %v1199 = vsel %vm976, %v1191, 0.0
        %1200 = vadd.xlane.f32.xlu0 %v1199
        %v1201 = vpop.xlane.xlu0 %1200
        %v1202 = vsel %vm976, %v1193, 0.0
        %1203 = vadd.xlane.f32.xlu0 %v1202
        %v1204 = vpop.xlane.xlu0 %1203
        %v1205 = vsel %vm976, %v1195, 0.0
        %1206 = vadd.xlane.f32.xlu0 %v1205
        %v1207 = vpop.xlane.xlu0 %1206
        %v1208 = vrcp.pop %v1198
        %v1209 = vrcp.pop %v1201
        %v1210 = vrcp.pop %v1204
        %v1211 = vrcp.pop %v1207
        %v1212 = vmul.f32 %v1189, %v1208
        %v1213 = vmul.f32 %v1191, %v1209
        %v1214 = vmul.f32 %v1193, %v1210
        %v1215 = vmul.f32 %v1195, %v1211
        %v1216 = vpack.c.bf16 %v1212, %v1212
        %v1217 = vpack.c.bf16 %v1213, %v1213
        %v1218 = vpack.c.bf16 %v1214, %v1214
        %v1219 = vpack.c.bf16 %v1215, %v1215
        %1220 = vxpose.xlu0.c.b16.start [1/8] %v894, 128
        %1221 = vxpose.xlu0.c.b16.cont [2/8] 0, 128
        %1222 = vxpose.xlu0.c.b16.cont [3/8] 0, 128
        %1223 = vxpose.xlu0.c.b16.cont [4/8] 0, 128
        %1224 = vxpose.xlu0.c.b16.cont [5/8] 0, 128
        %1225 = vxpose.xlu0.c.b16.cont [6/8] 0, 128
        %1226 = vxpose.xlu0.c.b16.cont [7/8] 0, 128
        %1227 = vxpose.xlu0.c.b16.end [8/8] 0, 128
        %v1228 = vpop.trf.xlu0
        %v1229 = vpop.trf.xlu0
        %v1230 = vpop.trf.xlu0
        %v1231 = vpop.trf.xlu0
        %v1232 = vpop.trf.xlu0
        %v1233 = vpop.trf.xlu0
        %v1234 = vpop.trf.xlu0
        %v1235 = vpop.trf.xlu0
        %1236 = vxpose.xlu0.c.b16.start [1/8] %v897, 128
        %1237 = vxpose.xlu0.c.b16.cont [2/8] 0, 128
        %1238 = vxpose.xlu0.c.b16.cont [3/8] 0, 128
        %1239 = vxpose.xlu0.c.b16.cont [4/8] 0, 128
        %1240 = vxpose.xlu0.c.b16.cont [5/8] 0, 128
        %1241 = vxpose.xlu0.c.b16.cont [6/8] 0, 128
        %1242 = vxpose.xlu0.c.b16.cont [7/8] 0, 128
        %1243 = vxpose.xlu0.c.b16.end [8/8] 0, 128
        %v1244 = vpop.trf.xlu0
        %v1245 = vpop.trf.xlu0
        %v1246 = vpop.trf.xlu0
        %v1247 = vpop.trf.xlu0
        %v1248 = vpop.trf.xlu0
        %v1249 = vpop.trf.xlu0
        %v1250 = vpop.trf.xlu0
        %v1251 = vpop.trf.xlu0
        %1252 = vxpose.xlu0.c.b16.start [1/8] %v900, 128
        %1253 = vxpose.xlu0.c.b16.cont [2/8] 0, 128
        %1254 = vxpose.xlu0.c.b16.cont [3/8] 0, 128
        %1255 = vxpose.xlu0.c.b16.cont [4/8] 0, 128
        %1256 = vxpose.xlu0.c.b16.cont [5/8] 0, 128
        %1257 = vxpose.xlu0.c.b16.cont [6/8] 0, 128
        %1258 = vxpose.xlu0.c.b16.cont [7/8] 0, 128
        %1259 = vxpose.xlu0.c.b16.end [8/8] 0, 128
        %v1260 = vpop.trf.xlu0
        %v1261 = vpop.trf.xlu0
        %v1262 = vpop.trf.xlu0
        %v1263 = vpop.trf.xlu0
        %v1264 = vpop.trf.xlu0
        %v1265 = vpop.trf.xlu0
        %v1266 = vpop.trf.xlu0
        %v1267 = vpop.trf.xlu0
        %1268 = vxpose.xlu0.c.b16.start [1/8] %v903, 128
        %1269 = vxpose.xlu0.c.b16.cont [2/8] 0, 128
        %1270 = vxpose.xlu0.c.b16.cont [3/8] 0, 128
        %1271 = vxpose.xlu0.c.b16.cont [4/8] 0, 128
        %1272 = vxpose.xlu0.c.b16.cont [5/8] 0, 128
        %1273 = vxpose.xlu0.c.b16.cont [6/8] 0, 128
        %1274 = vxpose.xlu0.c.b16.cont [7/8] 0, 128
        %1275 = vxpose.xlu0.c.b16.end [8/8] 0, 128
        %v1276 = vpop.trf.xlu0
        %v1277 = vpop.trf.xlu0
        %v1278 = vpop.trf.xlu0
        %v1279 = vpop.trf.xlu0
        %v1280 = vpop.trf.xlu0
        %v1281 = vpop.trf.xlu0
        %v1282 = vpop.trf.xlu0
        %v1283 = vpop.trf.xlu0
        %v1285 = vsel %vm976, %v1228, 0
        %v1288 = vsel %vm976, %v1216, 0
        %1290 = vmatprep.subr.bf16.mxu0 0
        %1291 = vmatpush1.bf16.xpose.msra.mxu0 0
        %1292 = vmatprep.subr.bf16.mxu0 0
        %1293 = vmatpush1.bf16.xpose.msra.mxu0 0
        %1294 = vmatprep.subr.bf16.mxu0 0
        %1295 = vmatpush1.bf16.xpose.msra.mxu0 0
        %1296 = vmatprep.subr.bf16.mxu0 0
        %1297 = vmatpush1.bf16.xpose.msra.mxu0 0
        %1298 = vmatprep.subr.bf16.mxu0 0
        %1299 = vmatpush1.bf16.xpose.msra.mxu0 0
        %1300 = vmatprep.subr.bf16.mxu0 0
        %1301 = vmatpush1.bf16.xpose.msra.mxu0 0
        %1302 = vmatprep.subr.bf16.mxu0 0
        %1303 = vmatpush1.bf16.xpose.msra.mxu0 0
        %1304 = vmatprep.subr.bf16.mxu0 0
        %1305 = vmatpush1.bf16.xpose.msra.mxu0 %v1288
        %1306 = vmatprep.subr.bf16.mxu0 0
        %1307 = vmatpush2.bf16.xpose.msra.mxu0 0
        %1308 = vmatprep.subr.bf16.mxu0 0
        %1309 = vmatpush2.bf16.xpose.msra.mxu0 0
        %1310 = vmatprep.subr.bf16.mxu0 0
        %1311 = vmatpush2.bf16.xpose.msra.mxu0 0
        %1312 = vmatprep.subr.bf16.mxu0 0
        %1313 = vmatpush2.bf16.xpose.msra.mxu0 0
        %1314 = vmatprep.subr.bf16.mxu0 0
        %1315 = vmatpush2.bf16.xpose.msra.mxu0 0
        %1316 = vmatprep.subr.bf16.mxu0 0
        %1317 = vmatpush2.bf16.xpose.msra.mxu0 0
        %1318 = vmatprep.subr.bf16.mxu0 0
        %1319 = vmatpush2.bf16.xpose.msra.mxu0 0
        %1320 = vmatprep.subr.bf16.mxu0 0
        %1321 = vmatpush2.bf16.xpose.msra.mxu0 0
        %1322 = vmatprep.mubr.bf16.mxu0 0
        %1323 = vmatmul.mubr.bf16.gmra.mxu0 %v1285
        %v1324 = vpop.f32.mrf.mxu0
        %v1325 = vadd.f32 0.0, %v1324
        %v1326 = vpop.f32.mrf.mxu0
        %v1327 = vpop.f32.mrf.mxu0
        %v1328 = vpop.f32.mrf.mxu0
        %1329 = vdwg.mxu0
        %v1331 = vsel %vm976, %v1244, 0
        %v1334 = vsel %vm976, %v1217, 0
        %1336 = vmatprep.subr.bf16.mxu0 0
        %1337 = vmatpush1.bf16.xpose.msra.mxu0 0
        %1338 = vmatprep.subr.bf16.mxu0 0
        %1339 = vmatpush1.bf16.xpose.msra.mxu0 0
        %1340 = vmatprep.subr.bf16.mxu0 0
        %1341 = vmatpush1.bf16.xpose.msra.mxu0 0
        %1342 = vmatprep.subr.bf16.mxu0 0
        %1343 = vmatpush1.bf16.xpose.msra.mxu0 0
        %1344 = vmatprep.subr.bf16.mxu0 0
        %1345 = vmatpush1.bf16.xpose.msra.mxu0 0
        %1346 = vmatprep.subr.bf16.mxu0 0
        %1347 = vmatpush1.bf16.xpose.msra.mxu0 0
        %1348 = vmatprep.subr.bf16.mxu0 0
        %1349 = vmatpush1.bf16.xpose.msra.mxu0 0
        %1350 = vmatprep.subr.bf16.mxu0 0
        %1351 = vmatpush1.bf16.xpose.msra.mxu0 %v1334
        %1352 = vmatprep.subr.bf16.mxu0 0
        %1353 = vmatpush2.bf16.xpose.msra.mxu0 0
        %1354 = vmatprep.subr.bf16.mxu0 0
        %1355 = vmatpush2.bf16.xpose.msra.mxu0 0
        %1356 = vmatprep.subr.bf16.mxu0 0
        %1357 = vmatpush2.bf16.xpose.msra.mxu0 0
        %1358 = vmatprep.subr.bf16.mxu0 0
        %1359 = vmatpush2.bf16.xpose.msra.mxu0 0
        %1360 = vmatprep.subr.bf16.mxu0 0
        %1361 = vmatpush2.bf16.xpose.msra.mxu0 0
        %1362 = vmatprep.subr.bf16.mxu0 0
        %1363 = vmatpush2.bf16.xpose.msra.mxu0 0
        %1364 = vmatprep.subr.bf16.mxu0 0
        %1365 = vmatpush2.bf16.xpose.msra.mxu0 0
        %1366 = vmatprep.subr.bf16.mxu0 0
        %1367 = vmatpush2.bf16.xpose.msra.mxu0 0
        %1368 = vmatprep.mubr.bf16.mxu0 0
        %1369 = vmatmul.mubr.bf16.gmra.mxu0 %v1331
        %v1370 = vpop.f32.mrf.mxu0
        %v1371 = vadd.f32 0.0, %v1370
        %v1372 = vpop.f32.mrf.mxu0
        %v1373 = vpop.f32.mrf.mxu0
        %v1374 = vpop.f32.mrf.mxu0
        %1375 = vdwg.mxu0
        %v1377 = vsel %vm976, %v1260, 0
        %v1380 = vsel %vm976, %v1218, 0
        %1382 = vmatprep.subr.bf16.mxu0 0
        %1383 = vmatpush1.bf16.xpose.msra.mxu0 0
        %1384 = vmatprep.subr.bf16.mxu0 0
        %1385 = vmatpush1.bf16.xpose.msra.mxu0 0
        %1386 = vmatprep.subr.bf16.mxu0 0
        %1387 = vmatpush1.bf16.xpose.msra.mxu0 0
        %1388 = vmatprep.subr.bf16.mxu0 0
        %1389 = vmatpush1.bf16.xpose.msra.mxu0 0
        %1390 = vmatprep.subr.bf16.mxu0 0
        %1391 = vmatpush1.bf16.xpose.msra.mxu0 0
        %1392 = vmatprep.subr.bf16.mxu0 0
        %1393 = vmatpush1.bf16.xpose.msra.mxu0 0
        %1394 = vmatprep.subr.bf16.mxu0 0
        %1395 = vmatpush1.bf16.xpose.msra.mxu0 0
        %1396 = vmatprep.subr.bf16.mxu0 0
        %1397 = vmatpush1.bf16.xpose.msra.mxu0 %v1380
        %1398 = vmatprep.subr.bf16.mxu0 0
        %1399 = vmatpush2.bf16.xpose.msra.mxu0 0
        %1400 = vmatprep.subr.bf16.mxu0 0
        %1401 = vmatpush2.bf16.xpose.msra.mxu0 0
        %1402 = vmatprep.subr.bf16.mxu0 0
        %1403 = vmatpush2.bf16.xpose.msra.mxu0 0
        %1404 = vmatprep.subr.bf16.mxu0 0
        %1405 = vmatpush2.bf16.xpose.msra.mxu0 0
        %1406 = vmatprep.subr.bf16.mxu0 0
        %1407 = vmatpush2.bf16.xpose.msra.mxu0 0
        %1408 = vmatprep.subr.bf16.mxu0 0
        %1409 = vmatpush2.bf16.xpose.msra.mxu0 0
        %1410 = vmatprep.subr.bf16.mxu0 0
        %1411 = vmatpush2.bf16.xpose.msra.mxu0 0
        %1412 = vmatprep.subr.bf16.mxu0 0
        %1413 = vmatpush2.bf16.xpose.msra.mxu0 0
        %1414 = vmatprep.mubr.bf16.mxu0 0
        %1415 = vmatmul.mubr.bf16.gmra.mxu0 %v1377
        %v1416 = vpop.f32.mrf.mxu0
        %v1417 = vadd.f32 0.0, %v1416
        %v1418 = vpop.f32.mrf.mxu0
        %v1419 = vpop.f32.mrf.mxu0
        %v1420 = vpop.f32.mrf.mxu0
        %1421 = vdwg.mxu0
        %v1423 = vsel %vm976, %v1276, 0
        %v1426 = vsel %vm976, %v1219, 0
        %1428 = vmatprep.subr.bf16.mxu0 0
        %1429 = vmatpush1.bf16.xpose.msra.mxu0 0
        %1430 = vmatprep.subr.bf16.mxu0 0
        %1431 = vmatpush1.bf16.xpose.msra.mxu0 0
        %1432 = vmatprep.subr.bf16.mxu0 0
        %1433 = vmatpush1.bf16.xpose.msra.mxu0 0
        %1434 = vmatprep.subr.bf16.mxu0 0
        %1435 = vmatpush1.bf16.xpose.msra.mxu0 0
        %1436 = vmatprep.subr.bf16.mxu0 0
        %1437 = vmatpush1.bf16.xpose.msra.mxu0 0
        %1438 = vmatprep.subr.bf16.mxu0 0
        %1439 = vmatpush1.bf16.xpose.msra.mxu0 0
        %1440 = vmatprep.subr.bf16.mxu0 0
        %1441 = vmatpush1.bf16.xpose.msra.mxu0 0
        %1442 = vmatprep.subr.bf16.mxu0 0
        %1443 = vmatpush1.bf16.xpose.msra.mxu0 %v1426
        %1444 = vmatprep.subr.bf16.mxu0 0
        %1445 = vmatpush2.bf16.xpose.msra.mxu0 0
        %1446 = vmatprep.subr.bf16.mxu0 0
        %1447 = vmatpush2.bf16.xpose.msra.mxu0 0
        %1448 = vmatprep.subr.bf16.mxu0 0
        %1449 = vmatpush2.bf16.xpose.msra.mxu0 0
        %1450 = vmatprep.subr.bf16.mxu0 0
        %1451 = vmatpush2.bf16.xpose.msra.mxu0 0
        %1452 = vmatprep.subr.bf16.mxu0 0
        %1453 = vmatpush2.bf16.xpose.msra.mxu0 0
        %1454 = vmatprep.subr.bf16.mxu0 0
        %1455 = vmatpush2.bf16.xpose.msra.mxu0 0
        %1456 = vmatprep.subr.bf16.mxu0 0
        %1457 = vmatpush2.bf16.xpose.msra.mxu0 0
        %1458 = vmatprep.subr.bf16.mxu0 0
        %1459 = vmatpush2.bf16.xpose.msra.mxu0 0
        %1460 = vmatprep.mubr.bf16.mxu0 0
        %1461 = vmatmul.mubr.bf16.gmra.mxu0 %v1423
        %v1462 = vpop.f32.mrf.mxu0
        %v1463 = vadd.f32 0.0, %v1462
        %v1464 = vpop.f32.mrf.mxu0
        %v1465 = vpop.f32.mrf.mxu0
        %v1466 = vpop.f32.mrf.mxu0
        %1467 = vdwg.mxu0
        %1468 = vxpose.xlu0.b32.start [1/16] %v1325, 128
        %1469 = vxpose.xlu0.b32.cont [2/16] 0.0, 128
        %1470 = vxpose.xlu0.b32.cont [3/16] 0.0, 128
        %1471 = vxpose.xlu0.b32.cont [4/16] 0.0, 128
        %1472 = vxpose.xlu0.b32.cont [5/16] 0.0, 128
        %1473 = vxpose.xlu0.b32.cont [6/16] 0.0, 128
        %1474 = vxpose.xlu0.b32.cont [7/16] 0.0, 128
        %1475 = vxpose.xlu0.b32.cont [8/16] 0.0, 128
        %1476 = vxpose.xlu0.b32.cont [9/16] 0.0, 128
        %1477 = vxpose.xlu0.b32.cont [10/16] 0.0, 128
        %1478 = vxpose.xlu0.b32.cont [11/16] 0.0, 128
        %1479 = vxpose.xlu0.b32.cont [12/16] 0.0, 128
        %1480 = vxpose.xlu0.b32.cont [13/16] 0.0, 128
        %1481 = vxpose.xlu0.b32.cont [14/16] 0.0, 128
        %1482 = vxpose.xlu0.b32.cont [15/16] 0.0, 128
        %1483 = vxpose.xlu0.b32.end [16/16] 0.0, 128
        %v1484 = vpop.trf.xlu0
        %v1485 = vpop.trf.xlu0
        %v1486 = vpop.trf.xlu0
        %v1487 = vpop.trf.xlu0
        %v1488 = vpop.trf.xlu0
        %v1489 = vpop.trf.xlu0
        %v1490 = vpop.trf.xlu0
        %v1491 = vpop.trf.xlu0
        %v1492 = vpop.trf.xlu0
        %v1493 = vpop.trf.xlu0
        %v1494 = vpop.trf.xlu0
        %v1495 = vpop.trf.xlu0
        %v1496 = vpop.trf.xlu0
        %v1497 = vpop.trf.xlu0
        %v1498 = vpop.trf.xlu0
        %v1499 = vpop.trf.xlu0
        %1500 = vxpose.xlu0.b32.start [1/16] %v1371, 128
        %1501 = vxpose.xlu0.b32.cont [2/16] 0.0, 128
        %1502 = vxpose.xlu0.b32.cont [3/16] 0.0, 128
        %1503 = vxpose.xlu0.b32.cont [4/16] 0.0, 128
        %1504 = vxpose.xlu0.b32.cont [5/16] 0.0, 128
        %1505 = vxpose.xlu0.b32.cont [6/16] 0.0, 128
        %1506 = vxpose.xlu0.b32.cont [7/16] 0.0, 128
        %1507 = vxpose.xlu0.b32.cont [8/16] 0.0, 128
        %1508 = vxpose.xlu0.b32.cont [9/16] 0.0, 128
        %1509 = vxpose.xlu0.b32.cont [10/16] 0.0, 128
        %1510 = vxpose.xlu0.b32.cont [11/16] 0.0, 128
        %1511 = vxpose.xlu0.b32.cont [12/16] 0.0, 128
        %1512 = vxpose.xlu0.b32.cont [13/16] 0.0, 128
        %1513 = vxpose.xlu0.b32.cont [14/16] 0.0, 128
        %1514 = vxpose.xlu0.b32.cont [15/16] 0.0, 128
        %1515 = vxpose.xlu0.b32.end [16/16] 0.0, 128
        %v1516 = vpop.trf.xlu0
        %v1517 = vpop.trf.xlu0
        %v1518 = vpop.trf.xlu0
        %v1519 = vpop.trf.xlu0
        %v1520 = vpop.trf.xlu0
        %v1521 = vpop.trf.xlu0
        %v1522 = vpop.trf.xlu0
        %v1523 = vpop.trf.xlu0
        %v1524 = vpop.trf.xlu0
        %v1525 = vpop.trf.xlu0
        %v1526 = vpop.trf.xlu0
        %v1527 = vpop.trf.xlu0
        %v1528 = vpop.trf.xlu0
        %v1529 = vpop.trf.xlu0
        %v1530 = vpop.trf.xlu0
        %v1531 = vpop.trf.xlu0
        %1532 = vxpose.xlu0.b32.start [1/16] %v1417, 128
        %1533 = vxpose.xlu0.b32.cont [2/16] 0.0, 128
        %1534 = vxpose.xlu0.b32.cont [3/16] 0.0, 128
        %1535 = vxpose.xlu0.b32.cont [4/16] 0.0, 128
        %1536 = vxpose.xlu0.b32.cont [5/16] 0.0, 128
        %1537 = vxpose.xlu0.b32.cont [6/16] 0.0, 128
        %1538 = vxpose.xlu0.b32.cont [7/16] 0.0, 128
        %1539 = vxpose.xlu0.b32.cont [8/16] 0.0, 128
        %1540 = vxpose.xlu0.b32.cont [9/16] 0.0, 128
        %1541 = vxpose.xlu0.b32.cont [10/16] 0.0, 128
        %1542 = vxpose.xlu0.b32.cont [11/16] 0.0, 128
        %1543 = vxpose.xlu0.b32.cont [12/16] 0.0, 128
        %1544 = vxpose.xlu0.b32.cont [13/16] 0.0, 128
        %1545 = vxpose.xlu0.b32.cont [14/16] 0.0, 128
        %1546 = vxpose.xlu0.b32.cont [15/16] 0.0, 128
        %1547 = vxpose.xlu0.b32.end [16/16] 0.0, 128
        %v1548 = vpop.trf.xlu0
        %v1549 = vpop.trf.xlu0
        %v1550 = vpop.trf.xlu0
        %v1551 = vpop.trf.xlu0
        %v1552 = vpop.trf.xlu0
        %v1553 = vpop.trf.xlu0
        %v1554 = vpop.trf.xlu0
        %v1555 = vpop.trf.xlu0
        %v1556 = vpop.trf.xlu0
        %v1557 = vpop.trf.xlu0
        %v1558 = vpop.trf.xlu0
        %v1559 = vpop.trf.xlu0
        %v1560 = vpop.trf.xlu0
        %v1561 = vpop.trf.xlu0
        %v1562 = vpop.trf.xlu0
        %v1563 = vpop.trf.xlu0
        %1564 = vxpose.xlu0.b32.start [1/16] %v1463, 128
        %1565 = vxpose.xlu0.b32.cont [2/16] 0.0, 128
        %1566 = vxpose.xlu0.b32.cont [3/16] 0.0, 128
        %1567 = vxpose.xlu0.b32.cont [4/16] 0.0, 128
        %1568 = vxpose.xlu0.b32.cont [5/16] 0.0, 128
        %1569 = vxpose.xlu0.b32.cont [6/16] 0.0, 128
        %1570 = vxpose.xlu0.b32.cont [7/16] 0.0, 128
        %1571 = vxpose.xlu0.b32.cont [8/16] 0.0, 128
        %1572 = vxpose.xlu0.b32.cont [9/16] 0.0, 128
        %1573 = vxpose.xlu0.b32.cont [10/16] 0.0, 128
        %1574 = vxpose.xlu0.b32.cont [11/16] 0.0, 128
        %1575 = vxpose.xlu0.b32.cont [12/16] 0.0, 128
        %1576 = vxpose.xlu0.b32.cont [13/16] 0.0, 128
        %1577 = vxpose.xlu0.b32.cont [14/16] 0.0, 128
        %1578 = vxpose.xlu0.b32.cont [15/16] 0.0, 128
        %1579 = vxpose.xlu0.b32.end [16/16] 0.0, 128
        %v1580 = vpop.trf.xlu0
        %v1581 = vpop.trf.xlu0
        %v1582 = vpop.trf.xlu0
        %v1583 = vpop.trf.xlu0
        %v1584 = vpop.trf.xlu0
        %v1585 = vpop.trf.xlu0
        %v1586 = vpop.trf.xlu0
        %v1587 = vpop.trf.xlu0
        %v1588 = vpop.trf.xlu0
        %v1589 = vpop.trf.xlu0
        %v1590 = vpop.trf.xlu0
        %v1591 = vpop.trf.xlu0
        %v1592 = vpop.trf.xlu0
        %v1593 = vpop.trf.xlu0
        %v1594 = vpop.trf.xlu0
        %v1595 = vpop.trf.xlu0
        %v1596 = vcombine.low %v1484, %v1548
        %v1597 = vcombine.high %v1484, %v1548
        %v1599 = vunpack.c.l.s4 1983009808
        %v1600 = vunpack.c.0.s8 %v1599
        %v1601 = vlaneseq
        %v1602 = vshrl.u32 %v1601, 7
        %v1603 = vsub.s32 %v1600, %v1602
        %v1604 = vrot.slane %v1596, %v1603
        %v1606 = vunpack.c.l.s4 1983009808
        %v1607 = vunpack.c.0.s8 %v1606
        %v1608 = vlaneseq
        %v1609 = vshrl.u32 %v1608, 7
        %v1610 = vsub.s32 %v1607, %v1609
        %v1611 = vrot.slane %v1597, %v1610
        %v1612 = vcombine.low %v1516, %v1580
        %v1613 = vcombine.high %v1516, %v1580
        %v1615 = vunpack.c.l.s4 1983009808
        %v1616 = vunpack.c.0.s8 %v1615
        %v1617 = vlaneseq
        %v1618 = vshrl.u32 %v1617, 7
        %v1619 = vsub.s32 %v1616, %v1618
        %v1620 = vrot.slane %v1612, %v1619
        %v1622 = vunpack.c.l.s4 1983009808
        %v1623 = vunpack.c.0.s8 %v1622
        %v1624 = vlaneseq
        %v1625 = vshrl.u32 %v1624, 7
        %v1626 = vsub.s32 %v1623, %v1625
        %v1627 = vrot.slane %v1613, %v1626
        %v1628 = vcombine.low %v1604, %v1620
        %v1629 = vcombine.high %v1604, %v1620
        %v1631 = vunpack.c.l.s4 1934713408
        %v1632 = vunpack.c.0.s8 %v1631
        %v1633 = vlaneseq
        %v1634 = vshrl.u32 %v1633, 7
        %v1635 = vsub.s32 %v1632, %v1634
        %v1636 = vrot.slane %v1628, %v1635
        %v1638 = vunpack.c.l.s4 1934713408
        %v1639 = vunpack.c.0.s8 %v1638
        %v1640 = vlaneseq
        %v1641 = vshrl.u32 %v1640, 7
        %v1642 = vsub.s32 %v1639, %v1641
        %v1643 = vrot.slane %v1629, %v1642
        %v1644 = vcombine.low %v1611, %v1627
        %v1645 = vcombine.high %v1611, %v1627
        %v1647 = vunpack.c.l.s4 1934713408
        %v1648 = vunpack.c.0.s8 %v1647
        %v1649 = vlaneseq
        %v1650 = vshrl.u32 %v1649, 7
        %v1651 = vsub.s32 %v1648, %v1650
        %v1652 = vrot.slane %v1644, %v1651
        %v1654 = vunpack.c.l.s4 1934713408
        %v1655 = vunpack.c.0.s8 %v1654
        %v1656 = vlaneseq
        %v1657 = vshrl.u32 %v1656, 7
        %v1658 = vsub.s32 %v1655, %v1657
        %v1659 = vrot.slane %v1645, %v1658
        %v1660 = vcombine.high %v1636, 0.0
        %v1661 = vcombine.high %v1643, 0.0
        %v1662 = vcombine.high %v1652, 0.0
        %v1663 = vcombine.high %v1659, 0.0
        %v1664 = vcombine.low %v1636, %v1643
        %v1666 = vunpack.c.l.s4 1983009808
        %v1667 = vunpack.c.0.s8 %v1666
        %v1668 = vlaneseq
        %v1669 = vshrl.u32 %v1668, 7
        %v1670 = vsub.s32 %v1667, %v1669
        %v1671 = vrot.slane %v1664, %v1670
        %v1672 = vcombine.low %v1660, %v1661
        %v1674 = vunpack.c.l.s4 1983009808
        %v1675 = vunpack.c.0.s8 %v1674
        %v1676 = vlaneseq
        %v1677 = vshrl.u32 %v1676, 7
        %v1678 = vsub.s32 %v1675, %v1677
        %v1679 = vrot.slane %v1672, %v1678
        %v1680 = vcombine.low %v1652, %v1659
        %v1682 = vunpack.c.l.s4 1983009808
        %v1683 = vunpack.c.0.s8 %v1682
        %v1684 = vlaneseq
        %v1685 = vshrl.u32 %v1684, 7
        %v1686 = vsub.s32 %v1683, %v1685
        %v1687 = vrot.slane %v1680, %v1686
        %v1688 = vcombine.low %v1662, %v1663
        %v1690 = vunpack.c.l.s4 1983009808
        %v1691 = vunpack.c.0.s8 %v1690
        %v1692 = vlaneseq
        %v1693 = vshrl.u32 %v1692, 7
        %v1694 = vsub.s32 %v1691, %v1693
        %v1695 = vrot.slane %v1688, %v1694
        %v1696 = vcombine.low %v1671, %v1679
        %v1697 = vcombine.high %v1671, %v1679
        %v1699 = vunpack.c.l.s4 1934713408
        %v1700 = vunpack.c.0.s8 %v1699
        %v1701 = vlaneseq
        %v1702 = vshrl.u32 %v1701, 7
        %v1703 = vsub.s32 %v1700, %v1702
        %v1704 = vrot.slane %v1696, %v1703
        %v1706 = vunpack.c.l.s4 1934713408
        %v1707 = vunpack.c.0.s8 %v1706
        %v1708 = vlaneseq
        %v1709 = vshrl.u32 %v1708, 7
        %v1710 = vsub.s32 %v1707, %v1709
        %v1711 = vrot.slane %v1697, %v1710
        %v1712 = vcombine.low %v1687, %v1695
        %v1713 = vcombine.high %v1687, %v1695
        %v1715 = vunpack.c.l.s4 1934713408
        %v1716 = vunpack.c.0.s8 %v1715
        %v1717 = vlaneseq
        %v1718 = vshrl.u32 %v1717, 7
        %v1719 = vsub.s32 %v1716, %v1718
        %v1720 = vrot.slane %v1712, %v1719
        %v1722 = vunpack.c.l.s4 1934713408
        %v1723 = vunpack.c.0.s8 %v1722
        %v1724 = vlaneseq
        %v1725 = vshrl.u32 %v1724, 7
        %v1726 = vsub.s32 %v1723, %v1725
        %v1727 = vrot.slane %v1713, %v1726
        %v1728 = vcombine.low %v1704, %v1720
        %v1729 = vcombine.high %v1704, %v1720
        %v1730 = vcombine.low %v1711, %v1727
        %v1731 = vcombine.high %v1711, %v1727
        %1733 = vrot.lane.b32.xlu0 %v1729, 8
        %v1734 = vpop.permute.xlu0 %1733
        %1737 = vrot.lane.b32.xlu0 %v1730, 16
        %v1738 = vpop.permute.xlu0 %1737
        %1741 = vrot.lane.b32.xlu0 %v1731, 24
        %v1742 = vpop.permute.xlu0 %1741
        %v1744 = vsel %vm976, %v1728, %v1734
        %vm1745 = vcmask 130048
        %v1746 = vsel %vm1745, %v1744, %v1738
        %vm1747 = vcmask 195584
        %v1748 = vsel %vm1747, %v1746, %v1742
        %v1749 = vpack.c.bf16 %v1748, %v1748
        %v1750 = vld [vmem:[#allocation11] sm:$0xf]
        %v1751 = vld [vmem:[#allocation11 + $0x4] sm:$0xf]
        %v1752 = vld [vmem:[#allocation11 + $0x8] sm:$0xf]
        %v1753 = vld [vmem:[#allocation11 + $0xc] sm:$0xf]
        %v1754 = vld [vmem:[#allocation13] sm:$0x1]
        %v1756 = vlaneseq
        %v1757 = vshrl.u32 %v1756, 7
        %v1758 = vsub.s32 0, %v1757
        %v1759 = vrot.slane %v1754, %v1758
        %v1765 = vunpack.c.l.b16 %v1750
        %v1766 = vunpack.c.l.b16 %v1751
        %v1767 = vunpack.c.l.b16 %v1752
        %v1768 = vunpack.c.l.b16 %v1753
        %v1769 = vpack.c.b16 %v1766, %v1765
        %v1770 = vpack.c.b16 %v1768, %v1767
        %v1774 = vsel %vm712, %v1749, 0
        %1776 = vmatprep.subr.bf16.mxu0 0
        %1777 = vmatpush1.bf16.msra.mxu0 0
        %1778 = vmatprep.subr.bf16.mxu0 0
        %1779 = vmatpush1.bf16.msra.mxu0 0
        %1780 = vmatprep.subr.bf16.mxu0 0
        %1781 = vmatpush1.bf16.msra.mxu0 0
        %1782 = vmatprep.subr.bf16.mxu0 0
        %1783 = vmatpush1.bf16.msra.mxu0 0
        %1784 = vmatprep.subr.bf16.mxu0 0
        %1785 = vmatpush1.bf16.msra.mxu0 0
        %1786 = vmatprep.subr.bf16.mxu0 0
        %1787 = vmatpush1.bf16.msra.mxu0 0
        %1788 = vmatprep.subr.bf16.mxu0 0
        %1789 = vmatpush1.bf16.msra.mxu0 %v1770
        %1790 = vmatprep.subr.bf16.mxu0 0
        %1791 = vmatpush1.bf16.msra.mxu0 %v1769
        %1792 = vmatprep.subr.bf16.mxu0 0
        %1793 = vmatpush2.bf16.msra.mxu0 0
        %1794 = vmatprep.subr.bf16.mxu0 0
        %1795 = vmatpush2.bf16.msra.mxu0 0
        %1796 = vmatprep.subr.bf16.mxu0 0
        %1797 = vmatpush2.bf16.msra.mxu0 0
        %1798 = vmatprep.subr.bf16.mxu0 0
        %1799 = vmatpush2.bf16.msra.mxu0 0
        %1800 = vmatprep.subr.bf16.mxu0 0
        %1801 = vmatpush2.bf16.msra.mxu0 0
        %1802 = vmatprep.subr.bf16.mxu0 0
        %1803 = vmatpush2.bf16.msra.mxu0 0
        %1804 = vmatprep.subr.bf16.mxu0 0
        %1805 = vmatpush2.bf16.msra.mxu0 0
        %1806 = vmatprep.subr.bf16.mxu0 0
        %1807 = vmatpush2.bf16.msra.mxu0 0
        %1808 = vmatprep.mubr.bf16.mxu0 0
        %1809 = vmatmul.mubr.bf16.gmra.mxu0 %v1774
        %v1810 = vpop.f32.mrf.mxu0
        %v1811 = vadd.f32 %v1759, %v1810
        %v1812 = vpop.f32.mrf.mxu0
        %v1813 = vpop.f32.mrf.mxu0
        %v1814 = vpop.f32.mrf.mxu0
        %1815 = vdwg.mxu0
        %v1816 = vadd.f32 %v1811, %v685
        %v1817 = vld [vmem:[%s10] sm:$0x1]
        %v1818 = vld [vmem:[%s11] sm:$0x1]
        %v1819 = vsel %vm712, %v1816, 0.0
        %1820 = vadd.xlane.f32.xlu0 %v1819
        %v1821 = vpop.xlane.xlu0 %1820
        %v1822 = vrcp.pop 32.0
        %v1823 = vmul.f32 %v1821, %v1822
        %v1824 = vsub.f32 %v1816, %v1823
        %v1825 = vmul.f32 %v1824, %v1824
        %v1826 = vsel %vm712, %v1825, 0.0
        %1827 = vadd.xlane.f32.xlu0 %v1826
        %v1828 = vpop.xlane.xlu0 %1827
        %v1829 = vmul.f32 %v1828, %v1822
        %v1830 = vadd.f32 %v1829, 1e-12
        %v1831 = vrsqrt.pop %v1830
        %v1832 = vmul.f32 %v1824, %v1831
        %v1834 = vlaneseq
        %v1835 = vshrl.u32 %v1834, 7
        %v1836 = vsub.s32 0, %v1835
        %v1837 = vrot.slane %v1817, %v1836
        %v1839 = vmul.f32 %v1832, %v1837
        %v1841 = vlaneseq
        %v1842 = vshrl.u32 %v1841, 7
        %v1843 = vsub.s32 0, %v1842
        %v1844 = vrot.slane %v1818, %v1843
        %v1846 = vadd.f32 %v1839, %v1844
        %v1847 = vpack.c.bf16 %v1846, %v1846
        %v1848 = vld [vmem:[%s12] sm:$0xf]
        %v1849 = vld [vmem:[%s12 + $0x4] sm:$0xf]
        %v1850 = vld [vmem:[%s12 + $0x8] sm:$0xf]
        %v1851 = vld [vmem:[%s12 + $0xc] sm:$0xf]
        %v1852 = vld [vmem:[%s13] sm:$0x1]
        %v1854 = vlaneseq
        %v1855 = vshrl.u32 %v1854, 7
        %v1856 = vsub.s32 0, %v1855
        %v1857 = vrot.slane %v1852, %v1856
        %v1863 = vunpack.c.l.b16 %v1848
        %v1864 = vunpack.c.l.b16 %v1849
        %v1865 = vunpack.c.l.b16 %v1850
        %v1866 = vunpack.c.l.b16 %v1851
        %v1867 = vpack.c.b16 %v1864, %v1863
        %v1868 = vpack.c.b16 %v1866, %v1865
        %v1872 = vsel %vm712, %v1847, 0
        %1874 = vmatprep.subr.bf16.mxu0 0
        %1875 = vmatpush1.bf16.msra.mxu0 0
        %1876 = vmatprep.subr.bf16.mxu0 0
        %1877 = vmatpush1.bf16.msra.mxu0 0
        %1878 = vmatprep.subr.bf16.mxu0 0
        %1879 = vmatpush1.bf16.msra.mxu0 0
        %1880 = vmatprep.subr.bf16.mxu0 0
        %1881 = vmatpush1.bf16.msra.mxu0 0
        %1882 = vmatprep.subr.bf16.mxu0 0
        %1883 = vmatpush1.bf16.msra.mxu0 0
        %1884 = vmatprep.subr.bf16.mxu0 0
        %1885 = vmatpush1.bf16.msra.mxu0 0
        %1886 = vmatprep.subr.bf16.mxu0 0
        %1887 = vmatpush1.bf16.msra.mxu0 %v1868
        %1888 = vmatprep.subr.bf16.mxu0 0
        %1889 = vmatpush1.bf16.msra.mxu0 %v1867
        %1890 = vmatprep.subr.bf16.mxu0 0
        %1891 = vmatpush2.bf16.msra.mxu0 0
        %1892 = vmatprep.subr.bf16.mxu0 0
        %1893 = vmatpush2.bf16.msra.mxu0 0
        %1894 = vmatprep.subr.bf16.mxu0 0
        %1895 = vmatpush2.bf16.msra.mxu0 0
        %1896 = vmatprep.subr.bf16.mxu0 0
        %1897 = vmatpush2.bf16.msra.mxu0 0
        %1898 = vmatprep.subr.bf16.mxu0 0
        %1899 = vmatpush2.bf16.msra.mxu0 0
        %1900 = vmatprep.subr.bf16.mxu0 0
        %1901 = vmatpush2.bf16.msra.mxu0 0
        %1902 = vmatprep.subr.bf16.mxu0 0
        %1903 = vmatpush2.bf16.msra.mxu0 0
        %1904 = vmatprep.subr.bf16.mxu0 0
        %1905 = vmatpush2.bf16.msra.mxu0 0
        %1906 = vmatprep.mubr.bf16.mxu0 0
        %1907 = vmatmul.mubr.bf16.gmra.mxu0 %v1872
        %v1908 = vpop.f32.mrf.mxu0
        %v1909 = vadd.f32 %v1857, %v1908
        %v1910 = vpop.f32.mrf.mxu0
        %v1911 = vpop.f32.mrf.mxu0
        %v1912 = vpop.f32.mrf.mxu0
        %1913 = vdwg.mxu0
        %v1914 = vmul.f32 %v1909, 0.5
        %v1915 = vmul.f32 %v1909, 0.044715
        %v1916 = vmul.f32 %v1915, %v1909
        %v1917 = vmul.f32 %v1916, %v1909
        %v1918 = vadd.f32 %v1909, %v1917
        %v1919 = vmul.f32 %v1918, 0.7978846
        %v1920 = vtanh.pop %v1919
        %v1921 = vadd.f32 %v1920, 1.0
        %v1922 = vmul.f32 %v1914, %v1921
        %v1923 = vpack.c.bf16 %v1922, %v1922
        %v1924 = vld [vmem:[%s14] sm:$0xf]
        %v1925 = vld [vmem:[%s14 + $0x4] sm:$0xf]
        %v1926 = vld [vmem:[%s14 + $0x8] sm:$0xf]
        %v1927 = vld [vmem:[%s14 + $0xc] sm:$0xf]
        %v1928 = vld [vmem:[%s14 + $0x10] sm:$0xf]
        %v1929 = vld [vmem:[%s14 + $0x14] sm:$0xf]
        %v1930 = vld [vmem:[%s14 + $0x18] sm:$0xf]
        %v1931 = vld [vmem:[%s14 + $0x1c] sm:$0xf]
        %v1932 = vld [vmem:[%s15] sm:$0x1]
        %v1934 = vlaneseq
        %v1935 = vshrl.u32 %v1934, 7
        %v1936 = vsub.s32 0, %v1935
        %v1937 = vrot.slane %v1932, %v1936
        %v1947 = vunpack.c.l.b16 %v1924
        %v1948 = vunpack.c.l.b16 %v1925
        %v1949 = vunpack.c.l.b16 %v1926
        %v1950 = vunpack.c.l.b16 %v1927
        %v1951 = vunpack.c.l.b16 %v1928
        %v1952 = vunpack.c.l.b16 %v1929
        %v1953 = vunpack.c.l.b16 %v1930
        %v1954 = vunpack.c.l.b16 %v1931
        %v1955 = vpack.c.b16 %v1948, %v1947
        %v1956 = vpack.c.b16 %v1950, %v1949
        %v1957 = vpack.c.b16 %v1952, %v1951
        %v1958 = vpack.c.b16 %v1954, %v1953
        %vm1963 = vcmask 523264
        %v1965 = vsel %vm1963, %v1923, 0
        %1967 = vmatprep.subr.bf16.mxu0 0
        %1968 = vmatpush1.bf16.msra.mxu0 0
        %1969 = vmatprep.subr.bf16.mxu0 0
        %1970 = vmatpush1.bf16.msra.mxu0 0
        %1971 = vmatprep.subr.bf16.mxu0 0
        %1972 = vmatpush1.bf16.msra.mxu0 0
        %1973 = vmatprep.subr.bf16.mxu0 0
        %1974 = vmatpush1.bf16.msra.mxu0 0
        %1975 = vmatprep.subr.bf16.mxu0 0
        %1976 = vmatpush1.bf16.msra.mxu0 %v1958
        %1977 = vmatprep.subr.bf16.mxu0 0
        %1978 = vmatpush1.bf16.msra.mxu0 %v1957
        %1979 = vmatprep.subr.bf16.mxu0 0
        %1980 = vmatpush1.bf16.msra.mxu0 %v1956
        %1981 = vmatprep.subr.bf16.mxu0 0
        %1982 = vmatpush1.bf16.msra.mxu0 %v1955
        %1983 = vmatprep.subr.bf16.mxu0 0
        %1984 = vmatpush2.bf16.msra.mxu0 0
        %1985 = vmatprep.subr.bf16.mxu0 0
        %1986 = vmatpush2.bf16.msra.mxu0 0
        %1987 = vmatprep.subr.bf16.mxu0 0
        %1988 = vmatpush2.bf16.msra.mxu0 0
        %1989 = vmatprep.subr.bf16.mxu0 0
        %1990 = vmatpush2.bf16.msra.mxu0 0
        %1991 = vmatprep.subr.bf16.mxu0 0
        %1992 = vmatpush2.bf16.msra.mxu0 0
        %1993 = vmatprep.subr.bf16.mxu0 0
        %1994 = vmatpush2.bf16.msra.mxu0 0
        %1995 = vmatprep.subr.bf16.mxu0 0
        %1996 = vmatpush2.bf16.msra.mxu0 0
        %1997 = vmatprep.subr.bf16.mxu0 0
        %1998 = vmatpush2.bf16.msra.mxu0 0
        %1999 = vmatprep.mubr.bf16.mxu0 0
        %2000 = vmatmul.mubr.bf16.gmra.mxu0 %v1965
        %v2001 = vpop.f32.mrf.mxu0
        %v2002 = vadd.f32 %v1937, %v2001
        %v2003 = vpop.f32.mrf.mxu0
        %v2004 = vpop.f32.mrf.mxu0
        %v2005 = vpop.f32.mrf.mxu0
        %2006 = vdwg.mxu0
        %v2007 = vadd.f32 %v2002, %v1846
        %v2008 = vld [vmem:[%s16] sm:$0x1]
        %v2009 = vld [vmem:[%s17] sm:$0x1]
        %v2010 = vsel %vm712, %v2007, 0.0
        %2011 = vadd.xlane.f32.xlu0 %v2010
        %v2012 = vpop.xlane.xlu0 %2011
        %v2013 = vmul.f32 %v2012, %v1822
        %v2014 = vsub.f32 %v2007, %v2013
        %v2015 = vmul.f32 %v2014, %v2014
        %v2016 = vsel %vm712, %v2015, 0.0
        %2017 = vadd.xlane.f32.xlu0 %v2016
        %v2018 = vpop.xlane.xlu0 %2017
        %v2019 = vmul.f32 %v2018, %v1822
        %v2020 = vadd.f32 %v2019, 1e-12
        %v2021 = vrsqrt.pop %v2020
        %v2022 = vmul.f32 %v2014, %v2021
        %v2024 = vlaneseq
        %v2025 = vshrl.u32 %v2024, 7
        %v2026 = vsub.s32 0, %v2025
        %v2027 = vrot.slane %v2008, %v2026
        %v2029 = vmul.f32 %v2022, %v2027
        %v2031 = vlaneseq
        %v2032 = vshrl.u32 %v2031, 7
        %v2033 = vsub.s32 0, %v2032
        %v2034 = vrot.slane %v2009, %v2033
        %v2036 = vadd.f32 %v2029, %v2034
        %2037 = vst.msk [vmem:[%s679] sm:$0xff] %vm712, %v2036
        %s2038 = sand.u32 %s434, 1
        %s2039 = scalar_lea.sflag [#allocation4], %s2038
        %s2040 = sand.u32 %s434, 1
        %s2041 = smul.addr %s2040, 8
        %s2042 = scalar_lea.vmem [#allocation14], %s2041
        // Predicated region
        $region121: #{tpu_custom_call.1} parent=91 // pred_check
          %p2043 = pneg %p444
        $region122: #{tpu_custom_call.1} parent=91 // pred_check_branch
          %2045 = sbr.rel (%p2043) target = $region124
        $region123: #{tpu_custom_call.1} parent=91 // pred_region
          %s2047 = ssub.s32 128, 128
          %2048 = vsyncadd %s2039, %s2047
          %s2049 = smul.addr %s38, 128
          %s2050 = scalar_lea.hbm %s18, %s2049
          %s2052 = sshll.u32 %s2042, 4
          %s2053 = int_to_ptr.vmem [resolvable:$true] %s2052
          %2055 = dma.vmem_to_hbm [thread:$0]  %s2053, 128, %s2050, %s2039
        $region124: #{tpu_custom_call.1} parent=91 // pred_fallthru
          _
      $region92: #{tpu_custom_call.1} parent=5 // pred_fallthru
        _
      %p2056 = scmp.le.s32.totalorder 2, %s33
      // Predicated region
      $region125: #{tpu_custom_call.1} parent=5 // pred_check
        %p2057 = pneg %p2056
      $region126: #{tpu_custom_call.1} parent=5 // pred_check_branch
        %2059 = sbr.rel (%p2057) target = $region128
      $region127: #{tpu_custom_call.1} parent=5 // pred_region
        %s2060 = ssub.s32 %s33, 2
        // Predicated region
        $region129: #{tpu_custom_call.1} parent=127 // pred_check
          %p2061 = pneg %p450
        $region130: #{tpu_custom_call.1} parent=127 // pred_check_branch
          %2063 = sbr.rel (%p2061) target = $region132
        $region131: #{tpu_custom_call.1} parent=127 // pred_region
          %s2064 = sand.u32 %s435, 1
          %s2065 = scalar_lea.sflag [#allocation4], %s2064
          %s2066 = sand.u32 %s435, 1
          %s2067 = smul.addr %s2066, 8
          %s2068 = scalar_lea.vmem [#allocation14], %s2067
          %2069 = dma.done %s2065, 128
        $region132: #{tpu_custom_call.1} parent=127 // pred_fallthru
          _
      $region128: #{tpu_custom_call.1} parent=5 // pred_fallthru
        _
    $region6: #{tpu_custom_call.1} parent=1 // loop_footer
      %s37 = sadd.s32 1, %s33
    $region7: #{tpu_custom_call.1} parent=1 // loop_footer_branch
      %32 = sbr.rel target = $region3
    $region8: #{tpu_custom_call.1} parent=1 // loop_exit
      _
    %2070 = vsyncpa [#allocation3], 1
    %s2071 = scalar_lea.sflag [#allocation3], 1
    %2072 = vsyncpa %s2071, 1
    %2073 = vsyncpa [#allocation6], 1
    %2074 = vsyncpa [#allocation9], 1
    %2075 = vsyncpa [#allocation12], 1
    %2076 = vsyncpa [#allocation4], 1
    %s2077 = scalar_lea.sflag [#allocation4], 1
    %2078 = vsyncpa %s2077, 1

// kernel: tpu_custom_call.1
$region0: #{tpu_custom_call.1}
  #allocation0 [shape = 'u32[]', space=smem, size = 0x4, offset = 0x4, fixed_abs, tag = 'smem constant byte address 0x4 - core index']
  #allocation1 [shape = 'u32[144,128]{1,0:T(1,128)}', space=vmem, size = 0x12000, scoped, tag = 'internal scratch']
  %s0 = inlined_call_operand.vmem [shape: f32[2,8,32], index: 0, kind: input, shape index: {}]
  %s1 = inlined_call_operand.hbm [shape: f32[2,1,8], index: 1, kind: input, shape index: {}]
  %s2 = inlined_call_operand.vmem [shape: bf16[32,32], index: 2, kind: input, shape index: {}]
  %s3 = inlined_call_operand.hbm [shape: f32[1,32], index: 3, kind: input, shape index: {}]
  %s4 = inlined_call_operand.vmem [shape: bf16[32,32], index: 4, kind: input, shape index: {}]
  %s5 = inlined_call_operand.hbm [shape: f32[1,32], index: 5, kind: input, shape index: {}]
  %s6 = inlined_call_operand.hbm [shape: bf16[32,32], index: 6, kind: input, shape index: {}]
  %s7 = inlined_call_operand.hbm [shape: f32[1,32], index: 7, kind: input, shape index: {}]
  %s8 = inlined_call_operand.hbm [shape: bf16[32,32], index: 8, kind: input, shape index: {}]
  %s9 = inlined_call_operand.hbm [shape: f32[1,32], index: 9, kind: input, shape index: {}]
  %s10 = inlined_call_operand.vmem [shape: f32[1,32], index: 10, kind: input, shape index: {}]
  %s11 = inlined_call_operand.vmem [shape: f32[1,32], index: 11, kind: input, shape index: {}]
  %s12 = inlined_call_operand.vmem [shape: bf16[32,64], index: 12, kind: input, shape index: {}]
  %s13 = inlined_call_operand.vmem [shape: f32[1,64], index: 13, kind: input, shape index: {}]
  %s14 = inlined_call_operand.vmem [shape: bf16[64,32], index: 14, kind: input, shape index: {}]
  %s15 = inlined_call_operand.vmem [shape: f32[1,32], index: 15, kind: input, shape index: {}]
  %s16 = inlined_call_operand.vmem [shape: f32[1,32], index: 16, kind: input, shape index: {}]
  %s17 = inlined_call_operand.vmem [shape: f32[1,32], index: 17, kind: input, shape index: {}]
  %s18 = inlined_call_operand.hbm [shape: f32[2,8,32], index: 18, kind: output, shape index: {}]
  %s19 = sld [smem:[#allocation0]]
  $region133: #{tpu_custom_call.1} parent=0
    _
  %s21 = ssub.s32 1, %s19
  %s22 = scalar_select 0, %s21, %s19
  $region1: #{tpu_custom_call.1} parent=0
    #allocation2 [shape = 'u8[1024]{0}', space=vmem, size = 0x400, scoped, tag = 'input window, operand 1']
    #allocation3 [shape = 's32[2]{0}', space=sflag, size = 0x8, scoped, tag = 'scoped memory for tpu_custom_call.1']
    #allocation4 [shape = 's32[2]{0}', space=sflag, size = 0x8, scoped, tag = 'scoped memory for tpu_custom_call.1']
    #allocation5 [shape = 'u8[512]{0}', space=vmem, size = 0x400, scoped, tag = 'input window, operand 3, single buffered']
    #allocation6 [shape = 's32[1]{0}', space=sflag, size = 0x4, scoped, tag = 'scoped memory for tpu_custom_call.1']
    #allocation7 [shape = 'u8[512]{0}', space=vmem, size = 0x400, scoped, tag = 'input window, operand 5, single buffered']
    #allocation8 [shape = 'u8[8192]{0}', space=vmem, size = 0x2000, scoped, tag = 'input window, operand 6, single buffered']
    #allocation9 [shape = 's32[1]{0}', space=sflag, size = 0x4, scoped, tag = 'scoped memory for tpu_custom_call.1']
    #allocation10 [shape = 'u8[512]{0}', space=vmem, size = 0x400, scoped, tag = 'input window, operand 7, single buffered']
    #allocation11 [shape = 'u8[8192]{0}', space=vmem, size = 0x2000, scoped, tag = 'input window, operand 8, single buffered']
    #allocation12 [shape = 's32[1]{0}', space=sflag, size = 0x4, scoped, tag = 'scoped memory for tpu_custom_call.1']
    #allocation13 [shape = 'u8[512]{0}', space=vmem, size = 0x400, scoped, tag = 'input window, operand 9, single buffered']
    #allocation14 [shape = 'u8[8192]{0}', space=vmem, size = 0x2000, scoped, tag = 'output window, operand 0']
    %23 = vsyncpa [#allocation3], 0
    %s24 = scalar_lea.sflag [#allocation3], 1
    %25 = vsyncpa %s24, 0
    %26 = vsyncpa [#allocation6], 0
    %27 = vsyncpa [#allocation9], 0
    %28 = vsyncpa [#allocation12], 0
    %29 = vsyncpa [#allocation4], 0
    %s30 = scalar_lea.sflag [#allocation4], 1
    %31 = vsyncpa %s30, 0
    loop: start=0, step=1, limit=4
    $region2: #{tpu_custom_call.1} parent=1 // loop_pre_header
      _
    $region3: #{tpu_custom_call.1} parent=1 // loop_header
      %s33 = sphi 0, %s37
      %p34 = scmp.ge.s32.totalorder %s33, 4
      %s43 = sphi 0, %s45
      %s46 = sphi 0, %s43
      %s47 = sphi 0, %s46
      %s63 = sphi 0, %s47
      %s69 = sphi 0, %s71
      %s72 = sphi 0, %s69
      %s73 = sphi 0, %s72
      %s89 = sphi 0, %s73
      %s93 = sphi 0, %s93
      %s95 = sphi 0, %s93
      %s96 = sphi 0, %s95
      %s110 = sphi 0, %s96
      %s114 = sphi 0, %s114
      %s116 = sphi 0, %s114
      %s117 = sphi 0, %s116
      %s131 = sphi 0, %s117
      %s135 = sphi 0, %s135
      %s137 = sphi 0, %s135
      %s138 = sphi 0, %s137
      %s152 = sphi 0, %s138
      %s156 = sphi 0, %s156
      %s158 = sphi 0, %s156
      %s159 = sphi 0, %s158
      %s173 = sphi 0, %s159
      %s177 = sphi 0, %s177
      %s179 = sphi 0, %s177
      %s180 = sphi 0, %s179
      %s194 = sphi 0, %s180
      %s198 = sphi 0, %s198
      %s200 = sphi 0, %s198
      %s201 = sphi 0, %s200
      %s215 = sphi 0, %s201
      %s219 = sphi 0, %s219
      %s221 = sphi 0, %s219
      %s222 = sphi 0, %s221
      %s236 = sphi 0, %s222
      %s240 = sphi 0, %s240
      %s242 = sphi 0, %s240
      %s243 = sphi 0, %s242
      %s257 = sphi 0, %s243
      %s261 = sphi 0, %s261
      %s263 = sphi 0, %s261
      %s264 = sphi 0, %s263
      %s278 = sphi 0, %s264
      %s282 = sphi 0, %s282
      %s284 = sphi 0, %s282
      %s285 = sphi 0, %s284
      %s299 = sphi 0, %s285
      %s303 = sphi 0, %s303
      %s305 = sphi 0, %s303
      %s306 = sphi 0, %s305
      %s320 = sphi 0, %s306
      %s324 = sphi 0, %s324
      %s326 = sphi 0, %s324
      %s327 = sphi 0, %s326
      %s341 = sphi 0, %s327
      %s345 = sphi 0, %s345
      %s347 = sphi 0, %s345
      %s348 = sphi 0, %s347
      %s362 = sphi 0, %s348
      %s366 = sphi 0, %s366
      %s368 = sphi 0, %s366
      %s369 = sphi 0, %s368
      %s383 = sphi 0, %s369
      %s387 = sphi 0, %s387
      %s389 = sphi 0, %s387
      %s390 = sphi 0, %s389
      %s404 = sphi 0, %s390
      %s408 = sphi 0, %s408
      %s410 = sphi 0, %s408
      %s411 = sphi 0, %s410
      %s425 = sphi 0, %s411
      %s431 = sphi 0, %s433
      %s434 = sphi 0, %s431
      %s435 = sphi 0, %s434
      %s451 = sphi 0, %s435
    $region4: #{tpu_custom_call.1} parent=1 // loop_header_branch
      %36 = sbr.rel (%p34) target = $region8
    $region5: #{tpu_custom_call.1} parent=1 // loop_body
      %s38 = ssub.s32 %s33, 1
      %s39 = ssub.s32 %s33, 2
      %s40 = sadd.s32 %s33, 1
      %s41 = ssub.s32 %s33, %s40
      %p42 = scmp.eq.s32.totalorder %s41, 0
      %s44 = sadd.s32 %s43, 1
      %s45 = scalar_select %p42, %s43, %s44
      %p48 = pneg %p42
      %p49 = scmp.eq.s32.totalorder %s33, 1
      %p50 = por %p48, %p49
      %p51 = scmp.ne.s32.totalorder %s43, %s46
      %p52 = scmp.eq.s32.totalorder %s33, 0
      %p53 = por %p51, %p52
      %p54 = scmp.ne.s32.totalorder %s43, %s46
      %p55 = scmp.eq.s32.totalorder %s38, 1
      %p56 = por %p54, %p55
      %p57 = scmp.ne.s32.totalorder %s46, %s47
      %p58 = scmp.eq.s32.totalorder %s38, 0
      %p59 = por %p57, %p58
      %p60 = scmp.ne.s32.totalorder %s46, %s47
      %p61 = scmp.eq.s32.totalorder %s39, 1
      %p62 = por %p60, %p61
      %p64 = scmp.ne.s32.totalorder %s47, %s63
      %p65 = scmp.eq.s32.totalorder %s39, 0
      %p66 = por %p64, %p65
      %s67 = ssub.s32 %s33, %s40
      %p68 = scmp.eq.s32.totalorder %s67, 0
      %s70 = sadd.s32 %s69, 1
      %s71 = scalar_select %p68, %s69, %s70
      %p74 = pneg %p68
      %p75 = scmp.eq.s32.totalorder %s33, 1
      %p76 = por %p74, %p75
      %p77 = scmp.ne.s32.totalorder %s69, %s72
      %p78 = scmp.eq.s32.totalorder %s33, 0
      %p79 = por %p77, %p78
      %p80 = scmp.ne.s32.totalorder %s69, %s72
      %p81 = scmp.eq.s32.totalorder %s38, 1
      %p82 = por %p80, %p81
      %p83 = scmp.ne.s32.totalorder %s72, %s73
      %p84 = scmp.eq.s32.totalorder %s38, 0
      %p85 = por %p83, %p84
      %p86 = scmp.ne.s32.totalorder %s72, %s73
      %p87 = scmp.eq.s32.totalorder %s39, 1
      %p88 = por %p86, %p87
      %p90 = scmp.ne.s32.totalorder %s73, %s89
      %p91 = scmp.eq.s32.totalorder %s39, 0
      %p92 = por %p90, %p91
      %s94 = sadd.s32 %s93, 1
      %p97 = scmp.eq.s32.totalorder %s33, 1
      %p98 = scmp.ne.s32.totalorder %s93, %s95
      %p99 = scmp.eq.s32.totalorder %s33, 0
      %p100 = por %p98, %p99
      %p101 = scmp.ne.s32.totalorder %s93, %s95
      %p102 = scmp.eq.s32.totalorder %s38, 1
      %p103 = por %p101, %p102
      %p104 = scmp.ne.s32.totalorder %s95, %s96
      %p105 = scmp.eq.s32.totalorder %s38, 0
      %p106 = por %p104, %p105
      %p107 = scmp.ne.s32.totalorder %s95, %s96
      %p108 = scmp.eq.s32.totalorder %s39, 1
      %p109 = por %p107, %p108
      %p111 = scmp.ne.s32.totalorder %s96, %s110
      %p112 = scmp.eq.s32.totalorder %s39, 0
      %p113 = por %p111, %p112
      %s115 = sadd.s32 %s114, 1
      %p118 = scmp.eq.s32.totalorder %s33, 1
      %p119 = scmp.ne.s32.totalorder %s114, %s116
      %p120 = scmp.eq.s32.totalorder %s33, 0
      %p121 = por %p119, %p120
      %p122 = scmp.ne.s32.totalorder %s114, %s116
      %p123 = scmp.eq.s32.totalorder %s38, 1
      %p124 = por %p122, %p123
      %p125 = scmp.ne.s32.totalorder %s116, %s117
      %p126 = scmp.eq.s32.totalorder %s38, 0
      %p127 = por %p125, %p126
      %p128 = scmp.ne.s32.totalorder %s116, %s117
      %p129 = scmp.eq.s32.totalorder %s39, 1
      %p130 = por %p128, %p129
      %p132 = scmp.ne.s32.totalorder %s117, %s131
      %p133 = scmp.eq.s32.totalorder %s39, 0
      %p134 = por %p132, %p133
      %s136 = sadd.s32 %s135, 1
      %p139 = scmp.eq.s32.totalorder %s33, 1
      %p140 = scmp.ne.s32.totalorder %s135, %s137
      %p141 = scmp.eq.s32.totalorder %s33, 0
      %p142 = por %p140, %p141
      %p143 = scmp.ne.s32.totalorder %s135, %s137
      %p144 = scmp.eq.s32.totalorder %s38, 1
      %p145 = por %p143, %p144
      %p146 = scmp.ne.s32.totalorder %s137, %s138
      %p147 = scmp.eq.s32.totalorder %s38, 0
      %p148 = por %p146, %p147
      %p149 = scmp.ne.s32.totalorder %s137, %s138
      %p150 = scmp.eq.s32.totalorder %s39, 1
      %p151 = por %p149, %p150
      %p153 = scmp.ne.s32.totalorder %s138, %s152
      %p154 = scmp.eq.s32.totalorder %s39, 0
      %p155 = por %p153, %p154
      %s157 = sadd.s32 %s156, 1
      %p160 = scmp.eq.s32.totalorder %s33, 1
      %p161 = scmp.ne.s32.totalorder %s156, %s158
      %p162 = scmp.eq.s32.totalorder %s33, 0
      %p163 = por %p161, %p162
      %p164 = scmp.ne.s32.totalorder %s156, %s158
      %p165 = scmp.eq.s32.totalorder %s38, 1
      %p166 = por %p164, %p165
      %p167 = scmp.ne.s32.totalorder %s158, %s159
      %p168 = scmp.eq.s32.totalorder %s38, 0
      %p169 = por %p167, %p168
      %p170 = scmp.ne.s32.totalorder %s158, %s159
      %p171 = scmp.eq.s32.totalorder %s39, 1
      %p172 = por %p170, %p171
      %p174 = scmp.ne.s32.totalorder %s159, %s173
      %p175 = scmp.eq.s32.totalorder %s39, 0
      %p176 = por %p174, %p175
      %s178 = sadd.s32 %s177, 1
      %p181 = scmp.eq.s32.totalorder %s33, 1
      %p182 = scmp.ne.s32.totalorder %s177, %s179
      %p183 = scmp.eq.s32.totalorder %s33, 0
      %p184 = por %p182, %p183
      %p185 = scmp.ne.s32.totalorder %s177, %s179
      %p186 = scmp.eq.s32.totalorder %s38, 1
      %p187 = por %p185, %p186
      %p188 = scmp.ne.s32.totalorder %s179, %s180
      %p189 = scmp.eq.s32.totalorder %s38, 0
      %p190 = por %p188, %p189
      %p191 = scmp.ne.s32.totalorder %s179, %s180
      %p192 = scmp.eq.s32.totalorder %s39, 1
      %p193 = por %p191, %p192
      %p195 = scmp.ne.s32.totalorder %s180, %s194
      %p196 = scmp.eq.s32.totalorder %s39, 0
      %p197 = por %p195, %p196
      %s199 = sadd.s32 %s198, 1
      %p202 = scmp.eq.s32.totalorder %s33, 1
      %p203 = scmp.ne.s32.totalorder %s198, %s200
      %p204 = scmp.eq.s32.totalorder %s33, 0
      %p205 = por %p203, %p204
      %p206 = scmp.ne.s32.totalorder %s198, %s200
      %p207 = scmp.eq.s32.totalorder %s38, 1
      %p208 = por %p206, %p207
      %p209 = scmp.ne.s32.totalorder %s200, %s201
      %p210 = scmp.eq.s32.totalorder %s38, 0
      %p211 = por %p209, %p210
      %p212 = scmp.ne.s32.totalorder %s200, %s201
      %p213 = scmp.eq.s32.totalorder %s39, 1
      %p214 = por %p212, %p213
      %p216 = scmp.ne.s32.totalorder %s201, %s215
      %p217 = scmp.eq.s32.totalorder %s39, 0
      %p218 = por %p216, %p217
      %s220 = sadd.s32 %s219, 1
      %p223 = scmp.eq.s32.totalorder %s33, 1
      %p224 = scmp.ne.s32.totalorder %s219, %s221
      %p225 = scmp.eq.s32.totalorder %s33, 0
      %p226 = por %p224, %p225
      %p227 = scmp.ne.s32.totalorder %s219, %s221
      %p228 = scmp.eq.s32.totalorder %s38, 1
      %p229 = por %p227, %p228
      %p230 = scmp.ne.s32.totalorder %s221, %s222
      %p231 = scmp.eq.s32.totalorder %s38, 0
      %p232 = por %p230, %p231
      %p233 = scmp.ne.s32.totalorder %s221, %s222
      %p234 = scmp.eq.s32.totalorder %s39, 1
      %p235 = por %p233, %p234
      %p237 = scmp.ne.s32.totalorder %s222, %s236
      %p238 = scmp.eq.s32.totalorder %s39, 0
      %p239 = por %p237, %p238
      %s241 = sadd.s32 %s240, 1
      %p244 = scmp.eq.s32.totalorder %s33, 1
      %p245 = scmp.ne.s32.totalorder %s240, %s242
      %p246 = scmp.eq.s32.totalorder %s33, 0
      %p247 = por %p245, %p246
      %p248 = scmp.ne.s32.totalorder %s240, %s242
      %p249 = scmp.eq.s32.totalorder %s38, 1
      %p250 = por %p248, %p249
      %p251 = scmp.ne.s32.totalorder %s242, %s243
      %p252 = scmp.eq.s32.totalorder %s38, 0
      %p253 = por %p251, %p252
      %p254 = scmp.ne.s32.totalorder %s242, %s243
      %p255 = scmp.eq.s32.totalorder %s39, 1
      %p256 = por %p254, %p255
      %p258 = scmp.ne.s32.totalorder %s243, %s257
      %p259 = scmp.eq.s32.totalorder %s39, 0
      %p260 = por %p258, %p259
      %s262 = sadd.s32 %s261, 1
      %p265 = scmp.eq.s32.totalorder %s33, 1
      %p266 = scmp.ne.s32.totalorder %s261, %s263
      %p267 = scmp.eq.s32.totalorder %s33, 0
      %p268 = por %p266, %p267
      %p269 = scmp.ne.s32.totalorder %s261, %s263
      %p270 = scmp.eq.s32.totalorder %s38, 1
      %p271 = por %p269, %p270
      %p272 = scmp.ne.s32.totalorder %s263, %s264
      %p273 = scmp.eq.s32.totalorder %s38, 0
      %p274 = por %p272, %p273
      %p275 = scmp.ne.s32.totalorder %s263, %s264
      %p276 = scmp.eq.s32.totalorder %s39, 1
      %p277 = por %p275, %p276
      %p279 = scmp.ne.s32.totalorder %s264, %s278
      %p280 = scmp.eq.s32.totalorder %s39, 0
      %p281 = por %p279, %p280
      %s283 = sadd.s32 %s282, 1
      %p286 = scmp.eq.s32.totalorder %s33, 1
      %p287 = scmp.ne.s32.totalorder %s282, %s284
      %p288 = scmp.eq.s32.totalorder %s33, 0
      %p289 = por %p287, %p288
      %p290 = scmp.ne.s32.totalorder %s282, %s284
      %p291 = scmp.eq.s32.totalorder %s38, 1
      %p292 = por %p290, %p291
      %p293 = scmp.ne.s32.totalorder %s284, %s285
      %p294 = scmp.eq.s32.totalorder %s38, 0
      %p295 = por %p293, %p294
      %p296 = scmp.ne.s32.totalorder %s284, %s285
      %p297 = scmp.eq.s32.totalorder %s39, 1
      %p298 = por %p296, %p297
      %p300 = scmp.ne.s32.totalorder %s285, %s299
      %p301 = scmp.eq.s32.totalorder %s39, 0
      %p302 = por %p300, %p301
      %s304 = sadd.s32 %s303, 1
      %p307 = scmp.eq.s32.totalorder %s33, 1
      %p308 = scmp.ne.s32.totalorder %s303, %s305
      %p309 = scmp.eq.s32.totalorder %s33, 0
      %p310 = por %p308, %p309
      %p311 = scmp.ne.s32.totalorder %s303, %s305
      %p312 = scmp.eq.s32.totalorder %s38, 1
      %p313 = por %p311, %p312
      %p314 = scmp.ne.s32.totalorder %s305, %s306
      %p315 = scmp.eq.s32.totalorder %s38, 0
      %p316 = por %p314, %p315
      %p317 = scmp.ne.s32.totalorder %s305, %s306
      %p318 = scmp.eq.s32.totalorder %s39, 1
      %p319 = por %p317, %p318
      %p321 = scmp.ne.s32.totalorder %s306, %s320
      %p322 = scmp.eq.s32.totalorder %s39, 0
      %p323 = por %p321, %p322
      %s325 = sadd.s32 %s324, 1
      %p328 = scmp.eq.s32.totalorder %s33, 1
      %p329 = scmp.ne.s32.totalorder %s324, %s326
      %p330 = scmp.eq.s32.totalorder %s33, 0
      %p331 = por %p329, %p330
      %p332 = scmp.ne.s32.totalorder %s324, %s326
      %p333 = scmp.eq.s32.totalorder %s38, 1
      %p334 = por %p332, %p333
      %p335 = scmp.ne.s32.totalorder %s326, %s327
      %p336 = scmp.eq.s32.totalorder %s38, 0
      %p337 = por %p335, %p336
      %p338 = scmp.ne.s32.totalorder %s326, %s327
      %p339 = scmp.eq.s32.totalorder %s39, 1
      %p340 = por %p338, %p339
      %p342 = scmp.ne.s32.totalorder %s327, %s341
      %p343 = scmp.eq.s32.totalorder %s39, 0
      %p344 = por %p342, %p343
      %s346 = sadd.s32 %s345, 1
      %p349 = scmp.eq.s32.totalorder %s33, 1
      %p350 = scmp.ne.s32.totalorder %s345, %s347
      %p351 = scmp.eq.s32.totalorder %s33, 0
      %p352 = por %p350, %p351
      %p353 = scmp.ne.s32.totalorder %s345, %s347
      %p354 = scmp.eq.s32.totalorder %s38, 1
      %p355 = por %p353, %p354
      %p356 = scmp.ne.s32.totalorder %s347, %s348
      %p357 = scmp.eq.s32.totalorder %s38, 0
      %p358 = por %p356, %p357
      %p359 = scmp.ne.s32.totalorder %s347, %s348
      %p360 = scmp.eq.s32.totalorder %s39, 1
      %p361 = por %p359, %p360
      %p363 = scmp.ne.s32.totalorder %s348, %s362
      %p364 = scmp.eq.s32.totalorder %s39, 0
      %p365 = por %p363, %p364
      %s367 = sadd.s32 %s366, 1
      %p370 = scmp.eq.s32.totalorder %s33, 1
      %p371 = scmp.ne.s32.totalorder %s366, %s368
      %p372 = scmp.eq.s32.totalorder %s33, 0
      %p373 = por %p371, %p372
      %p374 = scmp.ne.s32.totalorder %s366, %s368
      %p375 = scmp.eq.s32.totalorder %s38, 1
      %p376 = por %p374, %p375
      %p377 = scmp.ne.s32.totalorder %s368, %s369
      %p378 = scmp.eq.s32.totalorder %s38, 0
      %p379 = por %p377, %p378
      %p380 = scmp.ne.s32.totalorder %s368, %s369
      %p381 = scmp.eq.s32.totalorder %s39, 1
      %p382 = por %p380, %p381
      %p384 = scmp.ne.s32.totalorder %s369, %s383
      %p385 = scmp.eq.s32.totalorder %s39, 0
      %p386 = por %p384, %p385
      %s388 = sadd.s32 %s387, 1
      %p391 = scmp.eq.s32.totalorder %s33, 1
      %p392 = scmp.ne.s32.totalorder %s387, %s389
      %p393 = scmp.eq.s32.totalorder %s33, 0
      %p394 = por %p392, %p393
      %p395 = scmp.ne.s32.totalorder %s387, %s389
      %p396 = scmp.eq.s32.totalorder %s38, 1
      %p397 = por %p395, %p396
      %p398 = scmp.ne.s32.totalorder %s389, %s390
      %p399 = scmp.eq.s32.totalorder %s38, 0
      %p400 = por %p398, %p399
      %p401 = scmp.ne.s32.totalorder %s389, %s390
      %p402 = scmp.eq.s32.totalorder %s39, 1
      %p403 = por %p401, %p402
      %p405 = scmp.ne.s32.totalorder %s390, %s404
      %p406 = scmp.eq.s32.totalorder %s39, 0
      %p407 = por %p405, %p406
      %s409 = sadd.s32 %s408, 1
      %p412 = scmp.eq.s32.totalorder %s33, 1
      %p413 = scmp.ne.s32.totalorder %s408, %s410
      %p414 = scmp.eq.s32.totalorder %s33, 0
      %p415 = por %p413, %p414
      %p416 = scmp.ne.s32.totalorder %s408, %s410
      %p417 = scmp.eq.s32.totalorder %s38, 1
      %p418 = por %p416, %p417
      %p419 = scmp.ne.s32.totalorder %s410, %s411
      %p420 = scmp.eq.s32.totalorder %s38, 0
      %p421 = por %p419, %p420
      %p422 = scmp.ne.s32.totalorder %s410, %s411
      %p423 = scmp.eq.s32.totalorder %s39, 1
      %p424 = por %p422, %p423
      %p426 = scmp.ne.s32.totalorder %s411, %s425
      %p427 = scmp.eq.s32.totalorder %s39, 0
      %p428 = por %p426, %p427
      %s429 = ssub.s32 %s33, %s40
      %p430 = scmp.eq.s32.totalorder %s429, 0
      %s432 = sadd.s32 %s431, 1
      %s433 = scalar_select %p430, %s431, %s432
      %p436 = pneg %p430
      %p437 = scmp.eq.s32.totalorder %s33, 1
      %p438 = por %p436, %p437
      %p439 = scmp.ne.s32.totalorder %s431, %s434
      %p440 = scmp.eq.s32.totalorder %s33, 0
      %p441 = por %p439, %p440
      %p442 = scmp.ne.s32.totalorder %s431, %s434
      %p443 = scmp.eq.s32.totalorder %s38, 1
      %p444 = por %p442, %p443
      %p445 = scmp.ne.s32.totalorder %s434, %s435
      %p446 = scmp.eq.s32.totalorder %s38, 0
      %p447 = por %p445, %p446
      %p448 = scmp.ne.s32.totalorder %s434, %s435
      %p449 = scmp.eq.s32.totalorder %s39, 1
      %p450 = por %p448, %p449
      %p452 = scmp.ne.s32.totalorder %s435, %s451
      %p453 = scmp.eq.s32.totalorder %s39, 0
      %p454 = por %p452, %p453
      %p455 = scmp.le.s32.totalorder 1, %s33
      %p456 = scmp.lt.s32.totalorder %s33, 3
      %p457 = pnand %p455, %p456
      %p458 = pneg %p457
      // Predicated region
      $region9: #{tpu_custom_call.1} parent=5 // pred_check
        _
      $region10: #{tpu_custom_call.1} parent=5 // pred_check_branch
        %460 = sbr.rel (%p457) target = $region12
      $region11: #{tpu_custom_call.1} parent=5 // pred_region
        %s461 = ssub.s32 %s33, 1
        // Predicated region
        $region13: #{tpu_custom_call.1} parent=11 // pred_check
          %p462 = pneg %p106
        $region14: #{tpu_custom_call.1} parent=11 // pred_check_branch
          %464 = sbr.rel (%p462) target = $region16
        $region15: #{tpu_custom_call.1} parent=11 // pred_region
          _
        $region16: #{tpu_custom_call.1} parent=11 // pred_fallthru
          _
        // Predicated region
        $region17: #{tpu_custom_call.1} parent=11 // pred_check
          %p465 = pneg %p127
        $region18: #{tpu_custom_call.1} parent=11 // pred_check_branch
          %467 = sbr.rel (%p465) target = $region20
        $region19: #{tpu_custom_call.1} parent=11 // pred_region
          %s469 = ssub.s32 16, 16
          %470 = vsyncadd [#allocation6], %s469
          %s472 = sshll.u32 [#allocation5], 4
          %s473 = int_to_ptr.vmem [resolvable:$true] %s472
          %475 = dma.hbm_to_vmem [thread:$0]  %s3, 16, %s473, [#allocation6]
        $region20: #{tpu_custom_call.1} parent=11 // pred_fallthru
          _
        // Predicated region
        $region21: #{tpu_custom_call.1} parent=11 // pred_check
          %p476 = pneg %p148
        $region22: #{tpu_custom_call.1} parent=11 // pred_check_branch
          %478 = sbr.rel (%p476) target = $region24
        $region23: #{tpu_custom_call.1} parent=11 // pred_region
          _
        $region24: #{tpu_custom_call.1} parent=11 // pred_fallthru
          _
        // Predicated region
        $region25: #{tpu_custom_call.1} parent=11 // pred_check
          %p479 = pneg %p169
        $region26: #{tpu_custom_call.1} parent=11 // pred_check_branch
          %481 = sbr.rel (%p479) target = $region28
        $region27: #{tpu_custom_call.1} parent=11 // pred_region
          %s483 = ssub.s32 16, 16
          %484 = vsyncadd [#allocation6], %s483
          %s486 = sshll.u32 [#allocation7], 4
          %s487 = int_to_ptr.vmem [resolvable:$true] %s486
          %489 = dma.hbm_to_vmem [thread:$0]  %s5, 16, %s487, [#allocation6]
        $region28: #{tpu_custom_call.1} parent=11 // pred_fallthru
          _
        // Predicated region
        $region29: #{tpu_custom_call.1} parent=11 // pred_check
          %p490 = pneg %p190
        $region30: #{tpu_custom_call.1} parent=11 // pred_check_branch
          %492 = sbr.rel (%p490) target = $region32
        $region31: #{tpu_custom_call.1} parent=11 // pred_region
          %s494 = ssub.s32 256, 256
          %495 = vsyncadd [#allocation9], %s494
          %s496 = sshll.u32 [#allocation8], 4
          %s497 = int_to_ptr.vmem [resolvable:$true] %s496
          %502 = dma.hbm_to_vmem [thread:$0]  %s6, 256, %s497, [#allocation9], 64, 64, 4
        $region32: #{tpu_custom_call.1} parent=11 // pred_fallthru
          _
        // Predicated region
        $region33: #{tpu_custom_call.1} parent=11 // pred_check
          %p503 = pneg %p211
        $region34: #{tpu_custom_call.1} parent=11 // pred_check_branch
          %505 = sbr.rel (%p503) target = $region36
        $region35: #{tpu_custom_call.1} parent=11 // pred_region
          %s507 = ssub.s32 16, 16
          %508 = vsyncadd [#allocation9], %s507
          %s510 = sshll.u32 [#allocation10], 4
          %s511 = int_to_ptr.vmem [resolvable:$true] %s510
          %513 = dma.hbm_to_vmem [thread:$0]  %s7, 16, %s511, [#allocation9]
        $region36: #{tpu_custom_call.1} parent=11 // pred_fallthru
          _
        // Predicated region
        $region37: #{tpu_custom_call.1} parent=11 // pred_check
          %p514 = pneg %p232
        $region38: #{tpu_custom_call.1} parent=11 // pred_check_branch
          %516 = sbr.rel (%p514) target = $region40
        $region39: #{tpu_custom_call.1} parent=11 // pred_region
          %s518 = ssub.s32 256, 256
          %519 = vsyncadd [#allocation12], %s518
          %s520 = sshll.u32 [#allocation11], 4
          %s521 = int_to_ptr.vmem [resolvable:$true] %s520
          %526 = dma.hbm_to_vmem [thread:$0]  %s8, 256, %s521, [#allocation12], 64, 64, 4
        $region40: #{tpu_custom_call.1} parent=11 // pred_fallthru
          _
        // Predicated region
        $region41: #{tpu_custom_call.1} parent=11 // pred_check
          %p527 = pneg %p253
        $region42: #{tpu_custom_call.1} parent=11 // pred_check_branch
          %529 = sbr.rel (%p527) target = $region44
        $region43: #{tpu_custom_call.1} parent=11 // pred_region
          %s531 = ssub.s32 16, 16
          %532 = vsyncadd [#allocation12], %s531
          %s534 = sshll.u32 [#allocation13], 4
          %s535 = int_to_ptr.vmem [resolvable:$true] %s534
          %537 = dma.hbm_to_vmem [thread:$0]  %s9, 16, %s535, [#allocation12]
        $region44: #{tpu_custom_call.1} parent=11 // pred_fallthru
          _
        // Predicated region
        $region45: #{tpu_custom_call.1} parent=11 // pred_check
          %p538 = pneg %p274
        $region46: #{tpu_custom_call.1} parent=11 // pred_check_branch
          %540 = sbr.rel (%p538) target = $region48
        $region47: #{tpu_custom_call.1} parent=11 // pred_region
          _
        $region48: #{tpu_custom_call.1} parent=11 // pred_fallthru
          _
        // Predicated region
        $region49: #{tpu_custom_call.1} parent=11 // pred_check
          %p541 = pneg %p295
        $region50: #{tpu_custom_call.1} parent=11 // pred_check_branch
          %543 = sbr.rel (%p541) target = $region52
        $region51: #{tpu_custom_call.1} parent=11 // pred_region
          _
        $region52: #{tpu_custom_call.1} parent=11 // pred_fallthru
          _
        // Predicated region
        $region53: #{tpu_custom_call.1} parent=11 // pred_check
          %p544 = pneg %p316
        $region54: #{tpu_custom_call.1} parent=11 // pred_check_branch
          %546 = sbr.rel (%p544) target = $region56
        $region55: #{tpu_custom_call.1} parent=11 // pred_region
          _
        $region56: #{tpu_custom_call.1} parent=11 // pred_fallthru
          _
        // Predicated region
        $region57: #{tpu_custom_call.1} parent=11 // pred_check
          %p547 = pneg %p337
        $region58: #{tpu_custom_call.1} parent=11 // pred_check_branch
          %549 = sbr.rel (%p547) target = $region60
        $region59: #{tpu_custom_call.1} parent=11 // pred_region
          _
        $region60: #{tpu_custom_call.1} parent=11 // pred_fallthru
          _
        // Predicated region
        $region61: #{tpu_custom_call.1} parent=11 // pred_check
          %p550 = pneg %p358
        $region62: #{tpu_custom_call.1} parent=11 // pred_check_branch
          %552 = sbr.rel (%p550) target = $region64
        $region63: #{tpu_custom_call.1} parent=11 // pred_region
          _
        $region64: #{tpu_custom_call.1} parent=11 // pred_fallthru
          _
        // Predicated region
        $region65: #{tpu_custom_call.1} parent=11 // pred_check
          %p553 = pneg %p379
        $region66: #{tpu_custom_call.1} parent=11 // pred_check_branch
          %555 = sbr.rel (%p553) target = $region68
        $region67: #{tpu_custom_call.1} parent=11 // pred_region
          _
        $region68: #{tpu_custom_call.1} parent=11 // pred_fallthru
          _
        // Predicated region
        $region69: #{tpu_custom_call.1} parent=11 // pred_check
          %p556 = pneg %p400
        $region70: #{tpu_custom_call.1} parent=11 // pred_check_branch
          %558 = sbr.rel (%p556) target = $region72
        $region71: #{tpu_custom_call.1} parent=11 // pred_region
          _
        $region72: #{tpu_custom_call.1} parent=11 // pred_fallthru
          _
        // Predicated region
        $region73: #{tpu_custom_call.1} parent=11 // pred_check
          %p559 = pneg %p421
        $region74: #{tpu_custom_call.1} parent=11 // pred_check_branch
          %561 = sbr.rel (%p559) target = $region76
        $region75: #{tpu_custom_call.1} parent=11 // pred_region
          _
        $region76: #{tpu_custom_call.1} parent=11 // pred_fallthru
          _
      $region12: #{tpu_custom_call.1} parent=5 // pred_fallthru
        _
      %p562 = scmp.lt.s32.totalorder %s33, 2
      // Predicated region
      $region77: #{tpu_custom_call.1} parent=5 // pred_check
        %p563 = pneg %p562
      $region78: #{tpu_custom_call.1} parent=5 // pred_check_branch
        %565 = sbr.rel (%p563) target = $region80
      $region79: #{tpu_custom_call.1} parent=5 // pred_region
        // Predicated region
        $region81: #{tpu_custom_call.1} parent=79 // pred_check
          %p566 = pneg %p53
        $region82: #{tpu_custom_call.1} parent=79 // pred_check_branch
          %568 = sbr.rel (%p566) target = $region84
        $region83: #{tpu_custom_call.1} parent=79 // pred_region
          %p569 = scmp.lt.s32.totalorder %s33, 1
          %s570 = scalar_select %p569, %s33, 1
          %s571 = smul.addr %s570, 8
          %s572 = scalar_lea.vmem %s0, %s571
        $region84: #{tpu_custom_call.1} parent=79 // pred_fallthru
          _
        // Predicated region
        $region85: #{tpu_custom_call.1} parent=79 // pred_check
          %p573 = pneg %p79
        $region86: #{tpu_custom_call.1} parent=79 // pred_check_branch
          %575 = sbr.rel (%p573) target = $region88
        $region87: #{tpu_custom_call.1} parent=79 // pred_region
          %s576 = sand.u32 %s69, 1
          %s577 = scalar_lea.sflag [#allocation3], %s576
          %s578 = sand.u32 %s69, 1
          %s579 = scalar_lea.vmem [#allocation2], %s578
          %s581 = ssub.s32 16, 16
          %582 = vsyncadd %s577, %s581
          %s583 = smul.addr %s33, 16
          %s584 = scalar_lea.hbm %s1, %s583
          %s586 = sshll.u32 %s579, 4
          %s587 = int_to_ptr.vmem [resolvable:$true] %s586
          %589 = dma.hbm_to_vmem [thread:$0]  %s584, 16, %s587, %s577
        $region88: #{tpu_custom_call.1} parent=79 // pred_fallthru
          _
      $region80: #{tpu_custom_call.1} parent=5 // pred_fallthru
        _
      %p590 = scmp.le.s32.totalorder 1, %s33
      %p591 = scmp.lt.s32.totalorder %s33, 3
      %p592 = pnand %p590, %p591
      %p593 = pneg %p592
      // Predicated region
      $region89: #{tpu_custom_call.1} parent=5 // pred_check
        _
      $region90: #{tpu_custom_call.1} parent=5 // pred_check_branch
        %595 = sbr.rel (%p592) target = $region92
      $region91: #{tpu_custom_call.1} parent=5 // pred_region
        %s596 = ssub.s32 %s33, 1
        %s597 = sand.u32 %s72, 1
        %s598 = scalar_lea.sflag [#allocation3], %s597
        %s599 = sand.u32 %s72, 1
        %s600 = scalar_lea.vmem [#allocation2], %s599
        // Predicated region
        $region93: #{tpu_custom_call.1} parent=91 // pred_check
          %p601 = pneg %p85
        $region94: #{tpu_custom_call.1} parent=91 // pred_check_branch
          %603 = sbr.rel (%p601) target = $region96
        $region95: #{tpu_custom_call.1} parent=91 // pred_region
          %604 = dma.done %s598, 16
        $region96: #{tpu_custom_call.1} parent=91 // pred_fallthru
          _
        // Predicated region
        $region97: #{tpu_custom_call.1} parent=91 // pred_check
          %p605 = pneg %p127
        $region98: #{tpu_custom_call.1} parent=91 // pred_check_branch
          %607 = sbr.rel (%p605) target = $region100
        $region99: #{tpu_custom_call.1} parent=91 // pred_region
          %608 = dma.done [#allocation6], 16
        $region100: #{tpu_custom_call.1} parent=91 // pred_fallthru
          _
        // Predicated region
        $region101: #{tpu_custom_call.1} parent=91 // pred_check
          %p609 = pneg %p169
        $region102: #{tpu_custom_call.1} parent=91 // pred_check_branch
          %611 = sbr.rel (%p609) target = $region104
        $region103: #{tpu_custom_call.1} parent=91 // pred_region
          %612 = dma.done [#allocation6], 16
        $region104: #{tpu_custom_call.1} parent=91 // pred_fallthru
          _
        // Predicated region
        $region105: #{tpu_custom_call.1} parent=91 // pred_check
          %p613 = pneg %p190
        $region106: #{tpu_custom_call.1} parent=91 // pred_check_branch
          %615 = sbr.rel (%p613) target = $region108
        $region107: #{tpu_custom_call.1} parent=91 // pred_region
          %616 = dma.done [#allocation9], 256
        $region108: #{tpu_custom_call.1} parent=91 // pred_fallthru
          _
        // Predicated region
        $region109: #{tpu_custom_call.1} parent=91 // pred_check
          %p617 = pneg %p211
        $region110: #{tpu_custom_call.1} parent=91 // pred_check_branch
          %619 = sbr.rel (%p617) target = $region112
        $region111: #{tpu_custom_call.1} parent=91 // pred_region
          %620 = dma.done [#allocation9], 16
        $region112: #{tpu_custom_call.1} parent=91 // pred_fallthru
          _
        // Predicated region
        $region113: #{tpu_custom_call.1} parent=91 // pred_check
          %p621 = pneg %p232
        $region114: #{tpu_custom_call.1} parent=91 // pred_check_branch
          %623 = sbr.rel (%p621) target = $region116
        $region115: #{tpu_custom_call.1} parent=91 // pred_region
          %624 = dma.done [#allocation12], 256
        $region116: #{tpu_custom_call.1} parent=91 // pred_fallthru
          _
        // Predicated region
        $region117: #{tpu_custom_call.1} parent=91 // pred_check
          %p625 = pneg %p253
        $region118: #{tpu_custom_call.1} parent=91 // pred_check_branch
          %627 = sbr.rel (%p625) target = $region120
        $region119: #{tpu_custom_call.1} parent=91 // pred_region
          %628 = dma.done [#allocation12], 16
        $region120: #{tpu_custom_call.1} parent=91 // pred_fallthru
          _
        %p629 = scmp.lt.s32.totalorder %s38, 1
        %s630 = scalar_select %p629, %s38, 1
        %s631 = smul.addr %s630, 8
        %s632 = scalar_lea.vmem %s0, %s631
        %p633 = pneg %p59
        %p634 = pneg %p56
        %s635 = sand.u32 %s72, 1
        %s636 = scalar_lea.sflag [#allocation3], %s635
        %s637 = sand.u32 %s72, 1
        %s638 = scalar_lea.vmem [#allocation2], %s637
        %p639 = pneg %p85
        %p640 = pneg %p82
        %p641 = pneg %p106
        %p642 = pneg %p103
        %p643 = pneg %p127
        %p644 = pneg %p124
        %p645 = pneg %p148
        %p646 = pneg %p145
        %p647 = pneg %p169
        %p648 = pneg %p166
        %p649 = pneg %p190
        %p650 = pneg %p187
        %p651 = pneg %p211
        %p652 = pneg %p208
        %p653 = pneg %p232
        %p654 = pneg %p229
        %p655 = pneg %p253
        %p656 = pneg %p250
        %p657 = pneg %p274
        %p658 = pneg %p271
        %p659 = pneg %p295
        %p660 = pneg %p292
        %p661 = pneg %p316
        %p662 = pneg %p313
        %p663 = pneg %p337
        %p664 = pneg %p334
        %p665 = pneg %p358
        %p666 = pneg %p355
        %p667 = pneg %p379
        %p668 = pneg %p376
        %p669 = pneg %p400
        %p670 = pneg %p397
        %p671 = pneg %p421
        %p672 = pneg %p418
        %p673 = pneg %p447
        %p674 = pneg %p444
        %s675 = sand.u32 %s434, 1
        %s676 = scalar_lea.sflag [#allocation4], %s675
        %s677 = sand.u32 %s434, 1
        %s678 = smul.addr %s677, 8
        %s679 = scalar_lea.vmem [#allocation14], %s678
        %p680 = scmp.lt.s32.totalorder %s38, 1
        %s681 = scalar_select %p680, %s38, 1
        %s682 = smul.addr %s681, 8
        %s683 = scalar_lea.vmem %s0, %s682
        %v685 = vld [vmem:[%s683] sm:$0xff]
        %v686 = vpack.c.bf16 %v685, %v685
        %v687 = vld [vmem:[%s600] sm:$0x1]
        %vm688 = vcmp.ne.f32.partialorder %v687, 0.0
        %v689 = vld [vmem:[%s2] sm:$0xf]
        %v690 = vld [vmem:[%s2 + $0x4] sm:$0xf]
        %v691 = vld [vmem:[%s2 + $0x8] sm:$0xf]
        %v692 = vld [vmem:[%s2 + $0xc] sm:$0xf]
        %v693 = vld [vmem:[#allocation5] sm:$0x1]
        %v695 = vlaneseq
        %v696 = vshrl.u32 %v695, 7
        %v697 = vsub.s32 0, %v696
        %v698 = vrot.slane %v693, %v697
        %v704 = vunpack.c.l.b16 %v689
        %v705 = vunpack.c.l.b16 %v690
        %v706 = vunpack.c.l.b16 %v691
        %v707 = vunpack.c.l.b16 %v692
        %v708 = vpack.c.b16 %v705, %v704
        %v709 = vpack.c.b16 %v707, %v706
        %vm712 = vcmask 261120
        %v714 = vsel %vm712, %v686, 0
        %716 = vmatprep.subr.bf16.mxu0 0
        %717 = vmatpush1.bf16.msra.mxu0 0
        %718 = vmatprep.subr.bf16.mxu0 0
        %719 = vmatpush1.bf16.msra.mxu0 0
        %720 = vmatprep.subr.bf16.mxu0 0
        %721 = vmatpush1.bf16.msra.mxu0 0
        %722 = vmatprep.subr.bf16.mxu0 0
        %723 = vmatpush1.bf16.msra.mxu0 0
        %724 = vmatprep.subr.bf16.mxu0 0
        %725 = vmatpush1.bf16.msra.mxu0 0
        %726 = vmatprep.subr.bf16.mxu0 0
        %727 = vmatpush1.bf16.msra.mxu0 0
        %728 = vmatprep.subr.bf16.mxu0 0
        %729 = vmatpush1.bf16.msra.mxu0 %v709
        %730 = vmatprep.subr.bf16.mxu0 0
        %731 = vmatpush1.bf16.msra.mxu0 %v708
        %732 = vmatprep.subr.bf16.mxu0 0
        %733 = vmatpush2.bf16.msra.mxu0 0
        %734 = vmatprep.subr.bf16.mxu0 0
        %735 = vmatpush2.bf16.msra.mxu0 0
        %736 = vmatprep.subr.bf16.mxu0 0
        %737 = vmatpush2.bf16.msra.mxu0 0
        %738 = vmatprep.subr.bf16.mxu0 0
        %739 = vmatpush2.bf16.msra.mxu0 0
        %740 = vmatprep.subr.bf16.mxu0 0
        %741 = vmatpush2.bf16.msra.mxu0 0
        %742 = vmatprep.subr.bf16.mxu0 0
        %743 = vmatpush2.bf16.msra.mxu0 0
        %744 = vmatprep.subr.bf16.mxu0 0
        %745 = vmatpush2.bf16.msra.mxu0 0
        %746 = vmatprep.subr.bf16.mxu0 0
        %747 = vmatpush2.bf16.msra.mxu0 0
        %748 = vmatprep.mubr.bf16.mxu0 0
        %749 = vmatmul.mubr.bf16.gmra.mxu0 %v714
        %v750 = vpop.f32.mrf.mxu0
        %v751 = vadd.f32 %v698, %v750
        %v752 = vpop.f32.mrf.mxu0
        %v753 = vpop.f32.mrf.mxu0
        %v754 = vpop.f32.mrf.mxu0
        %755 = vdwg.mxu0
        %v756 = vld [vmem:[%s4] sm:$0xf]
        %v757 = vld [vmem:[%s4 + $0x4] sm:$0xf]
        %v758 = vld [vmem:[%s4 + $0x8] sm:$0xf]
        %v759 = vld [vmem:[%s4 + $0xc] sm:$0xf]
        %v760 = vld [vmem:[#allocation7] sm:$0x1]
        %v762 = vlaneseq
        %v763 = vshrl.u32 %v762, 7
        %v764 = vsub.s32 0, %v763
        %v765 = vrot.slane %v760, %v764
        %v771 = vunpack.c.l.b16 %v756
        %v772 = vunpack.c.l.b16 %v757
        %v773 = vunpack.c.l.b16 %v758
        %v774 = vunpack.c.l.b16 %v759
        %v775 = vpack.c.b16 %v772, %v771
        %v776 = vpack.c.b16 %v774, %v773
        %779 = vmatprep.subr.bf16.mxu0 0
        %780 = vmatpush1.bf16.msra.mxu0 0
        %781 = vmatprep.subr.bf16.mxu0 0
        %782 = vmatpush1.bf16.msra.mxu0 0
        %783 = vmatprep.subr.bf16.mxu0 0
        %784 = vmatpush1.bf16.msra.mxu0 0
        %785 = vmatprep.subr.bf16.mxu0 0
        %786 = vmatpush1.bf16.msra.mxu0 0
        %787 = vmatprep.subr.bf16.mxu0 0
        %788 = vmatpush1.bf16.msra.mxu0 0
        %789 = vmatprep.subr.bf16.mxu0 0
        %790 = vmatpush1.bf16.msra.mxu0 0
        %791 = vmatprep.subr.bf16.mxu0 0
        %792 = vmatpush1.bf16.msra.mxu0 %v776
        %793 = vmatprep.subr.bf16.mxu0 0
        %794 = vmatpush1.bf16.msra.mxu0 %v775
        %795 = vmatprep.subr.bf16.mxu0 0
        %796 = vmatpush2.bf16.msra.mxu0 0
        %797 = vmatprep.subr.bf16.mxu0 0
        %798 = vmatpush2.bf16.msra.mxu0 0
        %799 = vmatprep.subr.bf16.mxu0 0
        %800 = vmatpush2.bf16.msra.mxu0 0
        %801 = vmatprep.subr.bf16.mxu0 0
        %802 = vmatpush2.bf16.msra.mxu0 0
        %803 = vmatprep.subr.bf16.mxu0 0
        %804 = vmatpush2.bf16.msra.mxu0 0
        %805 = vmatprep.subr.bf16.mxu0 0
        %806 = vmatpush2.bf16.msra.mxu0 0
        %807 = vmatprep.subr.bf16.mxu0 0
        %808 = vmatpush2.bf16.msra.mxu0 0
        %809 = vmatprep.subr.bf16.mxu0 0
        %810 = vmatpush2.bf16.msra.mxu0 0
        %811 = vmatprep.mubr.bf16.mxu0 0
        %812 = vmatmul.mubr.bf16.gmra.mxu0 %v714
        %v813 = vpop.f32.mrf.mxu0
        %v814 = vadd.f32 %v765, %v813
        %v815 = vpop.f32.mrf.mxu0
        %v816 = vpop.f32.mrf.mxu0
        %v817 = vpop.f32.mrf.mxu0
        %818 = vdwg.mxu0
        %v819 = vld [vmem:[#allocation8] sm:$0xf]
        %v820 = vld [vmem:[#allocation8 + $0x4] sm:$0xf]
        %v821 = vld [vmem:[#allocation8 + $0x8] sm:$0xf]
        %v822 = vld [vmem:[#allocation8 + $0xc] sm:$0xf]
        %v823 = vld [vmem:[#allocation10] sm:$0x1]
        %v825 = vlaneseq
        %v826 = vshrl.u32 %v825, 7
        %v827 = vsub.s32 0, %v826
        %v828 = vrot.slane %v823, %v827
        %v834 = vunpack.c.l.b16 %v819
        %v835 = vunpack.c.l.b16 %v820
        %v836 = vunpack.c.l.b16 %v821
        %v837 = vunpack.c.l.b16 %v822
        %v838 = vpack.c.b16 %v835, %v834
        %v839 = vpack.c.b16 %v837, %v836
        %842 = vmatprep.subr.bf16.mxu0 0
        %843 = vmatpush1.bf16.msra.mxu0 0
        %844 = vmatprep.subr.bf16.mxu0 0
        %845 = vmatpush1.bf16.msra.mxu0 0
        %846 = vmatprep.subr.bf16.mxu0 0
        %847 = vmatpush1.bf16.msra.mxu0 0
        %848 = vmatprep.subr.bf16.mxu0 0
        %849 = vmatpush1.bf16.msra.mxu0 0
        %850 = vmatprep.subr.bf16.mxu0 0
        %851 = vmatpush1.bf16.msra.mxu0 0
        %852 = vmatprep.subr.bf16.mxu0 0
        %853 = vmatpush1.bf16.msra.mxu0 0
        %854 = vmatprep.subr.bf16.mxu0 0
        %855 = vmatpush1.bf16.msra.mxu0 %v839
        %856 = vmatprep.subr.bf16.mxu0 0
        %857 = vmatpush1.bf16.msra.mxu0 %v838
        %858 = vmatprep.subr.bf16.mxu0 0
        %859 = vmatpush2.bf16.msra.mxu0 0
        %860 = vmatprep.subr.bf16.mxu0 0
        %861 = vmatpush2.bf16.msra.mxu0 0
        %862 = vmatprep.subr.bf16.mxu0 0
        %863 = vmatpush2.bf16.msra.mxu0 0
        %864 = vmatprep.subr.bf16.mxu0 0
        %865 = vmatpush2.bf16.msra.mxu0 0
        %866 = vmatprep.subr.bf16.mxu0 0
        %867 = vmatpush2.bf16.msra.mxu0 0
        %868 = vmatprep.subr.bf16.mxu0 0
        %869 = vmatpush2.bf16.msra.mxu0 0
        %870 = vmatprep.subr.bf16.mxu0 0
        %871 = vmatpush2.bf16.msra.mxu0 0
        %872 = vmatprep.subr.bf16.mxu0 0
        %873 = vmatpush2.bf16.msra.mxu0 0
        %874 = vmatprep.mubr.bf16.mxu0 0
        %875 = vmatmul.mubr.bf16.gmra.mxu0 %v714
        %v876 = vpop.f32.mrf.mxu0
        %v877 = vadd.f32 %v828, %v876
        %v878 = vpop.f32.mrf.mxu0
        %v879 = vpop.f32.mrf.mxu0
        %v880 = vpop.f32.mrf.mxu0
        %881 = vdwg.mxu0
        %v882 = vpack.c.bf16 %v751, %v751
        %v883 = vpack.c.bf16 %v814, %v814
        %885 = vrot.lane.b32.xlu0 %v883, 120
        %v886 = vpop.permute.xlu0 %885
        %888 = vrot.lane.b32.xlu0 %v883, 112
        %v889 = vpop.permute.xlu0 %888
        %891 = vrot.lane.b32.xlu0 %v883, 104
        %v892 = vpop.permute.xlu0 %891
        %v894 = vpack.c.bf16 %v877, %v877
        %896 = vrot.lane.b32.xlu0 %v894, 120
        %v897 = vpop.permute.xlu0 %896
        %899 = vrot.lane.b32.xlu0 %v894, 112
        %v900 = vpop.permute.xlu0 %899
        %902 = vrot.lane.b32.xlu0 %v894, 104
        %v903 = vpop.permute.xlu0 %902
        %906 = vrot.lane.b32.xlu0 %v882, 120
        %v907 = vpop.permute.xlu0 %906
        %908 = vrot.lane.b32.xlu0 %v882, 112
        %v909 = vpop.permute.xlu0 %908
        %910 = vrot.lane.b32.xlu0 %v882, 104
        %v911 = vpop.permute.xlu0 %910
        %912 = vxpose.xlu0.c.b16.start [1/8] %v883, 128
        %913 = vxpose.xlu0.c.b16.cont [2/8] 0, 128
        %914 = vxpose.xlu0.c.b16.cont [3/8] 0, 128
        %915 = vxpose.xlu0.c.b16.cont [4/8] 0, 128
        %916 = vxpose.xlu0.c.b16.cont [5/8] 0, 128
        %917 = vxpose.xlu0.c.b16.cont [6/8] 0, 128
        %918 = vxpose.xlu0.c.b16.cont [7/8] 0, 128
        %919 = vxpose.xlu0.c.b16.end [8/8] 0, 128
        %v920 = vpop.trf.xlu0
        %v921 = vpop.trf.xlu0
        %v922 = vpop.trf.xlu0
        %v923 = vpop.trf.xlu0
        %v924 = vpop.trf.xlu0
        %v925 = vpop.trf.xlu0
        %v926 = vpop.trf.xlu0
        %v927 = vpop.trf.xlu0
        %928 = vxpose.xlu0.c.b16.start [1/8] %v886, 128
        %929 = vxpose.xlu0.c.b16.cont [2/8] 0, 128
        %930 = vxpose.xlu0.c.b16.cont [3/8] 0, 128
        %931 = vxpose.xlu0.c.b16.cont [4/8] 0, 128
        %932 = vxpose.xlu0.c.b16.cont [5/8] 0, 128
        %933 = vxpose.xlu0.c.b16.cont [6/8] 0, 128
        %934 = vxpose.xlu0.c.b16.cont [7/8] 0, 128
        %935 = vxpose.xlu0.c.b16.end [8/8] 0, 128
        %v936 = vpop.trf.xlu0
        %v937 = vpop.trf.xlu0
        %v938 = vpop.trf.xlu0
        %v939 = vpop.trf.xlu0
        %v940 = vpop.trf.xlu0
        %v941 = vpop.trf.xlu0
        %v942 = vpop.trf.xlu0
        %v943 = vpop.trf.xlu0
        %944 = vxpose.xlu0.c.b16.start [1/8] %v889, 128
        %945 = vxpose.xlu0.c.b16.cont [2/8] 0, 128
        %946 = vxpose.xlu0.c.b16.cont [3/8] 0, 128
        %947 = vxpose.xlu0.c.b16.cont [4/8] 0, 128
        %948 = vxpose.xlu0.c.b16.cont [5/8] 0, 128
        %949 = vxpose.xlu0.c.b16.cont [6/8] 0, 128
        %950 = vxpose.xlu0.c.b16.cont [7/8] 0, 128
        %951 = vxpose.xlu0.c.b16.end [8/8] 0, 128
        %v952 = vpop.trf.xlu0
        %v953 = vpop.trf.xlu0
        %v954 = vpop.trf.xlu0
        %v955 = vpop.trf.xlu0
        %v956 = vpop.trf.xlu0
        %v957 = vpop.trf.xlu0
        %v958 = vpop.trf.xlu0
        %v959 = vpop.trf.xlu0
        %960 = vxpose.xlu0.c.b16.start [1/8] %v892, 128
        %961 = vxpose.xlu0.c.b16.cont [2/8] 0, 128
        %962 = vxpose.xlu0.c.b16.cont [3/8] 0, 128
        %963 = vxpose.xlu0.c.b16.cont [4/8] 0, 128
        %964 = vxpose.xlu0.c.b16.cont [5/8] 0, 128
        %965 = vxpose.xlu0.c.b16.cont [6/8] 0, 128
        %966 = vxpose.xlu0.c.b16.cont [7/8] 0, 128
        %967 = vxpose.xlu0.c.b16.end [8/8] 0, 128
        %v968 = vpop.trf.xlu0
        %v969 = vpop.trf.xlu0
        %v970 = vpop.trf.xlu0
        %v971 = vpop.trf.xlu0
        %v972 = vpop.trf.xlu0
        %v973 = vpop.trf.xlu0
        %v974 = vpop.trf.xlu0
        %v975 = vpop.trf.xlu0
        %vm976 = vcmask 64512
        %v978 = vsel %vm976, %v882, 0
        %vm980 = vcmask 1043456
        %v982 = vsel %vm980, %v920, 0
        %984 = vmatprep.subr.bf16.mxu0 0
        %985 = vmatpush1.bf16.msra.mxu0 0
        %986 = vmatprep.subr.bf16.mxu0 0
        %987 = vmatpush1.bf16.msra.mxu0 0
        %988 = vmatprep.subr.bf16.mxu0 0
        %989 = vmatpush1.bf16.msra.mxu0 0
        %990 = vmatprep.subr.bf16.mxu0 0
        %991 = vmatpush1.bf16.msra.mxu0 0
        %992 = vmatprep.subr.bf16.mxu0 0
        %993 = vmatpush1.bf16.msra.mxu0 0
        %994 = vmatprep.subr.bf16.mxu0 0
        %995 = vmatpush1.bf16.msra.mxu0 0
        %996 = vmatprep.subr.bf16.mxu0 0
        %997 = vmatpush1.bf16.msra.mxu0 0
        %998 = vmatprep.subr.bf16.mxu0 0
        %999 = vmatpush1.bf16.msra.mxu0 %v982
        %1000 = vmatprep.subr.bf16.mxu0 0
        %1001 = vmatpush2.bf16.msra.mxu0 0
        %1002 = vmatprep.subr.bf16.mxu0 0
        %1003 = vmatpush2.bf16.msra.mxu0 0
        %1004 = vmatprep.subr.bf16.mxu0 0
        %1005 = vmatpush2.bf16.msra.mxu0 0
        %1006 = vmatprep.subr.bf16.mxu0 0
        %1007 = vmatpush2.bf16.msra.mxu0 0
        %1008 = vmatprep.subr.bf16.mxu0 0
        %1009 = vmatpush2.bf16.msra.mxu0 0
        %1010 = vmatprep.subr.bf16.mxu0 0
        %1011 = vmatpush2.bf16.msra.mxu0 0
        %1012 = vmatprep.subr.bf16.mxu0 0
        %1013 = vmatpush2.bf16.msra.mxu0 0
        %1014 = vmatprep.subr.bf16.mxu0 0
        %1015 = vmatpush2.bf16.msra.mxu0 0
        %1016 = vmatprep.mubr.bf16.mxu0 0
        %1017 = vmatmul.mubr.bf16.gmra.mxu0 %v978
        %v1018 = vpop.f32.mrf.mxu0
        %v1019 = vadd.f32 0.0, %v1018
        %v1020 = vpop.f32.mrf.mxu0
        %v1021 = vpop.f32.mrf.mxu0
        %v1022 = vpop.f32.mrf.mxu0
        %1023 = vdwg.mxu0
        %v1025 = vsel %vm976, %v907, 0
        %v1028 = vsel %vm980, %v936, 0
        %1030 = vmatprep.subr.bf16.mxu0 0
        %1031 = vmatpush1.bf16.msra.mxu0 0
        %1032 = vmatprep.subr.bf16.mxu0 0
        %1033 = vmatpush1.bf16.msra.mxu0 0
        %1034 = vmatprep.subr.bf16.mxu0 0
        %1035 = vmatpush1.bf16.msra.mxu0 0
        %1036 = vmatprep.subr.bf16.mxu0 0
        %1037 = vmatpush1.bf16.msra.mxu0 0
        %1038 = vmatprep.subr.bf16.mxu0 0
        %1039 = vmatpush1.bf16.msra.mxu0 0
        %1040 = vmatprep.subr.bf16.mxu0 0
        %1041 = vmatpush1.bf16.msra.mxu0 0
        %1042 = vmatprep.subr.bf16.mxu0 0
        %1043 = vmatpush1.bf16.msra.mxu0 0
        %1044 = vmatprep.subr.bf16.mxu0 0
        %1045 = vmatpush1.bf16.msra.mxu0 %v1028
        %1046 = vmatprep.subr.bf16.mxu0 0
        %1047 = vmatpush2.bf16.msra.mxu0 0
        %1048 = vmatprep.subr.bf16.mxu0 0
        %1049 = vmatpush2.bf16.msra.mxu0 0
        %1050 = vmatprep.subr.bf16.mxu0 0
        %1051 = vmatpush2.bf16.msra.mxu0 0
        %1052 = vmatprep.subr.bf16.mxu0 0
        %1053 = vmatpush2.bf16.msra.mxu0 0
        %1054 = vmatprep.subr.bf16.mxu0 0
        %1055 = vmatpush2.bf16.msra.mxu0 0
        %1056 = vmatprep.subr.bf16.mxu0 0
        %1057 = vmatpush2.bf16.msra.mxu0 0
        %1058 = vmatprep.subr.bf16.mxu0 0
        %1059 = vmatpush2.bf16.msra.mxu0 0
        %1060 = vmatprep.subr.bf16.mxu0 0
        %1061 = vmatpush2.bf16.msra.mxu0 0
        %1062 = vmatprep.mubr.bf16.mxu0 0
        %1063 = vmatmul.mubr.bf16.gmra.mxu0 %v1025
        %v1064 = vpop.f32.mrf.mxu0
        %v1065 = vadd.f32 0.0, %v1064
        %v1066 = vpop.f32.mrf.mxu0
        %v1067 = vpop.f32.mrf.mxu0
        %v1068 = vpop.f32.mrf.mxu0
        %1069 = vdwg.mxu0
        %v1071 = vsel %vm976, %v909, 0
        %v1074 = vsel %vm980, %v952, 0
        %1076 = vmatprep.subr.bf16.mxu0 0
        %1077 = vmatpush1.bf16.msra.mxu0 0
        %1078 = vmatprep.subr.bf16.mxu0 0
        %1079 = vmatpush1.bf16.msra.mxu0 0
        %1080 = vmatprep.subr.bf16.mxu0 0
        %1081 = vmatpush1.bf16.msra.mxu0 0
        %1082 = vmatprep.subr.bf16.mxu0 0
        %1083 = vmatpush1.bf16.msra.mxu0 0
        %1084 = vmatprep.subr.bf16.mxu0 0
        %1085 = vmatpush1.bf16.msra.mxu0 0
        %1086 = vmatprep.subr.bf16.mxu0 0
        %1087 = vmatpush1.bf16.msra.mxu0 0
        %1088 = vmatprep.subr.bf16.mxu0 0
        %1089 = vmatpush1.bf16.msra.mxu0 0
        %1090 = vmatprep.subr.bf16.mxu0 0
        %1091 = vmatpush1.bf16.msra.mxu0 %v1074
        %1092 = vmatprep.subr.bf16.mxu0 0
        %1093 = vmatpush2.bf16.msra.mxu0 0
        %1094 = vmatprep.subr.bf16.mxu0 0
        %1095 = vmatpush2.bf16.msra.mxu0 0
        %1096 = vmatprep.subr.bf16.mxu0 0
        %1097 = vmatpush2.bf16.msra.mxu0 0
        %1098 = vmatprep.subr.bf16.mxu0 0
        %1099 = vmatpush2.bf16.msra.mxu0 0
        %1100 = vmatprep.subr.bf16.mxu0 0
        %1101 = vmatpush2.bf16.msra.mxu0 0
        %1102 = vmatprep.subr.bf16.mxu0 0
        %1103 = vmatpush2.bf16.msra.mxu0 0
        %1104 = vmatprep.subr.bf16.mxu0 0
        %1105 = vmatpush2.bf16.msra.mxu0 0
        %1106 = vmatprep.subr.bf16.mxu0 0
        %1107 = vmatpush2.bf16.msra.mxu0 0
        %1108 = vmatprep.mubr.bf16.mxu0 0
        %1109 = vmatmul.mubr.bf16.gmra.mxu0 %v1071
        %v1110 = vpop.f32.mrf.mxu0
        %v1111 = vadd.f32 0.0, %v1110
        %v1112 = vpop.f32.mrf.mxu0
        %v1113 = vpop.f32.mrf.mxu0
        %v1114 = vpop.f32.mrf.mxu0
        %1115 = vdwg.mxu0
        %v1117 = vsel %vm976, %v911, 0
        %v1120 = vsel %vm980, %v968, 0
        %1122 = vmatprep.subr.bf16.mxu0 0
        %1123 = vmatpush1.bf16.msra.mxu0 0
        %1124 = vmatprep.subr.bf16.mxu0 0
        %1125 = vmatpush1.bf16.msra.mxu0 0
        %1126 = vmatprep.subr.bf16.mxu0 0
        %1127 = vmatpush1.bf16.msra.mxu0 0
        %1128 = vmatprep.subr.bf16.mxu0 0
        %1129 = vmatpush1.bf16.msra.mxu0 0
        %1130 = vmatprep.subr.bf16.mxu0 0
        %1131 = vmatpush1.bf16.msra.mxu0 0
        %1132 = vmatprep.subr.bf16.mxu0 0
        %1133 = vmatpush1.bf16.msra.mxu0 0
        %1134 = vmatprep.subr.bf16.mxu0 0
        %1135 = vmatpush1.bf16.msra.mxu0 0
        %1136 = vmatprep.subr.bf16.mxu0 0
        %1137 = vmatpush1.bf16.msra.mxu0 %v1120
        %1138 = vmatprep.subr.bf16.mxu0 0
        %1139 = vmatpush2.bf16.msra.mxu0 0
        %1140 = vmatprep.subr.bf16.mxu0 0
        %1141 = vmatpush2.bf16.msra.mxu0 0
        %1142 = vmatprep.subr.bf16.mxu0 0
        %1143 = vmatpush2.bf16.msra.mxu0 0
        %1144 = vmatprep.subr.bf16.mxu0 0
        %1145 = vmatpush2.bf16.msra.mxu0 0
        %1146 = vmatprep.subr.bf16.mxu0 0
        %1147 = vmatpush2.bf16.msra.mxu0 0
        %1148 = vmatprep.subr.bf16.mxu0 0
        %1149 = vmatpush2.bf16.msra.mxu0 0
        %1150 = vmatprep.subr.bf16.mxu0 0
        %1151 = vmatpush2.bf16.msra.mxu0 0
        %1152 = vmatprep.subr.bf16.mxu0 0
        %1153 = vmatpush2.bf16.msra.mxu0 0
        %1154 = vmatprep.mubr.bf16.mxu0 0
        %1155 = vmatmul.mubr.bf16.gmra.mxu0 %v1117
        %v1156 = vpop.f32.mrf.mxu0
        %v1157 = vadd.f32 0.0, %v1156
        %v1158 = vpop.f32.mrf.mxu0
        %v1159 = vpop.f32.mrf.mxu0
        %v1160 = vpop.f32.mrf.mxu0
        %1161 = vdwg.mxu0
        %v1162 = vsel %vm688, 1, 0
        %v1163 = vlaneseq
        %v1164 = vshrl.u32 %v1163, 7
        %v1165 = vsub.s32 0, %v1164
        %v1166 = vrot.slane %v1162, %v1165
        %vm1167 = vcmp.eq.s32.totalorder %v1166, 1
        %v1168 = vsel %vm1167, %v1019, -1e+09
        %v1169 = vsel %vm1167, %v1065, -1e+09
        %v1170 = vsel %vm1167, %v1111, -1e+09
        %v1171 = vsel %vm1167, %v1157, -1e+09
        %v1172 = vsel %vm976, %v1168, -inf
        %1173 = vmax.xlane.f32.xlu0 %v1172
        %v1174 = vpop.xlane.xlu0 %1173
        %v1175 = vsel %vm976, %v1169, -inf
        %1176 = vmax.xlane.f32.xlu0 %v1175
        %v1177 = vpop.xlane.xlu0 %1176
        %v1178 = vsel %vm976, %v1170, -inf
        %1179 = vmax.xlane.f32.xlu0 %v1178
        %v1180 = vpop.xlane.xlu0 %1179
        %v1181 = vsel %vm976, %v1171, -inf
        %1182 = vmax.xlane.f32.xlu0 %v1181
        %v1183 = vpop.xlane.xlu0 %1182
        %v1184 = vsub.f32 %v1168, %v1174
        %v1185 = vsub.f32 %v1169, %v1177
        %v1186 = vsub.f32 %v1170, %v1180
        %v1187 = vsub.f32 %v1171, %v1183
        %v1188 = vmul.f32 %v1184, 1.442695
        %v1189 = vpow.pop %v1188
        %v1190 = vmul.f32 %v1185, 1.442695
        %v1191 = vpow.pop %v1190
        %v1192 = vmul.f32 %v1186, 1.442695
        %v1193 = vpow.pop %v1192
        %v1194 = vmul.f32 %v1187, 1.442695
        %v1195 = vpow.pop %v1194
        %v1196 = vsel %vm976, %v1189, 0.0
        %1197 = vadd.xlane.f32.xlu0 %v1196
        %v1198 = vpop.xlane.xlu0 %1197
        %v1199 = vsel %vm976, %v1191, 0.0
        %1200 = vadd.xlane.f32.xlu0 %v1199
        %v1201 = vpop.xlane.xlu0 %1200
        %v1202 = vsel %vm976, %v1193, 0.0
        %1203 = vadd.xlane.f32.xlu0 %v1202
        %v1204 = vpop.xlane.xlu0 %1203
        %v1205 = vsel %vm976, %v1195, 0.0
        %1206 = vadd.xlane.f32.xlu0 %v1205
        %v1207 = vpop.xlane.xlu0 %1206
        %v1208 = vrcp.pop %v1198
        %v1209 = vrcp.pop %v1201
        %v1210 = vrcp.pop %v1204
        %v1211 = vrcp.pop %v1207
        %v1212 = vmul.f32 %v1189, %v1208
        %v1213 = vmul.f32 %v1191, %v1209
        %v1214 = vmul.f32 %v1193, %v1210
        %v1215 = vmul.f32 %v1195, %v1211
        %v1216 = vpack.c.bf16 %v1212, %v1212
        %v1217 = vpack.c.bf16 %v1213, %v1213
        %v1218 = vpack.c.bf16 %v1214, %v1214
        %v1219 = vpack.c.bf16 %v1215, %v1215
        %1220 = vxpose.xlu0.c.b16.start [1/8] %v894, 128
        %1221 = vxpose.xlu0.c.b16.cont [2/8] 0, 128
        %1222 = vxpose.xlu0.c.b16.cont [3/8] 0, 128
        %1223 = vxpose.xlu0.c.b16.cont [4/8] 0, 128
        %1224 = vxpose.xlu0.c.b16.cont [5/8] 0, 128
        %1225 = vxpose.xlu0.c.b16.cont [6/8] 0, 128
        %1226 = vxpose.xlu0.c.b16.cont [7/8] 0, 128
        %1227 = vxpose.xlu0.c.b16.end [8/8] 0, 128
        %v1228 = vpop.trf.xlu0
        %v1229 = vpop.trf.xlu0
        %v1230 = vpop.trf.xlu0
        %v1231 = vpop.trf.xlu0
        %v1232 = vpop.trf.xlu0
        %v1233 = vpop.trf.xlu0
        %v1234 = vpop.trf.xlu0
        %v1235 = vpop.trf.xlu0
        %1236 = vxpose.xlu0.c.b16.start [1/8] %v897, 128
        %1237 = vxpose.xlu0.c.b16.cont [2/8] 0, 128
        %1238 = vxpose.xlu0.c.b16.cont [3/8] 0, 128
        %1239 = vxpose.xlu0.c.b16.cont [4/8] 0, 128
        %1240 = vxpose.xlu0.c.b16.cont [5/8] 0, 128
        %1241 = vxpose.xlu0.c.b16.cont [6/8] 0, 128
        %1242 = vxpose.xlu0.c.b16.cont [7/8] 0, 128
        %1243 = vxpose.xlu0.c.b16.end [8/8] 0, 128
        %v1244 = vpop.trf.xlu0
        %v1245 = vpop.trf.xlu0
        %v1246 = vpop.trf.xlu0
        %v1247 = vpop.trf.xlu0
        %v1248 = vpop.trf.xlu0
        %v1249 = vpop.trf.xlu0
        %v1250 = vpop.trf.xlu0
        %v1251 = vpop.trf.xlu0
        %1252 = vxpose.xlu0.c.b16.start [1/8] %v900, 128
        %1253 = vxpose.xlu0.c.b16.cont [2/8] 0, 128
        %1254 = vxpose.xlu0.c.b16.cont [3/8] 0, 128
        %1255 = vxpose.xlu0.c.b16.cont [4/8] 0, 128
        %1256 = vxpose.xlu0.c.b16.cont [5/8] 0, 128
        %1257 = vxpose.xlu0.c.b16.cont [6/8] 0, 128
        %1258 = vxpose.xlu0.c.b16.cont [7/8] 0, 128
        %1259 = vxpose.xlu0.c.b16.end [8/8] 0, 128
        %v1260 = vpop.trf.xlu0
        %v1261 = vpop.trf.xlu0
        %v1262 = vpop.trf.xlu0
        %v1263 = vpop.trf.xlu0
        %v1264 = vpop.trf.xlu0
        %v1265 = vpop.trf.xlu0
        %v1266 = vpop.trf.xlu0
        %v1267 = vpop.trf.xlu0
        %1268 = vxpose.xlu0.c.b16.start [1/8] %v903, 128
        %1269 = vxpose.xlu0.c.b16.cont [2/8] 0, 128
        %1270 = vxpose.xlu0.c.b16.cont [3/8] 0, 128
        %1271 = vxpose.xlu0.c.b16.cont [4/8] 0, 128
        %1272 = vxpose.xlu0.c.b16.cont [5/8] 0, 128
        %1273 = vxpose.xlu0.c.b16.cont [6/8] 0, 128
        %1274 = vxpose.xlu0.c.b16.cont [7/8] 0, 128
        %1275 = vxpose.xlu0.c.b16.end [8/8] 0, 128
        %v1276 = vpop.trf.xlu0
        %v1277 = vpop.trf.xlu0
        %v1278 = vpop.trf.xlu0
        %v1279 = vpop.trf.xlu0
        %v1280 = vpop.trf.xlu0
        %v1281 = vpop.trf.xlu0
        %v1282 = vpop.trf.xlu0
        %v1283 = vpop.trf.xlu0
        %v1285 = vsel %vm976, %v1228, 0
        %v1288 = vsel %vm976, %v1216, 0
        %1290 = vmatprep.subr.bf16.mxu0 0
        %1291 = vmatpush1.bf16.xpose.msra.mxu0 0
        %1292 = vmatprep.subr.bf16.mxu0 0
        %1293 = vmatpush1.bf16.xpose.msra.mxu0 0
        %1294 = vmatprep.subr.bf16.mxu0 0
        %1295 = vmatpush1.bf16.xpose.msra.mxu0 0
        %1296 = vmatprep.subr.bf16.mxu0 0
        %1297 = vmatpush1.bf16.xpose.msra.mxu0 0
        %1298 = vmatprep.subr.bf16.mxu0 0
        %1299 = vmatpush1.bf16.xpose.msra.mxu0 0
        %1300 = vmatprep.subr.bf16.mxu0 0
        %1301 = vmatpush1.bf16.xpose.msra.mxu0 0
        %1302 = vmatprep.subr.bf16.mxu0 0
        %1303 = vmatpush1.bf16.xpose.msra.mxu0 0
        %1304 = vmatprep.subr.bf16.mxu0 0
        %1305 = vmatpush1.bf16.xpose.msra.mxu0 %v1288
        %1306 = vmatprep.subr.bf16.mxu0 0
        %1307 = vmatpush2.bf16.xpose.msra.mxu0 0
        %1308 = vmatprep.subr.bf16.mxu0 0
        %1309 = vmatpush2.bf16.xpose.msra.mxu0 0
        %1310 = vmatprep.subr.bf16.mxu0 0
        %1311 = vmatpush2.bf16.xpose.msra.mxu0 0
        %1312 = vmatprep.subr.bf16.mxu0 0
        %1313 = vmatpush2.bf16.xpose.msra.mxu0 0
        %1314 = vmatprep.subr.bf16.mxu0 0
        %1315 = vmatpush2.bf16.xpose.msra.mxu0 0
        %1316 = vmatprep.subr.bf16.mxu0 0
        %1317 = vmatpush2.bf16.xpose.msra.mxu0 0
        %1318 = vmatprep.subr.bf16.mxu0 0
        %1319 = vmatpush2.bf16.xpose.msra.mxu0 0
        %1320 = vmatprep.subr.bf16.mxu0 0
        %1321 = vmatpush2.bf16.xpose.msra.mxu0 0
        %1322 = vmatprep.mubr.bf16.mxu0 0
        %1323 = vmatmul.mubr.bf16.gmra.mxu0 %v1285
        %v1324 = vpop.f32.mrf.mxu0
        %v1325 = vadd.f32 0.0, %v1324
        %v1326 = vpop.f32.mrf.mxu0
        %v1327 = vpop.f32.mrf.mxu0
        %v1328 = vpop.f32.mrf.mxu0
        %1329 = vdwg.mxu0
        %v1331 = vsel %vm976, %v1244, 0
        %v1334 = vsel %vm976, %v1217, 0
        %1336 = vmatprep.subr.bf16.mxu0 0
        %1337 = vmatpush1.bf16.xpose.msra.mxu0 0
        %1338 = vmatprep.subr.bf16.mxu0 0
        %1339 = vmatpush1.bf16.xpose.msra.mxu0 0
        %1340 = vmatprep.subr.bf16.mxu0 0
        %1341 = vmatpush1.bf16.xpose.msra.mxu0 0
        %1342 = vmatprep.subr.bf16.mxu0 0
        %1343 = vmatpush1.bf16.xpose.msra.mxu0 0
        %1344 = vmatprep.subr.bf16.mxu0 0
        %1345 = vmatpush1.bf16.xpose.msra.mxu0 0
        %1346 = vmatprep.subr.bf16.mxu0 0
        %1347 = vmatpush1.bf16.xpose.msra.mxu0 0
        %1348 = vmatprep.subr.bf16.mxu0 0
        %1349 = vmatpush1.bf16.xpose.msra.mxu0 0
        %1350 = vmatprep.subr.bf16.mxu0 0
        %1351 = vmatpush1.bf16.xpose.msra.mxu0 %v1334
        %1352 = vmatprep.subr.bf16.mxu0 0
        %1353 = vmatpush2.bf16.xpose.msra.mxu0 0
        %1354 = vmatprep.subr.bf16.mxu0 0
        %1355 = vmatpush2.bf16.xpose.msra.mxu0 0
        %1356 = vmatprep.subr.bf16.mxu0 0
        %1357 = vmatpush2.bf16.xpose.msra.mxu0 0
        %1358 = vmatprep.subr.bf16.mxu0 0
        %1359 = vmatpush2.bf16.xpose.msra.mxu0 0
        %1360 = vmatprep.subr.bf16.mxu0 0
        %1361 = vmatpush2.bf16.xpose.msra.mxu0 0
        %1362 = vmatprep.subr.bf16.mxu0 0
        %1363 = vmatpush2.bf16.xpose.msra.mxu0 0
        %1364 = vmatprep.subr.bf16.mxu0 0
        %1365 = vmatpush2.bf16.xpose.msra.mxu0 0
        %1366 = vmatprep.subr.bf16.mxu0 0
        %1367 = vmatpush2.bf16.xpose.msra.mxu0 0
        %1368 = vmatprep.mubr.bf16.mxu0 0
        %1369 = vmatmul.mubr.bf16.gmra.mxu0 %v1331
        %v1370 = vpop.f32.mrf.mxu0
        %v1371 = vadd.f32 0.0, %v1370
        %v1372 = vpop.f32.mrf.mxu0
        %v1373 = vpop.f32.mrf.mxu0
        %v1374 = vpop.f32.mrf.mxu0
        %1375 = vdwg.mxu0
        %v1377 = vsel %vm976, %v1260, 0
        %v1380 = vsel %vm976, %v1218, 0
        %1382 = vmatprep.subr.bf16.mxu0 0
        %1383 = vmatpush1.bf16.xpose.msra.mxu0 0
        %1384 = vmatprep.subr.bf16.mxu0 0
        %1385 = vmatpush1.bf16.xpose.msra.mxu0 0
        %1386 = vmatprep.subr.bf16.mxu0 0
        %1387 = vmatpush1.bf16.xpose.msra.mxu0 0
        %1388 = vmatprep.subr.bf16.mxu0 0
        %1389 = vmatpush1.bf16.xpose.msra.mxu0 0
        %1390 = vmatprep.subr.bf16.mxu0 0
        %1391 = vmatpush1.bf16.xpose.msra.mxu0 0
        %1392 = vmatprep.subr.bf16.mxu0 0
        %1393 = vmatpush1.bf16.xpose.msra.mxu0 0
        %1394 = vmatprep.subr.bf16.mxu0 0
        %1395 = vmatpush1.bf16.xpose.msra.mxu0 0
        %1396 = vmatprep.subr.bf16.mxu0 0
        %1397 = vmatpush1.bf16.xpose.msra.mxu0 %v1380
        %1398 = vmatprep.subr.bf16.mxu0 0
        %1399 = vmatpush2.bf16.xpose.msra.mxu0 0
        %1400 = vmatprep.subr.bf16.mxu0 0
        %1401 = vmatpush2.bf16.xpose.msra.mxu0 0
        %1402 = vmatprep.subr.bf16.mxu0 0
        %1403 = vmatpush2.bf16.xpose.msra.mxu0 0
        %1404 = vmatprep.subr.bf16.mxu0 0
        %1405 = vmatpush2.bf16.xpose.msra.mxu0 0
        %1406 = vmatprep.subr.bf16.mxu0 0
        %1407 = vmatpush2.bf16.xpose.msra.mxu0 0
        %1408 = vmatprep.subr.bf16.mxu0 0
        %1409 = vmatpush2.bf16.xpose.msra.mxu0 0
        %1410 = vmatprep.subr.bf16.mxu0 0
        %1411 = vmatpush2.bf16.xpose.msra.mxu0 0
        %1412 = vmatprep.subr.bf16.mxu0 0
        %1413 = vmatpush2.bf16.xpose.msra.mxu0 0
        %1414 = vmatprep.mubr.bf16.mxu0 0
        %1415 = vmatmul.mubr.bf16.gmra.mxu0 %v1377
        %v1416 = vpop.f32.mrf.mxu0
        %v1417 = vadd.f32 0.0, %v1416
        %v1418 = vpop.f32.mrf.mxu0
        %v1419 = vpop.f32.mrf.mxu0
        %v1420 = vpop.f32.mrf.mxu0
        %1421 = vdwg.mxu0
        %v1423 = vsel %vm976, %v1276, 0
        %v1426 = vsel %vm976, %v1219, 0
        %1428 = vmatprep.subr.bf16.mxu0 0
        %1429 = vmatpush1.bf16.xpose.msra.mxu0 0
        %1430 = vmatprep.subr.bf16.mxu0 0
        %1431 = vmatpush1.bf16.xpose.msra.mxu0 0
        %1432 = vmatprep.subr.bf16.mxu0 0
        %1433 = vmatpush1.bf16.xpose.msra.mxu0 0
        %1434 = vmatprep.subr.bf16.mxu0 0
        %1435 = vmatpush1.bf16.xpose.msra.mxu0 0
        %1436 = vmatprep.subr.bf16.mxu0 0
        %1437 = vmatpush1.bf16.xpose.msra.mxu0 0
        %1438 = vmatprep.subr.bf16.mxu0 0
        %1439 = vmatpush1.bf16.xpose.msra.mxu0 0
        %1440 = vmatprep.subr.bf16.mxu0 0
        %1441 = vmatpush1.bf16.xpose.msra.mxu0 0
        %1442 = vmatprep.subr.bf16.mxu0 0
        %1443 = vmatpush1.bf16.xpose.msra.mxu0 %v1426
        %1444 = vmatprep.subr.bf16.mxu0 0
        %1445 = vmatpush2.bf16.xpose.msra.mxu0 0
        %1446 = vmatprep.subr.bf16.mxu0 0
        %1447 = vmatpush2.bf16.xpose.msra.mxu0 0
        %1448 = vmatprep.subr.bf16.mxu0 0
        %1449 = vmatpush2.bf16.xpose.msra.mxu0 0
        %1450 = vmatprep.subr.bf16.mxu0 0
        %1451 = vmatpush2.bf16.xpose.msra.mxu0 0
        %1452 = vmatprep.subr.bf16.mxu0 0
        %1453 = vmatpush2.bf16.xpose.msra.mxu0 0
        %1454 = vmatprep.subr.bf16.mxu0 0
        %1455 = vmatpush2.bf16.xpose.msra.mxu0 0
        %1456 = vmatprep.subr.bf16.mxu0 0
        %1457 = vmatpush2.bf16.xpose.msra.mxu0 0
        %1458 = vmatprep.subr.bf16.mxu0 0
        %1459 = vmatpush2.bf16.xpose.msra.mxu0 0
        %1460 = vmatprep.mubr.bf16.mxu0 0
        %1461 = vmatmul.mubr.bf16.gmra.mxu0 %v1423
        %v1462 = vpop.f32.mrf.mxu0
        %v1463 = vadd.f32 0.0, %v1462
        %v1464 = vpop.f32.mrf.mxu0
        %v1465 = vpop.f32.mrf.mxu0
        %v1466 = vpop.f32.mrf.mxu0
        %1467 = vdwg.mxu0
        %1468 = vxpose.xlu0.b32.start [1/16] %v1325, 128
        %1469 = vxpose.xlu0.b32.cont [2/16] 0.0, 128
        %1470 = vxpose.xlu0.b32.cont [3/16] 0.0, 128
        %1471 = vxpose.xlu0.b32.cont [4/16] 0.0, 128
        %1472 = vxpose.xlu0.b32.cont [5/16] 0.0, 128
        %1473 = vxpose.xlu0.b32.cont [6/16] 0.0, 128
        %1474 = vxpose.xlu0.b32.cont [7/16] 0.0, 128
        %1475 = vxpose.xlu0.b32.cont [8/16] 0.0, 128
        %1476 = vxpose.xlu0.b32.cont [9/16] 0.0, 128
        %1477 = vxpose.xlu0.b32.cont [10/16] 0.0, 128
        %1478 = vxpose.xlu0.b32.cont [11/16] 0.0, 128
        %1479 = vxpose.xlu0.b32.cont [12/16] 0.0, 128
        %1480 = vxpose.xlu0.b32.cont [13/16] 0.0, 128
        %1481 = vxpose.xlu0.b32.cont [14/16] 0.0, 128
        %1482 = vxpose.xlu0.b32.cont [15/16] 0.0, 128
        %1483 = vxpose.xlu0.b32.end [16/16] 0.0, 128
        %v1484 = vpop.trf.xlu0
        %v1485 = vpop.trf.xlu0
        %v1486 = vpop.trf.xlu0
        %v1487 = vpop.trf.xlu0
        %v1488 = vpop.trf.xlu0
        %v1489 = vpop.trf.xlu0
        %v1490 = vpop.trf.xlu0
        %v1491 = vpop.trf.xlu0
        %v1492 = vpop.trf.xlu0
        %v1493 = vpop.trf.xlu0
        %v1494 = vpop.trf.xlu0
        %v1495 = vpop.trf.xlu0
        %v1496 = vpop.trf.xlu0
        %v1497 = vpop.trf.xlu0
        %v1498 = vpop.trf.xlu0
        %v1499 = vpop.trf.xlu0
        %1500 = vxpose.xlu0.b32.start [1/16] %v1371, 128
        %1501 = vxpose.xlu0.b32.cont [2/16] 0.0, 128
        %1502 = vxpose.xlu0.b32.cont [3/16] 0.0, 128
        %1503 = vxpose.xlu0.b32.cont [4/16] 0.0, 128
        %1504 = vxpose.xlu0.b32.cont [5/16] 0.0, 128
        %1505 = vxpose.xlu0.b32.cont [6/16] 0.0, 128
        %1506 = vxpose.xlu0.b32.cont [7/16] 0.0, 128
        %1507 = vxpose.xlu0.b32.cont [8/16] 0.0, 128
        %1508 = vxpose.xlu0.b32.cont [9/16] 0.0, 128
        %1509 = vxpose.xlu0.b32.cont [10/16] 0.0, 128
        %1510 = vxpose.xlu0.b32.cont [11/16] 0.0, 128
        %1511 = vxpose.xlu0.b32.cont [12/16] 0.0, 128
        %1512 = vxpose.xlu0.b32.cont [13/16] 0.0, 128
        %1513 = vxpose.xlu0.b32.cont [14/16] 0.0, 128
        %1514 = vxpose.xlu0.b32.cont [15/16] 0.0, 128
        %1515 = vxpose.xlu0.b32.end [16/16] 0.0, 128
        %v1516 = vpop.trf.xlu0
        %v1517 = vpop.trf.xlu0
        %v1518 = vpop.trf.xlu0
        %v1519 = vpop.trf.xlu0
        %v1520 = vpop.trf.xlu0
        %v1521 = vpop.trf.xlu0
        %v1522 = vpop.trf.xlu0
        %v1523 = vpop.trf.xlu0
        %v1524 = vpop.trf.xlu0
        %v1525 = vpop.trf.xlu0
        %v1526 = vpop.trf.xlu0
        %v1527 = vpop.trf.xlu0
        %v1528 = vpop.trf.xlu0
        %v1529 = vpop.trf.xlu0
        %v1530 = vpop.trf.xlu0
        %v1531 = vpop.trf.xlu0
        %1532 = vxpose.xlu0.b32.start [1/16] %v1417, 128
        %1533 = vxpose.xlu0.b32.cont [2/16] 0.0, 128
        %1534 = vxpose.xlu0.b32.cont [3/16] 0.0, 128
        %1535 = vxpose.xlu0.b32.cont [4/16] 0.0, 128
        %1536 = vxpose.xlu0.b32.cont [5/16] 0.0, 128
        %1537 = vxpose.xlu0.b32.cont [6/16] 0.0, 128
        %1538 = vxpose.xlu0.b32.cont [7/16] 0.0, 128
        %1539 = vxpose.xlu0.b32.cont [8/16] 0.0, 128
        %1540 = vxpose.xlu0.b32.cont [9/16] 0.0, 128
        %1541 = vxpose.xlu0.b32.cont [10/16] 0.0, 128
        %1542 = vxpose.xlu0.b32.cont [11/16] 0.0, 128
        %1543 = vxpose.xlu0.b32.cont [12/16] 0.0, 128
        %1544 = vxpose.xlu0.b32.cont [13/16] 0.0, 128
        %1545 = vxpose.xlu0.b32.cont [14/16] 0.0, 128
        %1546 = vxpose.xlu0.b32.cont [15/16] 0.0, 128
        %1547 = vxpose.xlu0.b32.end [16/16] 0.0, 128
        %v1548 = vpop.trf.xlu0
        %v1549 = vpop.trf.xlu0
        %v1550 = vpop.trf.xlu0
        %v1551 = vpop.trf.xlu0
        %v1552 = vpop.trf.xlu0
        %v1553 = vpop.trf.xlu0
        %v1554 = vpop.trf.xlu0
        %v1555 = vpop.trf.xlu0
        %v1556 = vpop.trf.xlu0
        %v1557 = vpop.trf.xlu0
        %v1558 = vpop.trf.xlu0
        %v1559 = vpop.trf.xlu0
        %v1560 = vpop.trf.xlu0
        %v1561 = vpop.trf.xlu0
        %v1562 = vpop.trf.xlu0
        %v1563 = vpop.trf.xlu0
        %1564 = vxpose.xlu0.b32.start [1/16] %v1463, 128
        %1565 = vxpose.xlu0.b32.cont [2/16] 0.0, 128
        %1566 = vxpose.xlu0.b32.cont [3/16] 0.0, 128
        %1567 = vxpose.xlu0.b32.cont [4/16] 0.0, 128
        %1568 = vxpose.xlu0.b32.cont [5/16] 0.0, 128
        %1569 = vxpose.xlu0.b32.cont [6/16] 0.0, 128
        %1570 = vxpose.xlu0.b32.cont [7/16] 0.0, 128
        %1571 = vxpose.xlu0.b32.cont [8/16] 0.0, 128
        %1572 = vxpose.xlu0.b32.cont [9/16] 0.0, 128
        %1573 = vxpose.xlu0.b32.cont [10/16] 0.0, 128
        %1574 = vxpose.xlu0.b32.cont [11/16] 0.0, 128
        %1575 = vxpose.xlu0.b32.cont [12/16] 0.0, 128
        %1576 = vxpose.xlu0.b32.cont [13/16] 0.0, 128
        %1577 = vxpose.xlu0.b32.cont [14/16] 0.0, 128
        %1578 = vxpose.xlu0.b32.cont [15/16] 0.0, 128
        %1579 = vxpose.xlu0.b32.end [16/16] 0.0, 128
        %v1580 = vpop.trf.xlu0
        %v1581 = vpop.trf.xlu0
        %v1582 = vpop.trf.xlu0
        %v1583 = vpop.trf.xlu0
        %v1584 = vpop.trf.xlu0
        %v1585 = vpop.trf.xlu0
        %v1586 = vpop.trf.xlu0
        %v1587 = vpop.trf.xlu0
        %v1588 = vpop.trf.xlu0
        %v1589 = vpop.trf.xlu0
        %v1590 = vpop.trf.xlu0
        %v1591 = vpop.trf.xlu0
        %v1592 = vpop.trf.xlu0
        %v1593 = vpop.trf.xlu0
        %v1594 = vpop.trf.xlu0
        %v1595 = vpop.trf.xlu0
        %v1596 = vcombine.low %v1484, %v1548
        %v1597 = vcombine.high %v1484, %v1548
        %v1599 = vunpack.c.l.s4 1983009808
        %v1600 = vunpack.c.0.s8 %v1599
        %v1601 = vlaneseq
        %v1602 = vshrl.u32 %v1601, 7
        %v1603 = vsub.s32 %v1600, %v1602
        %v1604 = vrot.slane %v1596, %v1603
        %v1606 = vunpack.c.l.s4 1983009808
        %v1607 = vunpack.c.0.s8 %v1606
        %v1608 = vlaneseq
        %v1609 = vshrl.u32 %v1608, 7
        %v1610 = vsub.s32 %v1607, %v1609
        %v1611 = vrot.slane %v1597, %v1610
        %v1612 = vcombine.low %v1516, %v1580
        %v1613 = vcombine.high %v1516, %v1580
        %v1615 = vunpack.c.l.s4 1983009808
        %v1616 = vunpack.c.0.s8 %v1615
        %v1617 = vlaneseq
        %v1618 = vshrl.u32 %v1617, 7
        %v1619 = vsub.s32 %v1616, %v1618
        %v1620 = vrot.slane %v1612, %v1619
        %v1622 = vunpack.c.l.s4 1983009808
        %v1623 = vunpack.c.0.s8 %v1622
        %v1624 = vlaneseq
        %v1625 = vshrl.u32 %v1624, 7
        %v1626 = vsub.s32 %v1623, %v1625
        %v1627 = vrot.slane %v1613, %v1626
        %v1628 = vcombine.low %v1604, %v1620
        %v1629 = vcombine.high %v1604, %v1620
        %v1631 = vunpack.c.l.s4 1934713408
        %v1632 = vunpack.c.0.s8 %v1631
        %v1633 = vlaneseq
        %v1634 = vshrl.u32 %v1633, 7
        %v1635 = vsub.s32 %v1632, %v1634
        %v1636 = vrot.slane %v1628, %v1635
        %v1638 = vunpack.c.l.s4 1934713408
        %v1639 = vunpack.c.0.s8 %v1638
        %v1640 = vlaneseq
        %v1641 = vshrl.u32 %v1640, 7
        %v1642 = vsub.s32 %v1639, %v1641
        %v1643 = vrot.slane %v1629, %v1642
        %v1644 = vcombine.low %v1611, %v1627
        %v1645 = vcombine.high %v1611, %v1627
        %v1647 = vunpack.c.l.s4 1934713408
        %v1648 = vunpack.c.0.s8 %v1647
        %v1649 = vlaneseq
        %v1650 = vshrl.u32 %v1649, 7
        %v1651 = vsub.s32 %v1648, %v1650
        %v1652 = vrot.slane %v1644, %v1651
        %v1654 = vunpack.c.l.s4 1934713408
        %v1655 = vunpack.c.0.s8 %v1654
        %v1656 = vlaneseq
        %v1657 = vshrl.u32 %v1656, 7
        %v1658 = vsub.s32 %v1655, %v1657
        %v1659 = vrot.slane %v1645, %v1658
        %v1660 = vcombine.high %v1636, 0.0
        %v1661 = vcombine.high %v1643, 0.0
        %v1662 = vcombine.high %v1652, 0.0
        %v1663 = vcombine.high %v1659, 0.0
        %v1664 = vcombine.low %v1636, %v1643
        %v1666 = vunpack.c.l.s4 1983009808
        %v1667 = vunpack.c.0.s8 %v1666
        %v1668 = vlaneseq
        %v1669 = vshrl.u32 %v1668, 7
        %v1670 = vsub.s32 %v1667, %v1669
        %v1671 = vrot.slane %v1664, %v1670
        %v1672 = vcombine.low %v1660, %v1661
        %v1674 = vunpack.c.l.s4 1983009808
        %v1675 = vunpack.c.0.s8 %v1674
        %v1676 = vlaneseq
        %v1677 = vshrl.u32 %v1676, 7
        %v1678 = vsub.s32 %v1675, %v1677
        %v1679 = vrot.slane %v1672, %v1678
        %v1680 = vcombine.low %v1652, %v1659
        %v1682 = vunpack.c.l.s4 1983009808
        %v1683 = vunpack.c.0.s8 %v1682
        %v1684 = vlaneseq
        %v1685 = vshrl.u32 %v1684, 7
        %v1686 = vsub.s32 %v1683, %v1685
        %v1687 = vrot.slane %v1680, %v1686
        %v1688 = vcombine.low %v1662, %v1663
        %v1690 = vunpack.c.l.s4 1983009808
        %v1691 = vunpack.c.0.s8 %v1690
        %v1692 = vlaneseq
        %v1693 = vshrl.u32 %v1692, 7
        %v1694 = vsub.s32 %v1691, %v1693
        %v1695 = vrot.slane %v1688, %v1694
        %v1696 = vcombine.low %v1671, %v1679
        %v1697 = vcombine.high %v1671, %v1679
        %v1699 = vunpack.c.l.s4 1934713408
        %v1700 = vunpack.c.0.s8 %v1699
        %v1701 = vlaneseq
        %v1702 = vshrl.u32 %v1701, 7
        %v1703 = vsub.s32 %v1700, %v1702
        %v1704 = vrot.slane %v1696, %v1703
        %v1706 = vunpack.c.l.s4 1934713408
        %v1707 = vunpack.c.0.s8 %v1706
        %v1708 = vlaneseq
        %v1709 = vshrl.u32 %v1708, 7
        %v1710 = vsub.s32 %v1707, %v1709
        %v1711 = vrot.slane %v1697, %v1710
        %v1712 = vcombine.low %v1687, %v1695
        %v1713 = vcombine.high %v1687, %v1695
        %v1715 = vunpack.c.l.s4 1934713408
        %v1716 = vunpack.c.0.s8 %v1715
        %v1717 = vlaneseq
        %v1718 = vshrl.u32 %v1717, 7
        %v1719 = vsub.s32 %v1716, %v1718
        %v1720 = vrot.slane %v1712, %v1719
        %v1722 = vunpack.c.l.s4 1934713408
        %v1723 = vunpack.c.0.s8 %v1722
        %v1724 = vlaneseq
        %v1725 = vshrl.u32 %v1724, 7
        %v1726 = vsub.s32 %v1723, %v1725
        %v1727 = vrot.slane %v1713, %v1726
        %v1728 = vcombine.low %v1704, %v1720
        %v1729 = vcombine.high %v1704, %v1720
        %v1730 = vcombine.low %v1711, %v1727
        %v1731 = vcombine.high %v1711, %v1727
        %1733 = vrot.lane.b32.xlu0 %v1729, 8
        %v1734 = vpop.permute.xlu0 %1733
        %1737 = vrot.lane.b32.xlu0 %v1730, 16
        %v1738 = vpop.permute.xlu0 %1737
        %1741 = vrot.lane.b32.xlu0 %v1731, 24
        %v1742 = vpop.permute.xlu0 %1741
        %v1744 = vsel %vm976, %v1728, %v1734
        %vm1745 = vcmask 130048
        %v1746 = vsel %vm1745, %v1744, %v1738
        %vm1747 = vcmask 195584
        %v1748 = vsel %vm1747, %v1746, %v1742
        %v1749 = vpack.c.bf16 %v1748, %v1748
        %v1750 = vld [vmem:[#allocation11] sm:$0xf]
        %v1751 = vld [vmem:[#allocation11 + $0x4] sm:$0xf]
        %v1752 = vld [vmem:[#allocation11 + $0x8] sm:$0xf]
        %v1753 = vld [vmem:[#allocation11 + $0xc] sm:$0xf]
        %v1754 = vld [vmem:[#allocation13] sm:$0x1]
        %v1756 = vlaneseq
        %v1757 = vshrl.u32 %v1756, 7
        %v1758 = vsub.s32 0, %v1757
        %v1759 = vrot.slane %v1754, %v1758
        %v1765 = vunpack.c.l.b16 %v1750
        %v1766 = vunpack.c.l.b16 %v1751
        %v1767 = vunpack.c.l.b16 %v1752
        %v1768 = vunpack.c.l.b16 %v1753
        %v1769 = vpack.c.b16 %v1766, %v1765
        %v1770 = vpack.c.b16 %v1768, %v1767
        %v1774 = vsel %vm712, %v1749, 0
        %1776 = vmatprep.subr.bf16.mxu0 0
        %1777 = vmatpush1.bf16.msra.mxu0 0
        %1778 = vmatprep.subr.bf16.mxu0 0
        %1779 = vmatpush1.bf16.msra.mxu0 0
        %1780 = vmatprep.subr.bf16.mxu0 0
        %1781 = vmatpush1.bf16.msra.mxu0 0
        %1782 = vmatprep.subr.bf16.mxu0 0
        %1783 = vmatpush1.bf16.msra.mxu0 0
        %1784 = vmatprep.subr.bf16.mxu0 0
        %1785 = vmatpush1.bf16.msra.mxu0 0
        %1786 = vmatprep.subr.bf16.mxu0 0
        %1787 = vmatpush1.bf16.msra.mxu0 0
        %1788 = vmatprep.subr.bf16.mxu0 0
        %1789 = vmatpush1.bf16.msra.mxu0 %v1770
        %1790 = vmatprep.subr.bf16.mxu0 0
        %1791 = vmatpush1.bf16.msra.mxu0 %v1769
        %1792 = vmatprep.subr.bf16.mxu0 0
        %1793 = vmatpush2.bf16.msra.mxu0 0
        %1794 = vmatprep.subr.bf16.mxu0 0
        %1795 = vmatpush2.bf16.msra.mxu0 0
        %1796 = vmatprep.subr.bf16.mxu0 0
        %1797 = vmatpush2.bf16.msra.mxu0 0
        %1798 = vmatprep.subr.bf16.mxu0 0
        %1799 = vmatpush2.bf16.msra.mxu0 0
        %1800 = vmatprep.subr.bf16.mxu0 0
        %1801 = vmatpush2.bf16.msra.mxu0 0
        %1802 = vmatprep.subr.bf16.mxu0 0
        %1803 = vmatpush2.bf16.msra.mxu0 0
        %1804 = vmatprep.subr.bf16.mxu0 0
        %1805 = vmatpush2.bf16.msra.mxu0 0
        %1806 = vmatprep.subr.bf16.mxu0 0
        %1807 = vmatpush2.bf16.msra.mxu0 0
        %1808 = vmatprep.mubr.bf16.mxu0 0
        %1809 = vmatmul.mubr.bf16.gmra.mxu0 %v1774
        %v1810 = vpop.f32.mrf.mxu0
        %v1811 = vadd.f32 %v1759, %v1810
        %v1812 = vpop.f32.mrf.mxu0
        %v1813 = vpop.f32.mrf.mxu0
        %v1814 = vpop.f32.mrf.mxu0
        %1815 = vdwg.mxu0
        %v1816 = vadd.f32 %v1811, %v685
        %v1817 = vld [vmem:[%s10] sm:$0x1]
        %v1818 = vld [vmem:[%s11] sm:$0x1]
        %v1819 = vsel %vm712, %v1816, 0.0
        %1820 = vadd.xlane.f32.xlu0 %v1819
        %v1821 = vpop.xlane.xlu0 %1820
        %v1822 = vrcp.pop 32.0
        %v1823 = vmul.f32 %v1821, %v1822
        %v1824 = vsub.f32 %v1816, %v1823
        %v1825 = vmul.f32 %v1824, %v1824
        %v1826 = vsel %vm712, %v1825, 0.0
        %1827 = vadd.xlane.f32.xlu0 %v1826
        %v1828 = vpop.xlane.xlu0 %1827
        %v1829 = vmul.f32 %v1828, %v1822
        %v1830 = vadd.f32 %v1829, 1e-12
        %v1831 = vrsqrt.pop %v1830
        %v1832 = vmul.f32 %v1824, %v1831
        %v1834 = vlaneseq
        %v1835 = vshrl.u32 %v1834, 7
        %v1836 = vsub.s32 0, %v1835
        %v1837 = vrot.slane %v1817, %v1836
        %v1839 = vmul.f32 %v1832, %v1837
        %v1841 = vlaneseq
        %v1842 = vshrl.u32 %v1841, 7
        %v1843 = vsub.s32 0, %v1842
        %v1844 = vrot.slane %v1818, %v1843
        %v1846 = vadd.f32 %v1839, %v1844
        %v1847 = vpack.c.bf16 %v1846, %v1846
        %v1848 = vld [vmem:[%s12] sm:$0xf]
        %v1849 = vld [vmem:[%s12 + $0x4] sm:$0xf]
        %v1850 = vld [vmem:[%s12 + $0x8] sm:$0xf]
        %v1851 = vld [vmem:[%s12 + $0xc] sm:$0xf]
        %v1852 = vld [vmem:[%s13] sm:$0x1]
        %v1854 = vlaneseq
        %v1855 = vshrl.u32 %v1854, 7
        %v1856 = vsub.s32 0, %v1855
        %v1857 = vrot.slane %v1852, %v1856
        %v1863 = vunpack.c.l.b16 %v1848
        %v1864 = vunpack.c.l.b16 %v1849
        %v1865 = vunpack.c.l.b16 %v1850
        %v1866 = vunpack.c.l.b16 %v1851
        %v1867 = vpack.c.b16 %v1864, %v1863
        %v1868 = vpack.c.b16 %v1866, %v1865
        %v1872 = vsel %vm712, %v1847, 0
        %1874 = vmatprep.subr.bf16.mxu0 0
        %1875 = vmatpush1.bf16.msra.mxu0 0
        %1876 = vmatprep.subr.bf16.mxu0 0
        %1877 = vmatpush1.bf16.msra.mxu0 0
        %1878 = vmatprep.subr.bf16.mxu0 0
        %1879 = vmatpush1.bf16.msra.mxu0 0
        %1880 = vmatprep.subr.bf16.mxu0 0
        %1881 = vmatpush1.bf16.msra.mxu0 0
        %1882 = vmatprep.subr.bf16.mxu0 0
        %1883 = vmatpush1.bf16.msra.mxu0 0
        %1884 = vmatprep.subr.bf16.mxu0 0
        %1885 = vmatpush1.bf16.msra.mxu0 0
        %1886 = vmatprep.subr.bf16.mxu0 0
        %1887 = vmatpush1.bf16.msra.mxu0 %v1868
        %1888 = vmatprep.subr.bf16.mxu0 0
        %1889 = vmatpush1.bf16.msra.mxu0 %v1867
        %1890 = vmatprep.subr.bf16.mxu0 0
        %1891 = vmatpush2.bf16.msra.mxu0 0
        %1892 = vmatprep.subr.bf16.mxu0 0
        %1893 = vmatpush2.bf16.msra.mxu0 0
        %1894 = vmatprep.subr.bf16.mxu0 0
        %1895 = vmatpush2.bf16.msra.mxu0 0
        %1896 = vmatprep.subr.bf16.mxu0 0
        %1897 = vmatpush2.bf16.msra.mxu0 0
        %1898 = vmatprep.subr.bf16.mxu0 0
        %1899 = vmatpush2.bf16.msra.mxu0 0
        %1900 = vmatprep.subr.bf16.mxu0 0
        %1901 = vmatpush2.bf16.msra.mxu0 0
        %1902 = vmatprep.subr.bf16.mxu0 0
        %1903 = vmatpush2.bf16.msra.mxu0 0
        %1904 = vmatprep.subr.bf16.mxu0 0
        %1905 = vmatpush2.bf16.msra.mxu0 0
        %1906 = vmatprep.mubr.bf16.mxu0 0
        %1907 = vmatmul.mubr.bf16.gmra.mxu0 %v1872
        %v1908 = vpop.f32.mrf.mxu0
        %v1909 = vadd.f32 %v1857, %v1908
        %v1910 = vpop.f32.mrf.mxu0
        %v1911 = vpop.f32.mrf.mxu0
        %v1912 = vpop.f32.mrf.mxu0
        %1913 = vdwg.mxu0
        %v1914 = vmul.f32 %v1909, 0.5
        %v1915 = vmul.f32 %v1909, 0.044715
        %v1916 = vmul.f32 %v1915, %v1909
        %v1917 = vmul.f32 %v1916, %v1909
        %v1918 = vadd.f32 %v1909, %v1917
        %v1919 = vmul.f32 %v1918, 0.7978846
        %v1920 = vtanh.pop %v1919
        %v1921 = vadd.f32 %v1920, 1.0
        %v1922 = vmul.f32 %v1914, %v1921
        %v1923 = vpack.c.bf16 %v1922, %v1922
        %v1924 = vld [vmem:[%s14] sm:$0xf]
        %v1925 = vld [vmem:[%s14 + $0x4] sm:$0xf]
        %v1926 = vld [vmem:[%s14 + $0x8] sm:$0xf]
        %v1927 = vld [vmem:[%s14 + $0xc] sm:$0xf]
        %v1928 = vld [vmem:[%s14 + $0x10] sm:$0xf]
        %v1929 = vld [vmem:[%s14 + $0x14] sm:$0xf]
        %v1930 = vld [vmem:[%s14 + $0x18] sm:$0xf]
        %v1931 = vld [vmem:[%s14 + $0x1c] sm:$0xf]
        %v1932 = vld [vmem:[%s15] sm:$0x1]
        %v1934 = vlaneseq
        %v1935 = vshrl.u32 %v1934, 7
        %v1936 = vsub.s32 0, %v1935
        %v1937 = vrot.slane %v1932, %v1936
        %v1947 = vunpack.c.l.b16 %v1924
        %v1948 = vunpack.c.l.b16 %v1925
        %v1949 = vunpack.c.l.b16 %v1926
        %v1950 = vunpack.c.l.b16 %v1927
        %v1951 = vunpack.c.l.b16 %v1928
        %v1952 = vunpack.c.l.b16 %v1929
        %v1953 = vunpack.c.l.b16 %v1930
        %v1954 = vunpack.c.l.b16 %v1931
        %v1955 = vpack.c.b16 %v1948, %v1947
        %v1956 = vpack.c.b16 %v1950, %v1949
        %v1957 = vpack.c.b16 %v1952, %v1951
        %v1958 = vpack.c.b16 %v1954, %v1953
        %vm1963 = vcmask 523264
        %v1965 = vsel %vm1963, %v1923, 0
        %1967 = vmatprep.subr.bf16.mxu0 0
        %1968 = vmatpush1.bf16.msra.mxu0 0
        %1969 = vmatprep.subr.bf16.mxu0 0
        %1970 = vmatpush1.bf16.msra.mxu0 0
        %1971 = vmatprep.subr.bf16.mxu0 0
        %1972 = vmatpush1.bf16.msra.mxu0 0
        %1973 = vmatprep.subr.bf16.mxu0 0
        %1974 = vmatpush1.bf16.msra.mxu0 0
        %1975 = vmatprep.subr.bf16.mxu0 0
        %1976 = vmatpush1.bf16.msra.mxu0 %v1958
        %1977 = vmatprep.subr.bf16.mxu0 0
        %1978 = vmatpush1.bf16.msra.mxu0 %v1957
        %1979 = vmatprep.subr.bf16.mxu0 0
        %1980 = vmatpush1.bf16.msra.mxu0 %v1956
        %1981 = vmatprep.subr.bf16.mxu0 0
        %1982 = vmatpush1.bf16.msra.mxu0 %v1955
        %1983 = vmatprep.subr.bf16.mxu0 0
        %1984 = vmatpush2.bf16.msra.mxu0 0
        %1985 = vmatprep.subr.bf16.mxu0 0
        %1986 = vmatpush2.bf16.msra.mxu0 0
        %1987 = vmatprep.subr.bf16.mxu0 0
        %1988 = vmatpush2.bf16.msra.mxu0 0
        %1989 = vmatprep.subr.bf16.mxu0 0
        %1990 = vmatpush2.bf16.msra.mxu0 0
        %1991 = vmatprep.subr.bf16.mxu0 0
        %1992 = vmatpush2.bf16.msra.mxu0 0
        %1993 = vmatprep.subr.bf16.mxu0 0
        %1994 = vmatpush2.bf16.msra.mxu0 0
        %1995 = vmatprep.subr.bf16.mxu0 0
        %1996 = vmatpush2.bf16.msra.mxu0 0
        %1997 = vmatprep.subr.bf16.mxu0 0
        %1998 = vmatpush2.bf16.msra.mxu0 0
        %1999 = vmatprep.mubr.bf16.mxu0 0
        %2000 = vmatmul.mubr.bf16.gmra.mxu0 %v1965
        %v2001 = vpop.f32.mrf.mxu0
        %v2002 = vadd.f32 %v1937, %v2001
        %v2003 = vpop.f32.mrf.mxu0
        %v2004 = vpop.f32.mrf.mxu0
        %v2005 = vpop.f32.mrf.mxu0
        %2006 = vdwg.mxu0
        %v2007 = vadd.f32 %v2002, %v1846
        %v2008 = vld [vmem:[%s16] sm:$0x1]
        %v2009 = vld [vmem:[%s17] sm:$0x1]
        %v2010 = vsel %vm712, %v2007, 0.0
        %2011 = vadd.xlane.f32.xlu0 %v2010
        %v2012 = vpop.xlane.xlu0 %2011
        %v2013 = vmul.f32 %v2012, %v1822
        %v2014 = vsub.f32 %v2007, %v2013
        %v2015 = vmul.f32 %v2014, %v2014
        %v2016 = vsel %vm712, %v2015, 0.0
        %2017 = vadd.xlane.f32.xlu0 %v2016
        %v2018 = vpop.xlane.xlu0 %2017
        %v2019 = vmul.f32 %v2018, %v1822
        %v2020 = vadd.f32 %v2019, 1e-12
        %v2021 = vrsqrt.pop %v2020
        %v2022 = vmul.f32 %v2014, %v2021
        %v2024 = vlaneseq
        %v2025 = vshrl.u32 %v2024, 7
        %v2026 = vsub.s32 0, %v2025
        %v2027 = vrot.slane %v2008, %v2026
        %v2029 = vmul.f32 %v2022, %v2027
        %v2031 = vlaneseq
        %v2032 = vshrl.u32 %v2031, 7
        %v2033 = vsub.s32 0, %v2032
        %v2034 = vrot.slane %v2009, %v2033
        %v2036 = vadd.f32 %v2029, %v2034
        %2037 = vst.msk [vmem:[%s679] sm:$0xff] %vm712, %v2036
        %s2038 = sand.u32 %s434, 1
        %s2039 = scalar_lea.sflag [#allocation4], %s2038
        %s2040 = sand.u32 %s434, 1
        %s2041 = smul.addr %s2040, 8
        %s2042 = scalar_lea.vmem [#allocation14], %s2041
        // Predicated region
        $region121: #{tpu_custom_call.1} parent=91 // pred_check
          %p2043 = pneg %p444
        $region122: #{tpu_custom_call.1} parent=91 // pred_check_branch
          %2045 = sbr.rel (%p2043) target = $region124
        $region123: #{tpu_custom_call.1} parent=91 // pred_region
          %s2047 = ssub.s32 128, 128
          %2048 = vsyncadd %s2039, %s2047
          %s2049 = smul.addr %s38, 128
          %s2050 = scalar_lea.hbm %s18, %s2049
          %s2052 = sshll.u32 %s2042, 4
          %s2053 = int_to_ptr.vmem [resolvable:$true] %s2052
          %2055 = dma.vmem_to_hbm [thread:$0]  %s2053, 128, %s2050, %s2039
        $region124: #{tpu_custom_call.1} parent=91 // pred_fallthru
          _
      $region92: #{tpu_custom_call.1} parent=5 // pred_fallthru
        _
      %p2056 = scmp.le.s32.totalorder 2, %s33
      // Predicated region
      $region125: #{tpu_custom_call.1} parent=5 // pred_check
        %p2057 = pneg %p2056
      $region126: #{tpu_custom_call.1} parent=5 // pred_check_branch
        %2059 = sbr.rel (%p2057) target = $region128
      $region127: #{tpu_custom_call.1} parent=5 // pred_region
        %s2060 = ssub.s32 %s33, 2
        // Predicated region
        $region129: #{tpu_custom_call.1} parent=127 // pred_check
          %p2061 = pneg %p450
        $region130: #{tpu_custom_call.1} parent=127 // pred_check_branch
          %2063 = sbr.rel (%p2061) target = $region132
        $region131: #{tpu_custom_call.1} parent=127 // pred_region
          %s2064 = sand.u32 %s435, 1
          %s2065 = scalar_lea.sflag [#allocation4], %s2064
          %s2066 = sand.u32 %s435, 1
          %s2067 = smul.addr %s2066, 8
          %s2068 = scalar_lea.vmem [#allocation14], %s2067
          %2069 = dma.done %s2065, 128
        $region132: #{tpu_custom_call.1} parent=127 // pred_fallthru
          _
      $region128: #{tpu_custom_call.1} parent=5 // pred_fallthru
        _
    $region6: #{tpu_custom_call.1} parent=1 // loop_footer
      %s37 = sadd.s32 1, %s33
    $region7: #{tpu_custom_call.1} parent=1 // loop_footer_branch
      %32 = sbr.rel target = $region3
    $region8: #{tpu_custom_call.1} parent=1 // loop_exit
      _
    %2070 = vsyncpa [#allocation3], 1
    %s2071 = scalar_lea.sflag [#allocation3], 1
    %2072 = vsyncpa %s2071, 1
    %2073 = vsyncpa [#allocation6], 1
    %2074 = vsyncpa [#allocation9], 1
    %2075 = vsyncpa [#allocation12], 1
    %2076 = vsyncpa [#allocation4], 1
    %s2077 = scalar_lea.sflag [#allocation4], 1
    %2078 = vsyncpa %s2077, 1

</llo_original>
